<compile_context>
chip_gen: v7x
topology: tpu7x:2x2x1
jax: 0.10.0
libtpu: 0.0.40
codegen_flags: <defaults>
</compile_context>

<pallas_src>
import functools

import jax
import jax.numpy as jnp
from jax.experimental import pallas as pl
from jax.experimental.pallas import tpu as pltpu

LANE = 128  # lane-dense padded width for every feature/hidden dimension


def _pad_to(x, shape):
    pads = [(0, t - s) for s, t in zip(x.shape, shape)]
    return jnp.pad(x, pads)


# ----------------------------------------------------------------------------
# Fused per-block kernel: GIN layers + pooling + readout + pair DNN
# ----------------------------------------------------------------------------
def _fused_block_kernel(node_ref, adj_ref, gw1_ref, gb1_ref, gw2_ref, gb2_ref,
                        wr_ref, br_ref, w1a_ref, w1b_ref, db1_ref,
                        wrest_ref, brest_ref, out_ref, *,
                        num_gin_layers, num_rest, eps, mols_per_block,
                        atoms_per_mol, pairs_per_block, first_relu):
    f32, bf16 = jnp.float32, jnp.bfloat16
    F = node_ref.shape[-1]
    rows = mols_per_block * atoms_per_mol

    h = node_ref[...]          # [rows, F] bf16; molecules even-first within block
    adj = adj_ref[...]         # [mols_per_block, A, A] bf16 (0/1, exact in bf16)

    # ---- GIN layers: h <- ReLU(ReLU(((1+eps)h + A@h) W1 + b1) W2 + b2) ------
    # TODO(synk): BatchNorm1d inside the GIN MLP is folded to identity
    # (eval mode, default running stats); train-mode BN is not modeled.
    # Static unroll is fine for 2-3 layers; switch to lax.fori_loop indexing
    # gw1_ref[l] for deeper stacks.
    for l in range(num_gin_layers):
        h3 = h.reshape(mols_per_block, atoms_per_mol, F)
        nbr = jnp.einsum('mab,mbf->maf', adj, h3,
                         preferred_element_type=f32).reshape(rows, F)
        if eps != 0.0:
            agg = (1.0 + eps) * h.astype(f32) + nbr
        else:
            agg = h.astype(f32) + nbr
        z = jnp.dot(agg.astype(bf16), gw1_ref[l],
                    preferred_element_type=f32) + gb1_ref[l]
        h = jnp.maximum(z, 0.0).astype(bf16)
        z = jnp.dot(h, gw2_ref[l], preferred_element_type=f32) + gb2_ref[l]
        h = jnp.maximum(z, 0.0).astype(bf16)

    # ---- per-molecule sum pooling: sublane reduce (f32 accumulation) --------
    # TODO(synk): fixed atoms_per_mol per molecule; ragged PyG batches would
    # need per-molecule offsets via scalar prefetch.
    pooled = jnp.sum(h.astype(f32).reshape(mols_per_block, atoms_per_mol, F),
                     axis=1)

    # ---- readout Linear -> molecular embedding -------------------------------
    mol_emb = jnp.dot(pooled.astype(bf16), wr_ref[...],
                      preferred_element_type=f32) + br_ref[...]

    # ---- decompose_mol_pair + first DNN layer --------------------------------
    # Molecules were pre-permuted (evens first, odds second) per block, so the
    # pair decomposition is two contiguous sublane slices (no selector matmuls).
    emb_even = mol_emb[:pairs_per_block].astype(bf16)
    emb_odd = mol_emb[pairs_per_block:].astype(bf16)
    x = (jnp.dot(emb_even, w1a_ref[...], preferred_element_type=f32)
         + jnp.dot(emb_odd, w1b_ref[...], preferred_element_type=f32)
         + db1_ref[...])
    if first_relu:
        x = jnp.maximum(x, 0.0)

    # ---- remaining DNN layers (ReLU on all but the last) ---------------------
    for i in range(num_rest):
        x = jnp.dot(x.astype(bf16), wrest_ref[i],
                    preferred_element_type=f32) + brest_ref[i]
        if i < num_rest - 1:
            x = jnp.maximum(x, 0.0)

    out_ref[...] = x.astype(out_ref.dtype)


# ----------------------------------------------------------------------------
# Wrapper: padding, bf16 cast, molecule permutation, gridded pallas_call
# ----------------------------------------------------------------------------
def ac_pred_gin_forward(params, node_feat, adj_blocks, *, atoms_per_mol,
                        mols_per_block=None, eps=0.0, fp_size, output_size):
    f32, bf16 = jnp.float32, jnp.bfloat16
    F = LANE
    N = node_feat.shape[0]
    num_mols = adj_blocks.shape[0]
    assert adj_blocks.shape[1] == atoms_per_mol
    assert adj_blocks.shape[2] == atoms_per_mol
    assert N == num_mols * atoms_per_mol
    assert num_mols % 2 == 0
    # Sublane alignment for the pooling / aggregation reshapes (16 preferred
    # for the bf16 activation path; 8 is the hard f32 floor).
    assert atoms_per_mol % 8 == 0, "atoms_per_mol must be a multiple of 8"
    num_pairs = num_mols // 2

    if mols_per_block is None:
        # Largest multiple-of-16 divisor with a bounded atom-row block.
        cands = [d for d in range(16, num_mols + 1, 16)
                 if num_mols % d == 0 and d * atoms_per_mol <= 4096]
        mols_per_block = cands[-1] if cands else num_mols
    assert num_mols % mols_per_block == 0 and mols_per_block % 2 == 0
    num_blocks = num_mols // mols_per_block
    pairs_per_block = mols_per_block // 2
    rows_per_block = mols_per_block * atoms_per_mol
    if num_blocks > 1:
        assert pairs_per_block % 8 == 0, \
            "pairs_per_block must be a multiple of 8 when the grid has >1 block"

    # Per-block molecule permutation: evens first, odds second -> the pair
    # decomposition inside the kernel is two contiguous row slices.
    idx = jnp.arange(num_mols).reshape(num_blocks, pairs_per_block, 2)
    perm = jnp.concatenate([idx[:, :, 0], idx[:, :, 1]], axis=1).reshape(-1)

    node_perm = node_feat.astype(f32).reshape(num_mols, atoms_per_mol, -1)[perm]
    node_p = _pad_to(node_perm.reshape(N, -1), (N, F)).astype(bf16)
    adj_p = adj_blocks.astype(f32)[perm].astype(bf16)   # 0/1 -> exact in bf16

    gw1 = jnp.stack([_pad_to(w1, (F, F)) for (w1, _, _, _) in params["gin"]]).astype(bf16)
    gb1 = jnp.stack([_pad_to(b1.reshape(1, -1), (1, F)) for (_, b1, _, _) in params["gin"]])
    gw2 = jnp.stack([_pad_to(w2, (F, F)) for (_, _, w2, _) in params["gin"]]).astype(bf16)
    gb2 = jnp.stack([_pad_to(b2.reshape(1, -1), (1, F)) for (_, _, _, b2) in params["gin"]])

    w_r, b_r = params["readout"]
    wr_p = _pad_to(w_r, (F, F)).astype(bf16)
    br_p = _pad_to(b_r.reshape(1, -1), (1, F))

    # First DNN layer weight split across the two molecule embeddings of a pair
    # (decompose_mol_pair without any concat).
    (w0, b0) = params["dnn"][0]
    assert w0.shape[0] == 2 * fp_size
    w1a = _pad_to(w0[:fp_size], (F, F)).astype(bf16)
    w1b = _pad_to(w0[fp_size:], (F, F)).astype(bf16)
    db1 = _pad_to(b0.reshape(1, -1), (1, F))

    rest = params["dnn"][1:]
    num_rest = len(rest)
    if num_rest:
        wrest = jnp.stack([_pad_to(w, (F, F)) for (w, _) in rest]).astype(bf16)
        brest = jnp.stack([_pad_to(b.reshape(1, -1), (1, F)) for (_, b) in rest])
    else:  # single-layer DNN: first layer is the output layer
        wrest = jnp.zeros((1, F, F), bf16)
        brest = jnp.zeros((1, 1, F), f32)

    num_gin_layers = len(params["gin"])

    kernel = functools.partial(
        _fused_block_kernel,
        num_gin_layers=num_gin_layers, num_rest=num_rest, eps=eps,
        mols_per_block=mols_per_block, atoms_per_mol=atoms_per_mol,
        pairs_per_block=pairs_per_block, first_relu=(num_rest > 0))

    def const_spec(a):
        nd = a.ndim
        return pl.BlockSpec(a.shape, lambda i, _nd=nd: (0,) * _nd)

    weights = (gw1, gb1, gw2, gb2, wr_p, br_p, w1a, w1b, db1, wrest, brest)
    in_specs = ([pl.BlockSpec((rows_per_block, F), lambda i: (i, 0)),
                 pl.BlockSpec((mols_per_block, atoms_per_mol, atoms_per_mol),
                              lambda i: (i, 0, 0))]
                + [const_spec(a) for a in weights])
    out_spec = pl.BlockSpec((pairs_per_block, F), lambda i: (i, 0))

    inputs = (node_p, adj_p) + weights

    # Advisory cost estimate (block-diagonal aggregation, no selectors).
    flops = num_gin_layers * (2 * num_mols * atoms_per_mol * atoms_per_mol * F
                              + 4 * N * F * F)
    flops += 2 * num_mols * F * F                    # readout
    flops += 4 * num_pairs * F * F                   # split first DNN layer
    flops += num_rest * 2 * num_pairs * F * F        # remaining DNN layers
    bytes_accessed = (sum(int(a.size) * a.dtype.itemsize for a in inputs)
                      + num_pairs * F * 4)

    # VMEM budget: resident weights + double-buffered node/adj blocks + output.
    weight_bytes = sum(int(a.size) * a.dtype.itemsize for a in weights)
    block_bytes = 2 * (rows_per_block * F * 2
                       + mols_per_block * atoms_per_mol * atoms_per_mol * 2)
    out_bytes = 2 * pairs_per_block * F * 4
    vmem_limit = int(min(100 * 2**20,
                         max(8 * 2**20,
                             2 * (weight_bytes + block_bytes + out_bytes) + (2 << 20))))

    out = pl.pallas_call(
        kernel,
        grid=(num_blocks,),
        out_shape=jax.ShapeDtypeStruct((num_pairs, F), jnp.float32),
        in_specs=in_specs,
        out_specs=out_spec,
        compiler_params=pltpu.CompilerParams(
            dimension_semantics=("parallel",),
            vmem_limit_bytes=vmem_limit),
        cost_estimate=pl.CostEstimate(flops=flops, transcendentals=0,
                                      bytes_accessed=bytes_accessed),
    )(*inputs)

    return out[:, :output_size]


# ----------------------------------------------------------------------------
# Parameter init (PyTorch default Linear init) + pure-JAX f32 reference
# ----------------------------------------------------------------------------
def init_params(key, atom_feat, gin_hidden, gin_layers, fp_size, dnn_layers,
                output_size):
    params = {"gin": [], "readout": None, "dnn": []}

    def dense_init(k, fan_in, fan_out):
        kw, kb = jax.random.split(k)
        lim = 1.0 / jnp.sqrt(fan_in)
        w = jax.random.uniform(kw, (fan_in, fan_out), jnp.float32, -lim, lim)
        b = jax.random.uniform(kb, (fan_out,), jnp.float32, -lim, lim)
        return w, b

    in_dim = atom_feat
    for _ in range(gin_layers):
        key, k1, k2 = jax.random.split(key, 3)
        w1, b1 = dense_init(k1, in_dim, gin_hidden)
        w2, b2 = dense_init(k2, gin_hidden, gin_hidden)
        params["gin"].append((w1, b1, w2, b2))
        in_dim = gin_hidden

    key, kr = jax.random.split(key)
    params["readout"] = dense_init(kr, gin_hidden, fp_size)

    dims = [2 * fp_size] + list(dnn_layers) + [output_size]
    for i in range(len(dims) - 1):
        key, kd = jax.random.split(key)
        params["dnn"].append(dense_init(kd, dims[i], dims[i + 1]))
    return params


def reference_forward(params, node_feat, adj_blocks, *, atoms_per_mol, eps=0.0):
    num_mols = adj_blocks.shape[0]
    h = node_feat
    for (w1, b1, w2, b2) in params["gin"]:
        h3 = h.reshape(num_mols, atoms_per_mol, -1)
        nbr = jnp.einsum('mab,mbf->maf', adj_blocks, h3).reshape(h.shape[0], -1)
        agg = (1.0 + eps) * h + nbr
        h = jax.nn.relu(agg @ w1 + b1)
        h = jax.nn.relu(h @ w2 + b2)
    pooled = h.reshape(num_mols, atoms_per_mol, -1).sum(axis=1)
    w_r, b_r = params["readout"]
    emb = pooled @ w_r + b_r
    x = emb.reshape(num_mols // 2, -1)
    n = len(params["dnn"])
    for i, (w, b) in enumerate(params["dnn"]):
        x = x @ w + b
        if i < n - 1:
            x = jax.nn.relu(x)
    return x


# ----------------------------------------------------------------------------
# Main
# ----------------------------------------------------------------------------
if __name__ == "__main__":
    # Small, forward-consistent config (opt.args analogue)
    ATOM_FEAT = 16         # raw atom feature dim
    GIN_HIDDEN = 32        # GIN hidden size
    GIN_LAYERS = 2
    FP_SIZE = 32           # opt.args['FPSize']
    DNN_LAYERS = [64, 32]  # opt.args['DNNLayers']
    OUTPUT_SIZE = 2        # opt.args['OutputSize']

    NUM_MOLS = 32          # even; gridded as 2 blocks of 16 molecules (8 pairs)
    ATOMS_PER_MOL = 16     # multiple of 16 -> aligned bf16/f32 sublane tiles
    N = NUM_MOLS * ATOMS_PER_MOL  # total atoms across the batch

    key = jax.random.PRNGKey(0)
    key, k_feat, k_adj, k_par = jax.random.split(key, 4)

    # Node features [N, ATOM_FEAT]
    node_feat = jax.random.normal(k_feat, (N, ATOM_FEAT), jnp.float32)

    # Block-diagonal symmetric 0/1 adjacency stored as per-molecule blocks.
    blk = (jax.random.uniform(k_adj, (NUM_MOLS, ATOMS_PER_MOL, ATOMS_PER_MOL)) < 0.3)
    blk = jnp.triu(blk.astype(jnp.float32), k=1)
    adj_blocks = blk + jnp.transpose(blk, (0, 2, 1))

    params = init_params(k_par, ATOM_FEAT, GIN_HIDDEN, GIN_LAYERS, FP_SIZE,
                         DNN_LAYERS, OUTPUT_SIZE)

    fwd = jax.jit(functools.partial(
        ac_pred_gin_forward, atoms_per_mol=ATOMS_PER_MOL, mols_per_block=16,
        eps=0.0, fp_size=FP_SIZE, output_size=OUTPUT_SIZE))

    pred = jax.block_until_ready(fwd(params, node_feat, adj_blocks))
    ref = reference_forward(params, node_feat, adj_blocks,
                            atoms_per_mol=ATOMS_PER_MOL)

    assert pred.shape == (NUM_MOLS // 2, OUTPUT_SIZE)
    assert bool(jnp.all(jnp.isfinite(pred)))
    rel_err = float(jnp.max(jnp.abs(pred - ref)) / (jnp.max(jnp.abs(ref)) + 1e-6))
    # bf16 operands (f32 accumulation) vs an all-f32 reference: allow a few %.
    assert rel_err < 5e-2, f"mismatch vs pure-JAX reference: rel err {rel_err}"
    print("KERNEL_OK")
</pallas_src>

<mosaic_0001>
module attributes {stable_mosaic.version = 11 : i64} {
  func.func @_fused_block_kernel(%arg0: i32, %arg1: memref<256x128xbf16, #tpu.memory_space<vmem>>, %arg2: memref<16x16x16xbf16, #tpu.memory_space<vmem>>, %arg3: memref<2x128x128xbf16, #tpu.memory_space<vmem>>, %arg4: memref<2x1x128xf32, #tpu.memory_space<vmem>>, %arg5: memref<2x128x128xbf16, #tpu.memory_space<vmem>>, %arg6: memref<2x1x128xf32, #tpu.memory_space<vmem>>, %arg7: memref<128x128xbf16, #tpu.memory_space<vmem>>, %arg8: memref<1x128xf32, #tpu.memory_space<vmem>>, %arg9: memref<128x128xbf16, #tpu.memory_space<vmem>>, %arg10: memref<128x128xbf16, #tpu.memory_space<vmem>>, %arg11: memref<1x128xf32, #tpu.memory_space<vmem>>, %arg12: memref<2x128x128xbf16, #tpu.memory_space<vmem>>, %arg13: memref<2x1x128xf32, #tpu.memory_space<vmem>>, %arg14: memref<8x128xf32, #tpu.memory_space<vmem>>) attributes {dimension_semantics = [#tpu.dimension_semantics<parallel>], iteration_bounds = array<i64: 2>, scalar_prefetch = 0 : i64, scratch_operands = 0 : i64, tpu.core_type = #tpu.core_type<tc>, window_params = [{transform_indices = @transform_0, window_bounds = array<i64: 256, 128>}, {transform_indices = @transform_1, window_bounds = array<i64: 16, 16, 16>}, {pipeline_mode = #tpu.pipeline_mode<synchronous>, transform_indices = @transform_2, window_bounds = array<i64: 2, 128, 128>}, {pipeline_mode = #tpu.pipeline_mode<synchronous>, transform_indices = @transform_3, window_bounds = array<i64: 2, 1, 128>}, {pipeline_mode = #tpu.pipeline_mode<synchronous>, transform_indices = @transform_4, window_bounds = array<i64: 2, 128, 128>}, {pipeline_mode = #tpu.pipeline_mode<synchronous>, transform_indices = @transform_5, window_bounds = array<i64: 2, 1, 128>}, {pipeline_mode = #tpu.pipeline_mode<synchronous>, transform_indices = @transform_6, window_bounds = array<i64: 128, 128>}, {pipeline_mode = #tpu.pipeline_mode<synchronous>, transform_indices = @transform_7, window_bounds = array<i64: 1, 128>}, {pipeline_mode = #tpu.pipeline_mode<synchronous>, transform_indices = @transform_8, window_bounds = array<i64: 128, 128>}, {pipeline_mode = #tpu.pipeline_mode<synchronous>, transform_indices = @transform_9, window_bounds = array<i64: 128, 128>}, {pipeline_mode = #tpu.pipeline_mode<synchronous>, transform_indices = @transform_10, window_bounds = array<i64: 1, 128>}, {pipeline_mode = #tpu.pipeline_mode<synchronous>, transform_indices = @transform_11, window_bounds = array<i64: 2, 128, 128>}, {pipeline_mode = #tpu.pipeline_mode<synchronous>, transform_indices = @transform_12, window_bounds = array<i64: 2, 1, 128>}, {transform_indices = @transform_13, window_bounds = array<i64: 8, 128>}]} {
    %c0 = arith.constant 0 : index
    %c0_0 = arith.constant 0 : index
    %0 = vector.load %arg1[%c0, %c0_0] : memref<256x128xbf16, #tpu.memory_space<vmem>>, vector<256x128xbf16>
    %c0_1 = arith.constant 0 : index
    %c0_2 = arith.constant 0 : index
    %c0_3 = arith.constant 0 : index
    %1 = vector.load %arg2[%c0_1, %c0_2, %c0_3] : memref<16x16x16xbf16, #tpu.memory_space<vmem>>, vector<16x16x16xbf16>
    %2 = vector.shape_cast %0 : vector<256x128xbf16> to vector<16x16x128xbf16>
    "tpu.trace_start"() <{level = 10 : i32, message = "mab,mbf->maf"}> : () -> ()
    %cst = arith.constant dense<0.000000e+00> : vector<16x16x128xf32>
    %3 = tpu.matmul %1, %2, %cst {dimension_numbers = #tpu.dot_dimension_numbers<[2], [1], [1], [2], [0, 0, 0, 1, 1, 2], [0], [0]>} : vector<16x16x16xbf16>, vector<16x16x128xbf16>, vector<16x16x128xf32> -> vector<16x16x128xf32>
    "tpu.trace_stop"() : () -> ()
    %4 = vector.shape_cast %3 : vector<16x16x128xf32> to vector<256x128xf32>
    %5 = arith.extf %0 : vector<256x128xbf16> to vector<256x128xf32>
    %6 = arith.addf %5, %4 : vector<256x128xf32>
    %7 = arith.truncf %6 : vector<256x128xf32> to vector<256x128xbf16>
    %c0_4 = arith.constant 0 : index
    %c0_5 = arith.constant 0 : index
    %c0_6 = arith.constant 0 : index
    %8 = vector.load %arg3[%c0_4, %c0_5, %c0_6] : memref<2x128x128xbf16, #tpu.memory_space<vmem>>, vector<1x128x128xbf16>
    %9 = vector.shape_cast %8 : vector<1x128x128xbf16> to vector<128x128xbf16>
    %cst_7 = arith.constant dense<0.000000e+00> : vector<256x128xf32>
    %10 = tpu.matmul %7, %9, %cst_7 {dimension_numbers = #tpu.dot_dimension_numbers<[1], [0], [0], [1], [0, 0, 1, 1], [], []>} : vector<256x128xbf16>, vector<128x128xbf16>, vector<256x128xf32> -> vector<256x128xf32>
    %c0_8 = arith.constant 0 : index
    %c0_9 = arith.constant 0 : index
    %c0_10 = arith.constant 0 : index
    %11 = vector.load %arg4[%c0_8, %c0_9, %c0_10] : memref<2x1x128xf32, #tpu.memory_space<vmem>>, vector<1x1x128xf32>
    %12 = vector.shape_cast %11 : vector<1x1x128xf32> to vector<1x128xf32>
    %13 = vector.broadcast %12 : vector<1x128xf32> to vector<256x128xf32>
    %14 = arith.addf %10, %13 : vector<256x128xf32>
    %cst_11 = arith.constant 0.000000e+00 : f32
    %15 = vector.broadcast %cst_11 : f32 to vector<256x128xf32>
    %16 = arith.maximumf %14, %15 : vector<256x128xf32>
    %17 = arith.truncf %16 : vector<256x128xf32> to vector<256x128xbf16>
    %c0_12 = arith.constant 0 : index
    %c0_13 = arith.constant 0 : index
    %c0_14 = arith.constant 0 : index
    %18 = vector.load %arg5[%c0_12, %c0_13, %c0_14] : memref<2x128x128xbf16, #tpu.memory_space<vmem>>, vector<1x128x128xbf16>
    %19 = vector.shape_cast %18 : vector<1x128x128xbf16> to vector<128x128xbf16>
    %cst_15 = arith.constant dense<0.000000e+00> : vector<256x128xf32>
    %20 = tpu.matmul %17, %19, %cst_15 {dimension_numbers = #tpu.dot_dimension_numbers<[1], [0], [0], [1], [0, 0, 1, 1], [], []>} : vector<256x128xbf16>, vector<128x128xbf16>, vector<256x128xf32> -> vector<256x128xf32>
    %c0_16 = arith.constant 0 : index
    %c0_17 = arith.constant 0 : index
    %c0_18 = arith.constant 0 : index
    %21 = vector.load %arg6[%c0_16, %c0_17, %c0_18] : memref<2x1x128xf32, #tpu.memory_space<vmem>>, vector<1x1x128xf32>
    %22 = vector.shape_cast %21 : vector<1x1x128xf32> to vector<1x128xf32>
    %23 = vector.broadcast %22 : vector<1x128xf32> to vector<256x128xf32>
    %24 = arith.addf %20, %23 : vector<256x128xf32>
    %cst_19 = arith.constant 0.000000e+00 : f32
    %25 = vector.broadcast %cst_19 : f32 to vector<256x128xf32>
    %26 = arith.maximumf %24, %25 : vector<256x128xf32>
    %27 = arith.truncf %26 : vector<256x128xf32> to vector<256x128xbf16>
    %28 = vector.shape_cast %27 : vector<256x128xbf16> to vector<16x16x128xbf16>
    "tpu.trace_start"() <{level = 10 : i32, message = "mab,mbf->maf"}> : () -> ()
    %cst_20 = arith.constant dense<0.000000e+00> : vector<16x16x128xf32>
    %29 = tpu.matmul %1, %28, %cst_20 {dimension_numbers = #tpu.dot_dimension_numbers<[2], [1], [1], [2], [0, 0, 0, 1, 1, 2], [0], [0]>} : vector<16x16x16xbf16>, vector<16x16x128xbf16>, vector<16x16x128xf32> -> vector<16x16x128xf32>
    "tpu.trace_stop"() : () -> ()
    %30 = vector.shape_cast %29 : vector<16x16x128xf32> to vector<256x128xf32>
    %31 = arith.extf %27 : vector<256x128xbf16> to vector<256x128xf32>
    %32 = arith.addf %31, %30 : vector<256x128xf32>
    %33 = arith.truncf %32 : vector<256x128xf32> to vector<256x128xbf16>
    %c1 = arith.constant 1 : index
    %c0_21 = arith.constant 0 : index
    %c0_22 = arith.constant 0 : index
    %34 = vector.load %arg3[%c1, %c0_21, %c0_22] : memref<2x128x128xbf16, #tpu.memory_space<vmem>>, vector<1x128x128xbf16>
    %35 = vector.shape_cast %34 : vector<1x128x128xbf16> to vector<128x128xbf16>
    %cst_23 = arith.constant dense<0.000000e+00> : vector<256x128xf32>
    %36 = tpu.matmul %33, %35, %cst_23 {dimension_numbers = #tpu.dot_dimension_numbers<[1], [0], [0], [1], [0, 0, 1, 1], [], []>} : vector<256x128xbf16>, vector<128x128xbf16>, vector<256x128xf32> -> vector<256x128xf32>
    %c1_24 = arith.constant 1 : index
    %c0_25 = arith.constant 0 : index
    %c0_26 = arith.constant 0 : index
    %37 = vector.load %arg4[%c1_24, %c0_25, %c0_26] : memref<2x1x128xf32, #tpu.memory_space<vmem>>, vector<1x1x128xf32>
    %38 = vector.shape_cast %37 : vector<1x1x128xf32> to vector<1x128xf32>
    %39 = vector.broadcast %38 : vector<1x128xf32> to vector<256x128xf32>
    %40 = arith.addf %36, %39 : vector<256x128xf32>
    %cst_27 = arith.constant 0.000000e+00 : f32
    %41 = vector.broadcast %cst_27 : f32 to vector<256x128xf32>
    %42 = arith.maximumf %40, %41 : vector<256x128xf32>
    %43 = arith.truncf %42 : vector<256x128xf32> to vector<256x128xbf16>
    %c1_28 = arith.constant 1 : index
    %c0_29 = arith.constant 0 : index
    %c0_30 = arith.constant 0 : index
    %44 = vector.load %arg5[%c1_28, %c0_29, %c0_30] : memref<2x128x128xbf16, #tpu.memory_space<vmem>>, vector<1x128x128xbf16>
    %45 = vector.shape_cast %44 : vector<1x128x128xbf16> to vector<128x128xbf16>
    %cst_31 = arith.constant dense<0.000000e+00> : vector<256x128xf32>
    %46 = tpu.matmul %43, %45, %cst_31 {dimension_numbers = #tpu.dot_dimension_numbers<[1], [0], [0], [1], [0, 0, 1, 1], [], []>} : vector<256x128xbf16>, vector<128x128xbf16>, vector<256x128xf32> -> vector<256x128xf32>
    %c1_32 = arith.constant 1 : index
    %c0_33 = arith.constant 0 : index
    %c0_34 = arith.constant 0 : index
    %47 = vector.load %arg6[%c1_32, %c0_33, %c0_34] : memref<2x1x128xf32, #tpu.memory_space<vmem>>, vector<1x1x128xf32>
    %48 = vector.shape_cast %47 : vector<1x1x128xf32> to vector<1x128xf32>
    %49 = vector.broadcast %48 : vector<1x128xf32> to vector<256x128xf32>
    %50 = arith.addf %46, %49 : vector<256x128xf32>
    %cst_35 = arith.constant 0.000000e+00 : f32
    %51 = vector.broadcast %cst_35 : f32 to vector<256x128xf32>
    %52 = arith.maximumf %50, %51 : vector<256x128xf32>
    %53 = arith.truncf %52 : vector<256x128xf32> to vector<256x128xbf16>
    %54 = arith.extf %53 : vector<256x128xbf16> to vector<256x128xf32>
    %55 = vector.shape_cast %54 : vector<256x128xf32> to vector<16x16x128xf32>
    %cst_36 = arith.constant dense<0.000000e+00> : vector<16x128xf32>
    %56 = vector.multi_reduction <add>, %55, %cst_36 [1] : vector<16x16x128xf32> to vector<16x128xf32>
    %57 = arith.truncf %56 : vector<16x128xf32> to vector<16x128xbf16>
    %c0_37 = arith.constant 0 : index
    %c0_38 = arith.constant 0 : index
    %58 = vector.load %arg7[%c0_37, %c0_38] : memref<128x128xbf16, #tpu.memory_space<vmem>>, vector<128x128xbf16>
    %cst_39 = arith.constant dense<0.000000e+00> : vector<16x128xf32>
    %59 = tpu.matmul %57, %58, %cst_39 {dimension_numbers = #tpu.dot_dimension_numbers<[1], [0], [0], [1], [0, 0, 1, 1], [], []>} : vector<16x128xbf16>, vector<128x128xbf16>, vector<16x128xf32> -> vector<16x128xf32>
    %c0_40 = arith.constant 0 : index
    %c0_41 = arith.constant 0 : index
    %60 = vector.load %arg8[%c0_40, %c0_41] : memref<1x128xf32, #tpu.memory_space<vmem>>, vector<1x128xf32>
    %61 = vector.broadcast %60 : vector<1x128xf32> to vector<16x128xf32>
    %62 = arith.addf %59, %61 : vector<16x128xf32>
    %63 = vector.extract_strided_slice %62 {offsets = [0, 0], sizes = [8, 128], strides = [1, 1]} : vector<16x128xf32> to vector<8x128xf32>
    %64 = arith.truncf %63 : vector<8x128xf32> to vector<8x128xbf16>
    %65 = vector.extract_strided_slice %62 {offsets = [8, 0], sizes = [8, 128], strides = [1, 1]} : vector<16x128xf32> to vector<8x128xf32>
    %66 = arith.truncf %65 : vector<8x128xf32> to vector<8x128xbf16>
    %c0_42 = arith.constant 0 : index
    %c0_43 = arith.constant 0 : index
    %67 = vector.load %arg9[%c0_42, %c0_43] : memref<128x128xbf16, #tpu.memory_space<vmem>>, vector<128x128xbf16>
    %cst_44 = arith.constant dense<0.000000e+00> : vector<8x128xf32>
    %68 = tpu.matmul %64, %67, %cst_44 {dimension_numbers = #tpu.dot_dimension_numbers<[1], [0], [0], [1], [0, 0, 1, 1], [], []>} : vector<8x128xbf16>, vector<128x128xbf16>, vector<8x128xf32> -> vector<8x128xf32>
    %c0_45 = arith.constant 0 : index
    %c0_46 = arith.constant 0 : index
    %69 = vector.load %arg10[%c0_45, %c0_46] : memref<128x128xbf16, #tpu.memory_space<vmem>>, vector<128x128xbf16>
    %cst_47 = arith.constant dense<0.000000e+00> : vector<8x128xf32>
    %70 = tpu.matmul %66, %69, %cst_47 {dimension_numbers = #tpu.dot_dimension_numbers<[1], [0], [0], [1], [0, 0, 1, 1], [], []>} : vector<8x128xbf16>, vector<128x128xbf16>, vector<8x128xf32> -> vector<8x128xf32>
    %71 = arith.addf %68, %70 : vector<8x128xf32>
    %c0_48 = arith.constant 0 : index
    %c0_49 = arith.constant 0 : index
    %72 = vector.load %arg11[%c0_48, %c0_49] : memref<1x128xf32, #tpu.memory_space<vmem>>, vector<1x128xf32>
    %73 = vector.broadcast %72 : vector<1x128xf32> to vector<8x128xf32>
    %74 = arith.addf %71, %73 : vector<8x128xf32>
    %cst_50 = arith.constant 0.000000e+00 : f32
    %75 = vector.broadcast %cst_50 : f32 to vector<8x128xf32>
    %76 = arith.maximumf %74, %75 : vector<8x128xf32>
    %77 = arith.truncf %76 : vector<8x128xf32> to vector<8x128xbf16>
    %c0_51 = arith.constant 0 : index
    %c0_52 = arith.constant 0 : index
    %c0_53 = arith.constant 0 : index
    %78 = vector.load %arg12[%c0_51, %c0_52, %c0_53] : memref<2x128x128xbf16, #tpu.memory_space<vmem>>, vector<1x128x128xbf16>
    %79 = vector.shape_cast %78 : vector<1x128x128xbf16> to vector<128x128xbf16>
    %cst_54 = arith.constant dense<0.000000e+00> : vector<8x128xf32>
    %80 = tpu.matmul %77, %79, %cst_54 {dimension_numbers = #tpu.dot_dimension_numbers<[1], [0], [0], [1], [0, 0, 1, 1], [], []>} : vector<8x128xbf16>, vector<128x128xbf16>, vector<8x128xf32> -> vector<8x128xf32>
    %c0_55 = arith.constant 0 : index
    %c0_56 = arith.constant 0 : index
    %c0_57 = arith.constant 0 : index
    %81 = vector.load %arg13[%c0_55, %c0_56, %c0_57] : memref<2x1x128xf32, #tpu.memory_space<vmem>>, vector<1x1x128xf32>
    %82 = vector.shape_cast %81 : vector<1x1x128xf32> to vector<1x128xf32>
    %83 = vector.broadcast %82 : vector<1x128xf32> to vector<8x128xf32>
    %84 = arith.addf %80, %83 : vector<8x128xf32>
    %cst_58 = arith.constant 0.000000e+00 : f32
    %85 = vector.broadcast %cst_58 : f32 to vector<8x128xf32>
    %86 = arith.maximumf %84, %85 : vector<8x128xf32>
    %87 = arith.truncf %86 : vector<8x128xf32> to vector<8x128xbf16>
    %c1_59 = arith.constant 1 : index
    %c0_60 = arith.constant 0 : index
    %c0_61 = arith.constant 0 : index
    %88 = vector.load %arg12[%c1_59, %c0_60, %c0_61] : memref<2x128x128xbf16, #tpu.memory_space<vmem>>, vector<1x128x128xbf16>
    %89 = vector.shape_cast %88 : vector<1x128x128xbf16> to vector<128x128xbf16>
    %cst_62 = arith.constant dense<0.000000e+00> : vector<8x128xf32>
    %90 = tpu.matmul %87, %89, %cst_62 {dimension_numbers = #tpu.dot_dimension_numbers<[1], [0], [0], [1], [0, 0, 1, 1], [], []>} : vector<8x128xbf16>, vector<128x128xbf16>, vector<8x128xf32> -> vector<8x128xf32>
    %c1_63 = arith.constant 1 : index
    %c0_64 = arith.constant 0 : index
    %c0_65 = arith.constant 0 : index
    %91 = vector.load %arg13[%c1_63, %c0_64, %c0_65] : memref<2x1x128xf32, #tpu.memory_space<vmem>>, vector<1x1x128xf32>
    %92 = vector.shape_cast %91 : vector<1x1x128xf32> to vector<1x128xf32>
    %93 = vector.broadcast %92 : vector<1x128xf32> to vector<8x128xf32>
    %94 = arith.addf %90, %93 : vector<8x128xf32>
    %c0_66 = arith.constant 0 : index
    %c0_67 = arith.constant 0 : index
    %95 = vector.load %arg14[%c0_66, %c0_67] : memref<8x128xf32, #tpu.memory_space<vmem>>, vector<8x128xf32>
    tpu.vector_store %arg14[%c0_66, %c0_67], %94 {strides = array<i32>} : memref<8x128xf32, #tpu.memory_space<vmem>>, vector<8x128xf32>,
    return
  }
  func.func @transform_0(%arg0: i32) -> (i32, i32) {
    %c0_i32 = arith.constant 0 : i32
    %c0_i32_0 = arith.constant 0 : i32
    return %arg0, %c0_i32 : i32, i32
  }
  func.func @transform_1(%arg0: i32) -> (i32, i32, i32) {
    %c0_i32 = arith.constant 0 : i32
    %c0_i32_0 = arith.constant 0 : i32
    %c0_i32_1 = arith.constant 0 : i32
    return %arg0, %c0_i32, %c0_i32_0 : i32, i32, i32
  }
  func.func @transform_2(%arg0: i32) -> (i32, i32, i32) {
    %c0_i32 = arith.constant 0 : i32
    %c0_i32_0 = arith.constant 0 : i32
    %c0_i32_1 = arith.constant 0 : i32
    %c0_i32_2 = arith.constant 0 : i32
    return %c0_i32, %c0_i32_0, %c0_i32_1 : i32, i32, i32
  }
  func.func @transform_3(%arg0: i32) -> (i32, i32, i32) {
    %c0_i32 = arith.constant 0 : i32
    %c0_i32_0 = arith.constant 0 : i32
    %c0_i32_1 = arith.constant 0 : i32
    %c0_i32_2 = arith.constant 0 : i32
    return %c0_i32, %c0_i32_0, %c0_i32_1 : i32, i32, i32
  }
  func.func @transform_4(%arg0: i32) -> (i32, i32, i32) {
    %c0_i32 = arith.constant 0 : i32
    %c0_i32_0 = arith.constant 0 : i32
    %c0_i32_1 = arith.constant 0 : i32
    %c0_i32_2 = arith.constant 0 : i32
    return %c0_i32, %c0_i32_0, %c0_i32_1 : i32, i32, i32
  }
  func.func @transform_5(%arg0: i32) -> (i32, i32, i32) {
    %c0_i32 = arith.constant 0 : i32
    %c0_i32_0 = arith.constant 0 : i32
    %c0_i32_1 = arith.constant 0 : i32
    %c0_i32_2 = arith.constant 0 : i32
    return %c0_i32, %c0_i32_0, %c0_i32_1 : i32, i32, i32
  }
  func.func @transform_6(%arg0: i32) -> (i32, i32) {
    %c0_i32 = arith.constant 0 : i32
    %c0_i32_0 = arith.constant 0 : i32
    %c0_i32_1 = arith.constant 0 : i32
    return %c0_i32, %c0_i32_0 : i32, i32
  }
  func.func @transform_7(%arg0: i32) -> (i32, i32) {
    %c0_i32 = arith.constant 0 : i32
    %c0_i32_0 = arith.constant 0 : i32
    %c0_i32_1 = arith.constant 0 : i32
    return %c0_i32, %c0_i32_0 : i32, i32
  }
  func.func @transform_8(%arg0: i32) -> (i32, i32) {
    %c0_i32 = arith.constant 0 : i32
    %c0_i32_0 = arith.constant 0 : i32
    %c0_i32_1 = arith.constant 0 : i32
    return %c0_i32, %c0_i32_0 : i32, i32
  }
  func.func @transform_9(%arg0: i32) -> (i32, i32) {
    %c0_i32 = arith.constant 0 : i32
    %c0_i32_0 = arith.constant 0 : i32
    %c0_i32_1 = arith.constant 0 : i32
    return %c0_i32, %c0_i32_0 : i32, i32
  }
  func.func @transform_10(%arg0: i32) -> (i32, i32) {
    %c0_i32 = arith.constant 0 : i32
    %c0_i32_0 = arith.constant 0 : i32
    %c0_i32_1 = arith.constant 0 : i32
    return %c0_i32, %c0_i32_0 : i32, i32
  }
  func.func @transform_11(%arg0: i32) -> (i32, i32, i32) {
    %c0_i32 = arith.constant 0 : i32
    %c0_i32_0 = arith.constant 0 : i32
    %c0_i32_1 = arith.constant 0 : i32
    %c0_i32_2 = arith.constant 0 : i32
    return %c0_i32, %c0_i32_0, %c0_i32_1 : i32, i32, i32
  }
  func.func @transform_12(%arg0: i32) -> (i32, i32, i32) {
    %c0_i32 = arith.constant 0 : i32
    %c0_i32_0 = arith.constant 0 : i32
    %c0_i32_1 = arith.constant 0 : i32
    %c0_i32_2 = arith.constant 0 : i32
    return %c0_i32, %c0_i32_0, %c0_i32_1 : i32, i32, i32
  }
  func.func @transform_13(%arg0: i32) -> (i32, i32) {
    %c0_i32 = arith.constant 0 : i32
    %c0_i32_0 = arith.constant 0 : i32
    return %arg0, %c0_i32 : i32, i32
  }
}

</mosaic_0001>

<llo_original>
// kernel: ac_pred_gin_forward.1
$region0: #{ac_pred_gin_forward.1}
  #allocation0 [shape = 'u32[]', space=smem, size = 0x4, offset = 0x4, fixed_abs, tag = 'smem constant byte address 0x4 - core index']
  #allocation1 [shape = 'u32[144,128]{1,0:T(1,128)}', space=vmem, size = 0x12000, scoped, tag = 'internal scratch']
  %s0 = inlined_call_operand.vmem [shape: bf16[512,128], index: 0, kind: input, shape index: {}]
  %s1 = inlined_call_operand.vmem [shape: bf16[32,16,16], index: 1, kind: input, shape index: {}]
  %s2 = inlined_call_operand.vmem [shape: bf16[2,128,128], index: 2, kind: input, shape index: {}]
  %s3 = inlined_call_operand.vmem [shape: f32[2,1,128], index: 3, kind: input, shape index: {}]
  %s4 = inlined_call_operand.vmem [shape: bf16[2,128,128], index: 4, kind: input, shape index: {}]
  %s5 = inlined_call_operand.vmem [shape: f32[2,1,128], index: 5, kind: input, shape index: {}]
  %s6 = inlined_call_operand.vmem [shape: bf16[128,128], index: 6, kind: input, shape index: {}]
  %s7 = inlined_call_operand.vmem [shape: f32[1,128], index: 7, kind: input, shape index: {}]
  %s8 = inlined_call_operand.vmem [shape: bf16[128,128], index: 8, kind: input, shape index: {}]
  %s9 = inlined_call_operand.vmem [shape: bf16[128,128], index: 9, kind: input, shape index: {}]
  %s10 = inlined_call_operand.vmem [shape: f32[1,128], index: 10, kind: input, shape index: {}]
  %s11 = inlined_call_operand.vmem [shape: bf16[2,128,128], index: 11, kind: input, shape index: {}]
  %s12 = inlined_call_operand.vmem [shape: f32[2,1,128], index: 12, kind: input, shape index: {}]
  %s13 = inlined_call_operand.vmem [shape: f32[16,128], index: 13, kind: output, shape index: {}]
  %s14 = sld [smem:[#allocation0]]
  $region85: #{ac_pred_gin_forward.1} parent=0
    _
  %s16 = ssub.s32 1, %s14
  %s17 = scalar_select 0, %s16, %s14
  loop: start=0, step=1, limit=4
  $region2: #{ac_pred_gin_forward.1} parent=0 // loop_pre_header
    _
  $region3: #{ac_pred_gin_forward.1} parent=0 // loop_header
    %s19 = sphi 0, %s23
    %p20 = scmp.ge.s32.totalorder %s19, 4
    %s29 = sphi 0, %s31
    %s32 = sphi 0, %s29
    %s33 = sphi 0, %s32
    %s49 = sphi 0, %s33
    %s55 = sphi 0, %s57
    %s58 = sphi 0, %s55
    %s59 = sphi 0, %s58
    %s75 = sphi 0, %s59
    %s79 = sphi 0, %s79
    %s81 = sphi 0, %s79
    %s82 = sphi 0, %s81
    %s96 = sphi 0, %s82
    %s100 = sphi 0, %s100
    %s102 = sphi 0, %s100
    %s103 = sphi 0, %s102
    %s117 = sphi 0, %s103
    %s121 = sphi 0, %s121
    %s123 = sphi 0, %s121
    %s124 = sphi 0, %s123
    %s138 = sphi 0, %s124
    %s142 = sphi 0, %s142
    %s144 = sphi 0, %s142
    %s145 = sphi 0, %s144
    %s159 = sphi 0, %s145
    %s163 = sphi 0, %s163
    %s165 = sphi 0, %s163
    %s166 = sphi 0, %s165
    %s180 = sphi 0, %s166
    %s184 = sphi 0, %s184
    %s186 = sphi 0, %s184
    %s187 = sphi 0, %s186
    %s201 = sphi 0, %s187
    %s205 = sphi 0, %s205
    %s207 = sphi 0, %s205
    %s208 = sphi 0, %s207
    %s222 = sphi 0, %s208
    %s226 = sphi 0, %s226
    %s228 = sphi 0, %s226
    %s229 = sphi 0, %s228
    %s243 = sphi 0, %s229
    %s247 = sphi 0, %s247
    %s249 = sphi 0, %s247
    %s250 = sphi 0, %s249
    %s264 = sphi 0, %s250
    %s268 = sphi 0, %s268
    %s270 = sphi 0, %s268
    %s271 = sphi 0, %s270
    %s285 = sphi 0, %s271
    %s289 = sphi 0, %s289
    %s291 = sphi 0, %s289
    %s292 = sphi 0, %s291
    %s306 = sphi 0, %s292
    %s312 = sphi 0, %s314
    %s315 = sphi 0, %s312
    %s316 = sphi 0, %s315
    %s332 = sphi 0, %s316
  $region4: #{ac_pred_gin_forward.1} parent=0 // loop_header_branch
    %22 = sbr.rel (%p20) target = $region8
  $region5: #{ac_pred_gin_forward.1} parent=0 // loop_body
    %s24 = ssub.s32 %s19, 1
    %s25 = ssub.s32 %s19, 2
    %s26 = sadd.s32 %s19, 1
    %s27 = ssub.s32 %s19, %s26
    %p28 = scmp.eq.s32.totalorder %s27, 0
    %s30 = sadd.s32 %s29, 1
    %s31 = scalar_select %p28, %s29, %s30
    %p34 = pneg %p28
    %p35 = scmp.eq.s32.totalorder %s19, 1
    %p36 = por %p34, %p35
    %p37 = scmp.ne.s32.totalorder %s29, %s32
    %p38 = scmp.eq.s32.totalorder %s19, 0
    %p39 = por %p37, %p38
    %p40 = scmp.ne.s32.totalorder %s29, %s32
    %p41 = scmp.eq.s32.totalorder %s24, 1
    %p42 = por %p40, %p41
    %p43 = scmp.ne.s32.totalorder %s32, %s33
    %p44 = scmp.eq.s32.totalorder %s24, 0
    %p45 = por %p43, %p44
    %p46 = scmp.ne.s32.totalorder %s32, %s33
    %p47 = scmp.eq.s32.totalorder %s25, 1
    %p48 = por %p46, %p47
    %p50 = scmp.ne.s32.totalorder %s33, %s49
    %p51 = scmp.eq.s32.totalorder %s25, 0
    %p52 = por %p50, %p51
    %s53 = ssub.s32 %s19, %s26
    %p54 = scmp.eq.s32.totalorder %s53, 0
    %s56 = sadd.s32 %s55, 1
    %s57 = scalar_select %p54, %s55, %s56
    %p60 = pneg %p54
    %p61 = scmp.eq.s32.totalorder %s19, 1
    %p62 = por %p60, %p61
    %p63 = scmp.ne.s32.totalorder %s55, %s58
    %p64 = scmp.eq.s32.totalorder %s19, 0
    %p65 = por %p63, %p64
    %p66 = scmp.ne.s32.totalorder %s55, %s58
    %p67 = scmp.eq.s32.totalorder %s24, 1
    %p68 = por %p66, %p67
    %p69 = scmp.ne.s32.totalorder %s58, %s59
    %p70 = scmp.eq.s32.totalorder %s24, 0
    %p71 = por %p69, %p70
    %p72 = scmp.ne.s32.totalorder %s58, %s59
    %p73 = scmp.eq.s32.totalorder %s25, 1
    %p74 = por %p72, %p73
    %p76 = scmp.ne.s32.totalorder %s59, %s75
    %p77 = scmp.eq.s32.totalorder %s25, 0
    %p78 = por %p76, %p77
    %s80 = sadd.s32 %s79, 1
    %p83 = scmp.eq.s32.totalorder %s19, 1
    %p84 = scmp.ne.s32.totalorder %s79, %s81
    %p85 = scmp.eq.s32.totalorder %s19, 0
    %p86 = por %p84, %p85
    %p87 = scmp.ne.s32.totalorder %s79, %s81
    %p88 = scmp.eq.s32.totalorder %s24, 1
    %p89 = por %p87, %p88
    %p90 = scmp.ne.s32.totalorder %s81, %s82
    %p91 = scmp.eq.s32.totalorder %s24, 0
    %p92 = por %p90, %p91
    %p93 = scmp.ne.s32.totalorder %s81, %s82
    %p94 = scmp.eq.s32.totalorder %s25, 1
    %p95 = por %p93, %p94
    %p97 = scmp.ne.s32.totalorder %s82, %s96
    %p98 = scmp.eq.s32.totalorder %s25, 0
    %p99 = por %p97, %p98
    %s101 = sadd.s32 %s100, 1
    %p104 = scmp.eq.s32.totalorder %s19, 1
    %p105 = scmp.ne.s32.totalorder %s100, %s102
    %p106 = scmp.eq.s32.totalorder %s19, 0
    %p107 = por %p105, %p106
    %p108 = scmp.ne.s32.totalorder %s100, %s102
    %p109 = scmp.eq.s32.totalorder %s24, 1
    %p110 = por %p108, %p109
    %p111 = scmp.ne.s32.totalorder %s102, %s103
    %p112 = scmp.eq.s32.totalorder %s24, 0
    %p113 = por %p111, %p112
    %p114 = scmp.ne.s32.totalorder %s102, %s103
    %p115 = scmp.eq.s32.totalorder %s25, 1
    %p116 = por %p114, %p115
    %p118 = scmp.ne.s32.totalorder %s103, %s117
    %p119 = scmp.eq.s32.totalorder %s25, 0
    %p120 = por %p118, %p119
    %s122 = sadd.s32 %s121, 1
    %p125 = scmp.eq.s32.totalorder %s19, 1
    %p126 = scmp.ne.s32.totalorder %s121, %s123
    %p127 = scmp.eq.s32.totalorder %s19, 0
    %p128 = por %p126, %p127
    %p129 = scmp.ne.s32.totalorder %s121, %s123
    %p130 = scmp.eq.s32.totalorder %s24, 1
    %p131 = por %p129, %p130
    %p132 = scmp.ne.s32.totalorder %s123, %s124
    %p133 = scmp.eq.s32.totalorder %s24, 0
    %p134 = por %p132, %p133
    %p135 = scmp.ne.s32.totalorder %s123, %s124
    %p136 = scmp.eq.s32.totalorder %s25, 1
    %p137 = por %p135, %p136
    %p139 = scmp.ne.s32.totalorder %s124, %s138
    %p140 = scmp.eq.s32.totalorder %s25, 0
    %p141 = por %p139, %p140
    %s143 = sadd.s32 %s142, 1
    %p146 = scmp.eq.s32.totalorder %s19, 1
    %p147 = scmp.ne.s32.totalorder %s142, %s144
    %p148 = scmp.eq.s32.totalorder %s19, 0
    %p149 = por %p147, %p148
    %p150 = scmp.ne.s32.totalorder %s142, %s144
    %p151 = scmp.eq.s32.totalorder %s24, 1
    %p152 = por %p150, %p151
    %p153 = scmp.ne.s32.totalorder %s144, %s145
    %p154 = scmp.eq.s32.totalorder %s24, 0
    %p155 = por %p153, %p154
    %p156 = scmp.ne.s32.totalorder %s144, %s145
    %p157 = scmp.eq.s32.totalorder %s25, 1
    %p158 = por %p156, %p157
    %p160 = scmp.ne.s32.totalorder %s145, %s159
    %p161 = scmp.eq.s32.totalorder %s25, 0
    %p162 = por %p160, %p161
    %s164 = sadd.s32 %s163, 1
    %p167 = scmp.eq.s32.totalorder %s19, 1
    %p168 = scmp.ne.s32.totalorder %s163, %s165
    %p169 = scmp.eq.s32.totalorder %s19, 0
    %p170 = por %p168, %p169
    %p171 = scmp.ne.s32.totalorder %s163, %s165
    %p172 = scmp.eq.s32.totalorder %s24, 1
    %p173 = por %p171, %p172
    %p174 = scmp.ne.s32.totalorder %s165, %s166
    %p175 = scmp.eq.s32.totalorder %s24, 0
    %p176 = por %p174, %p175
    %p177 = scmp.ne.s32.totalorder %s165, %s166
    %p178 = scmp.eq.s32.totalorder %s25, 1
    %p179 = por %p177, %p178
    %p181 = scmp.ne.s32.totalorder %s166, %s180
    %p182 = scmp.eq.s32.totalorder %s25, 0
    %p183 = por %p181, %p182
    %s185 = sadd.s32 %s184, 1
    %p188 = scmp.eq.s32.totalorder %s19, 1
    %p189 = scmp.ne.s32.totalorder %s184, %s186
    %p190 = scmp.eq.s32.totalorder %s19, 0
    %p191 = por %p189, %p190
    %p192 = scmp.ne.s32.totalorder %s184, %s186
    %p193 = scmp.eq.s32.totalorder %s24, 1
    %p194 = por %p192, %p193
    %p195 = scmp.ne.s32.totalorder %s186, %s187
    %p196 = scmp.eq.s32.totalorder %s24, 0
    %p197 = por %p195, %p196
    %p198 = scmp.ne.s32.totalorder %s186, %s187
    %p199 = scmp.eq.s32.totalorder %s25, 1
    %p200 = por %p198, %p199
    %p202 = scmp.ne.s32.totalorder %s187, %s201
    %p203 = scmp.eq.s32.totalorder %s25, 0
    %p204 = por %p202, %p203
    %s206 = sadd.s32 %s205, 1
    %p209 = scmp.eq.s32.totalorder %s19, 1
    %p210 = scmp.ne.s32.totalorder %s205, %s207
    %p211 = scmp.eq.s32.totalorder %s19, 0
    %p212 = por %p210, %p211
    %p213 = scmp.ne.s32.totalorder %s205, %s207
    %p214 = scmp.eq.s32.totalorder %s24, 1
    %p215 = por %p213, %p214
    %p216 = scmp.ne.s32.totalorder %s207, %s208
    %p217 = scmp.eq.s32.totalorder %s24, 0
    %p218 = por %p216, %p217
    %p219 = scmp.ne.s32.totalorder %s207, %s208
    %p220 = scmp.eq.s32.totalorder %s25, 1
    %p221 = por %p219, %p220
    %p223 = scmp.ne.s32.totalorder %s208, %s222
    %p224 = scmp.eq.s32.totalorder %s25, 0
    %p225 = por %p223, %p224
    %s227 = sadd.s32 %s226, 1
    %p230 = scmp.eq.s32.totalorder %s19, 1
    %p231 = scmp.ne.s32.totalorder %s226, %s228
    %p232 = scmp.eq.s32.totalorder %s19, 0
    %p233 = por %p231, %p232
    %p234 = scmp.ne.s32.totalorder %s226, %s228
    %p235 = scmp.eq.s32.totalorder %s24, 1
    %p236 = por %p234, %p235
    %p237 = scmp.ne.s32.totalorder %s228, %s229
    %p238 = scmp.eq.s32.totalorder %s24, 0
    %p239 = por %p237, %p238
    %p240 = scmp.ne.s32.totalorder %s228, %s229
    %p241 = scmp.eq.s32.totalorder %s25, 1
    %p242 = por %p240, %p241
    %p244 = scmp.ne.s32.totalorder %s229, %s243
    %p245 = scmp.eq.s32.totalorder %s25, 0
    %p246 = por %p244, %p245
    %s248 = sadd.s32 %s247, 1
    %p251 = scmp.eq.s32.totalorder %s19, 1
    %p252 = scmp.ne.s32.totalorder %s247, %s249
    %p253 = scmp.eq.s32.totalorder %s19, 0
    %p254 = por %p252, %p253
    %p255 = scmp.ne.s32.totalorder %s247, %s249
    %p256 = scmp.eq.s32.totalorder %s24, 1
    %p257 = por %p255, %p256
    %p258 = scmp.ne.s32.totalorder %s249, %s250
    %p259 = scmp.eq.s32.totalorder %s24, 0
    %p260 = por %p258, %p259
    %p261 = scmp.ne.s32.totalorder %s249, %s250
    %p262 = scmp.eq.s32.totalorder %s25, 1
    %p263 = por %p261, %p262
    %p265 = scmp.ne.s32.totalorder %s250, %s264
    %p266 = scmp.eq.s32.totalorder %s25, 0
    %p267 = por %p265, %p266
    %s269 = sadd.s32 %s268, 1
    %p272 = scmp.eq.s32.totalorder %s19, 1
    %p273 = scmp.ne.s32.totalorder %s268, %s270
    %p274 = scmp.eq.s32.totalorder %s19, 0
    %p275 = por %p273, %p274
    %p276 = scmp.ne.s32.totalorder %s268, %s270
    %p277 = scmp.eq.s32.totalorder %s24, 1
    %p278 = por %p276, %p277
    %p279 = scmp.ne.s32.totalorder %s270, %s271
    %p280 = scmp.eq.s32.totalorder %s24, 0
    %p281 = por %p279, %p280
    %p282 = scmp.ne.s32.totalorder %s270, %s271
    %p283 = scmp.eq.s32.totalorder %s25, 1
    %p284 = por %p282, %p283
    %p286 = scmp.ne.s32.totalorder %s271, %s285
    %p287 = scmp.eq.s32.totalorder %s25, 0
    %p288 = por %p286, %p287
    %s290 = sadd.s32 %s289, 1
    %p293 = scmp.eq.s32.totalorder %s19, 1
    %p294 = scmp.ne.s32.totalorder %s289, %s291
    %p295 = scmp.eq.s32.totalorder %s19, 0
    %p296 = por %p294, %p295
    %p297 = scmp.ne.s32.totalorder %s289, %s291
    %p298 = scmp.eq.s32.totalorder %s24, 1
    %p299 = por %p297, %p298
    %p300 = scmp.ne.s32.totalorder %s291, %s292
    %p301 = scmp.eq.s32.totalorder %s24, 0
    %p302 = por %p300, %p301
    %p303 = scmp.ne.s32.totalorder %s291, %s292
    %p304 = scmp.eq.s32.totalorder %s25, 1
    %p305 = por %p303, %p304
    %p307 = scmp.ne.s32.totalorder %s292, %s306
    %p308 = scmp.eq.s32.totalorder %s25, 0
    %p309 = por %p307, %p308
    %s310 = ssub.s32 %s19, %s26
    %p311 = scmp.eq.s32.totalorder %s310, 0
    %s313 = sadd.s32 %s312, 1
    %s314 = scalar_select %p311, %s312, %s313
    %p317 = pneg %p311
    %p318 = scmp.eq.s32.totalorder %s19, 1
    %p319 = por %p317, %p318
    %p320 = scmp.ne.s32.totalorder %s312, %s315
    %p321 = scmp.eq.s32.totalorder %s19, 0
    %p322 = por %p320, %p321
    %p323 = scmp.ne.s32.totalorder %s312, %s315
    %p324 = scmp.eq.s32.totalorder %s24, 1
    %p325 = por %p323, %p324
    %p326 = scmp.ne.s32.totalorder %s315, %s316
    %p327 = scmp.eq.s32.totalorder %s24, 0
    %p328 = por %p326, %p327
    %p329 = scmp.ne.s32.totalorder %s315, %s316
    %p330 = scmp.eq.s32.totalorder %s25, 1
    %p331 = por %p329, %p330
    %p333 = scmp.ne.s32.totalorder %s316, %s332
    %p334 = scmp.eq.s32.totalorder %s25, 0
    %p335 = por %p333, %p334
    %p336 = scmp.le.s32.totalorder 1, %s19
    %p337 = scmp.lt.s32.totalorder %s19, 3
    %p338 = pnand %p336, %p337
    %p339 = pneg %p338
    // Predicated region
    $region9: #{ac_pred_gin_forward.1} parent=5 // pred_check
      _
    $region10: #{ac_pred_gin_forward.1} parent=5 // pred_check_branch
      %341 = sbr.rel (%p338) target = $region12
    $region11: #{ac_pred_gin_forward.1} parent=5 // pred_region
      %s342 = ssub.s32 %s19, 1
      // Predicated region
      $region13: #{ac_pred_gin_forward.1} parent=11 // pred_check
        %p343 = pneg %p92
      $region14: #{ac_pred_gin_forward.1} parent=11 // pred_check_branch
        %345 = sbr.rel (%p343) target = $region16
      $region15: #{ac_pred_gin_forward.1} parent=11 // pred_region
        _
      $region16: #{ac_pred_gin_forward.1} parent=11 // pred_fallthru
        _
      // Predicated region
      $region17: #{ac_pred_gin_forward.1} parent=11 // pred_check
        %p346 = pneg %p113
      $region18: #{ac_pred_gin_forward.1} parent=11 // pred_check_branch
        %348 = sbr.rel (%p346) target = $region20
      $region19: #{ac_pred_gin_forward.1} parent=11 // pred_region
        _
      $region20: #{ac_pred_gin_forward.1} parent=11 // pred_fallthru
        _
      // Predicated region
      $region21: #{ac_pred_gin_forward.1} parent=11 // pred_check
        %p349 = pneg %p134
      $region22: #{ac_pred_gin_forward.1} parent=11 // pred_check_branch
        %351 = sbr.rel (%p349) target = $region24
      $region23: #{ac_pred_gin_forward.1} parent=11 // pred_region
        _
      $region24: #{ac_pred_gin_forward.1} parent=11 // pred_fallthru
        _
      // Predicated region
      $region25: #{ac_pred_gin_forward.1} parent=11 // pred_check
        %p352 = pneg %p155
      $region26: #{ac_pred_gin_forward.1} parent=11 // pred_check_branch
        %354 = sbr.rel (%p352) target = $region28
      $region27: #{ac_pred_gin_forward.1} parent=11 // pred_region
        _
      $region28: #{ac_pred_gin_forward.1} parent=11 // pred_fallthru
        _
      // Predicated region
      $region29: #{ac_pred_gin_forward.1} parent=11 // pred_check
        %p355 = pneg %p176
      $region30: #{ac_pred_gin_forward.1} parent=11 // pred_check_branch
        %357 = sbr.rel (%p355) target = $region32
      $region31: #{ac_pred_gin_forward.1} parent=11 // pred_region
        _
      $region32: #{ac_pred_gin_forward.1} parent=11 // pred_fallthru
        _
      // Predicated region
      $region33: #{ac_pred_gin_forward.1} parent=11 // pred_check
        %p358 = pneg %p197
      $region34: #{ac_pred_gin_forward.1} parent=11 // pred_check_branch
        %360 = sbr.rel (%p358) target = $region36
      $region35: #{ac_pred_gin_forward.1} parent=11 // pred_region
        _
      $region36: #{ac_pred_gin_forward.1} parent=11 // pred_fallthru
        _
      // Predicated region
      $region37: #{ac_pred_gin_forward.1} parent=11 // pred_check
        %p361 = pneg %p218
      $region38: #{ac_pred_gin_forward.1} parent=11 // pred_check_branch
        %363 = sbr.rel (%p361) target = $region40
      $region39: #{ac_pred_gin_forward.1} parent=11 // pred_region
        _
      $region40: #{ac_pred_gin_forward.1} parent=11 // pred_fallthru
        _
      // Predicated region
      $region41: #{ac_pred_gin_forward.1} parent=11 // pred_check
        %p364 = pneg %p239
      $region42: #{ac_pred_gin_forward.1} parent=11 // pred_check_branch
        %366 = sbr.rel (%p364) target = $region44
      $region43: #{ac_pred_gin_forward.1} parent=11 // pred_region
        _
      $region44: #{ac_pred_gin_forward.1} parent=11 // pred_fallthru
        _
      // Predicated region
      $region45: #{ac_pred_gin_forward.1} parent=11 // pred_check
        %p367 = pneg %p260
      $region46: #{ac_pred_gin_forward.1} parent=11 // pred_check_branch
        %369 = sbr.rel (%p367) target = $region48
      $region47: #{ac_pred_gin_forward.1} parent=11 // pred_region
        _
      $region48: #{ac_pred_gin_forward.1} parent=11 // pred_fallthru
        _
      // Predicated region
      $region49: #{ac_pred_gin_forward.1} parent=11 // pred_check
        %p370 = pneg %p281
      $region50: #{ac_pred_gin_forward.1} parent=11 // pred_check_branch
        %372 = sbr.rel (%p370) target = $region52
      $region51: #{ac_pred_gin_forward.1} parent=11 // pred_region
        _
      $region52: #{ac_pred_gin_forward.1} parent=11 // pred_fallthru
        _
      // Predicated region
      $region53: #{ac_pred_gin_forward.1} parent=11 // pred_check
        %p373 = pneg %p302
      $region54: #{ac_pred_gin_forward.1} parent=11 // pred_check_branch
        %375 = sbr.rel (%p373) target = $region56
      $region55: #{ac_pred_gin_forward.1} parent=11 // pred_region
        _
      $region56: #{ac_pred_gin_forward.1} parent=11 // pred_fallthru
        _
    $region12: #{ac_pred_gin_forward.1} parent=5 // pred_fallthru
      _
    %p376 = scmp.lt.s32.totalorder %s19, 2
    // Predicated region
    $region57: #{ac_pred_gin_forward.1} parent=5 // pred_check
      %p377 = pneg %p376
    $region58: #{ac_pred_gin_forward.1} parent=5 // pred_check_branch
      %379 = sbr.rel (%p377) target = $region60
    $region59: #{ac_pred_gin_forward.1} parent=5 // pred_region
      // Predicated region
      $region61: #{ac_pred_gin_forward.1} parent=59 // pred_check
        %p380 = pneg %p39
      $region62: #{ac_pred_gin_forward.1} parent=59 // pred_check_branch
        %382 = sbr.rel (%p380) target = $region64
      $region63: #{ac_pred_gin_forward.1} parent=59 // pred_region
        %s383 = smul.u32 32, %s19
        %p384 = scmp.lt.s32.totalorder %s383, 63
        %s385 = scalar_select %p384, %s383, 63
        %s386 = smul.addr %s385, 4
        %s387 = scalar_lea.vmem %s0, %s386
        %s388 = smul.u32 32, %s19
      $region64: #{ac_pred_gin_forward.1} parent=59 // pred_fallthru
        _
      // Predicated region
      $region65: #{ac_pred_gin_forward.1} parent=59 // pred_check
        %p389 = pneg %p65
      $region66: #{ac_pred_gin_forward.1} parent=59 // pred_check_branch
        %391 = sbr.rel (%p389) target = $region68
      $region67: #{ac_pred_gin_forward.1} parent=59 // pred_region
        %s392 = smul.u32 16, %s19
        %p393 = scmp.lt.s32.totalorder %s392, 31
        %s394 = scalar_select %p393, %s392, 31
        %s395 = smul.addr %s394, 2
        %s396 = smul.addr %s395, 4
        %s397 = scalar_lea.vmem %s1, %s396
        %s398 = smul.u32 16, %s19
      $region68: #{ac_pred_gin_forward.1} parent=59 // pred_fallthru
        _
    $region60: #{ac_pred_gin_forward.1} parent=5 // pred_fallthru
      _
    %p399 = scmp.le.s32.totalorder 1, %s19
    %p400 = scmp.lt.s32.totalorder %s19, 3
    %p401 = pnand %p399, %p400
    %p402 = pneg %p401
    // Predicated region
    $region69: #{ac_pred_gin_forward.1} parent=5 // pred_check
      _
    $region70: #{ac_pred_gin_forward.1} parent=5 // pred_check_branch
      %404 = sbr.rel (%p401) target = $region72
    $region71: #{ac_pred_gin_forward.1} parent=5 // pred_region
      %s405 = ssub.s32 %s19, 1
      %s406 = smul.u32 32, %s24
      %p407 = scmp.lt.s32.totalorder %s406, 63
      %s408 = scalar_select %p407, %s406, 63
      %s409 = smul.addr %s408, 4
      %s410 = scalar_lea.vmem %s0, %s409
      %p411 = pneg %p45
      %p412 = pneg %p42
      %s413 = smul.u32 16, %s24
      %p414 = scmp.lt.s32.totalorder %s413, 31
      %s415 = scalar_select %p414, %s413, 31
      %s416 = smul.addr %s415, 2
      %s417 = smul.addr %s416, 4
      %s418 = scalar_lea.vmem %s1, %s417
      %p419 = pneg %p71
      %p420 = pneg %p68
      %p421 = pneg %p92
      %p422 = pneg %p89
      %p423 = pneg %p113
      %p424 = pneg %p110
      %p425 = pneg %p134
      %p426 = pneg %p131
      %p427 = pneg %p155
      %p428 = pneg %p152
      %p429 = pneg %p176
      %p430 = pneg %p173
      %p431 = pneg %p197
      %p432 = pneg %p194
      %p433 = pneg %p218
      %p434 = pneg %p215
      %p435 = pneg %p239
      %p436 = pneg %p236
      %p437 = pneg %p260
      %p438 = pneg %p257
      %p439 = pneg %p281
      %p440 = pneg %p278
      %p441 = pneg %p302
      %p442 = pneg %p299
      %p443 = pneg %p328
      %p444 = pneg %p325
      %p445 = scmp.lt.s32.totalorder %s24, 1
      %s446 = scalar_select %p445, %s24, 1
      %s447 = smul.addr %s446, 8
      %s448 = scalar_lea.vmem %s13, %s447
      %s449 = smul.u32 32, %s24
      %p450 = scmp.lt.s32.totalorder %s449, 63
      %s451 = scalar_select %p450, %s449, 63
      %s452 = smul.addr %s451, 4
      %s453 = scalar_lea.vmem %s0, %s452
      %s454 = smul.u32 32, %s24
      %s455 = smul.u32 16, %s24
      %p456 = scmp.lt.s32.totalorder %s455, 31
      %s457 = scalar_select %p456, %s455, 31
      %s458 = smul.addr %s457, 2
      %s459 = smul.addr %s458, 4
      %s460 = scalar_lea.vmem %s1, %s459
      %s461 = smul.u32 16, %s24
      %p462 = scmp.lt.s32.totalorder %s24, 1
      %s463 = scalar_select %p462, %s24, 1
      %s464 = smul.addr %s463, 8
      %s465 = scalar_lea.vmem %s13, %s464
      %v467 = vld [vmem:[%s453] sm:$0xf]
      %v468 = vld [vmem:[%s453 + $0x4] sm:$0xf]
      %v469 = vld [vmem:[%s453 + $0x8] sm:$0xf]
      %v470 = vld [vmem:[%s453 + $0xc] sm:$0xf]
      %v471 = vld [vmem:[%s453 + $0x10] sm:$0xf]
      %v472 = vld [vmem:[%s453 + $0x14] sm:$0xf]
      %v473 = vld [vmem:[%s453 + $0x18] sm:$0xf]
      %v474 = vld [vmem:[%s453 + $0x1c] sm:$0xf]
      %v475 = vld [vmem:[%s453 + $0x20] sm:$0xf]
      %v476 = vld [vmem:[%s453 + $0x24] sm:$0xf]
      %v477 = vld [vmem:[%s453 + $0x28] sm:$0xf]
      %v478 = vld [vmem:[%s453 + $0x2c] sm:$0xf]
      %v479 = vld [vmem:[%s453 + $0x30] sm:$0xf]
      %v480 = vld [vmem:[%s453 + $0x34] sm:$0xf]
      %v481 = vld [vmem:[%s453 + $0x38] sm:$0xf]
      %v482 = vld [vmem:[%s453 + $0x3c] sm:$0xf]
      %v483 = vld [vmem:[%s453 + $0x40] sm:$0xf]
      %v484 = vld [vmem:[%s453 + $0x44] sm:$0xf]
      %v485 = vld [vmem:[%s453 + $0x48] sm:$0xf]
      %v486 = vld [vmem:[%s453 + $0x4c] sm:$0xf]
      %v487 = vld [vmem:[%s453 + $0x50] sm:$0xf]
      %v488 = vld [vmem:[%s453 + $0x54] sm:$0xf]
      %v489 = vld [vmem:[%s453 + $0x58] sm:$0xf]
      %v490 = vld [vmem:[%s453 + $0x5c] sm:$0xf]
      %v491 = vld [vmem:[%s453 + $0x60] sm:$0xf]
      %v492 = vld [vmem:[%s453 + $0x64] sm:$0xf]
      %v493 = vld [vmem:[%s453 + $0x68] sm:$0xf]
      %v494 = vld [vmem:[%s453 + $0x6c] sm:$0xf]
      %v495 = vld [vmem:[%s453 + $0x70] sm:$0xf]
      %v496 = vld [vmem:[%s453 + $0x74] sm:$0xf]
      %v497 = vld [vmem:[%s453 + $0x78] sm:$0xf]
      %v498 = vld [vmem:[%s453 + $0x7c] sm:$0xf]
      %v499 = vld [vmem:[%s460] sm:$0xf]
      %v500 = vld [vmem:[%s460 + $0x4] sm:$0xf]
      %v501 = vld [vmem:[%s460 + $0x8] sm:$0xf]
      %v502 = vld [vmem:[%s460 + $0xc] sm:$0xf]
      %v503 = vld [vmem:[%s460 + $0x10] sm:$0xf]
      %v504 = vld [vmem:[%s460 + $0x14] sm:$0xf]
      %v505 = vld [vmem:[%s460 + $0x18] sm:$0xf]
      %v506 = vld [vmem:[%s460 + $0x1c] sm:$0xf]
      %v507 = vld [vmem:[%s460 + $0x20] sm:$0xf]
      %v508 = vld [vmem:[%s460 + $0x24] sm:$0xf]
      %v509 = vld [vmem:[%s460 + $0x28] sm:$0xf]
      %v510 = vld [vmem:[%s460 + $0x2c] sm:$0xf]
      %v511 = vld [vmem:[%s460 + $0x30] sm:$0xf]
      %v512 = vld [vmem:[%s460 + $0x34] sm:$0xf]
      %v513 = vld [vmem:[%s460 + $0x38] sm:$0xf]
      %v514 = vld [vmem:[%s460 + $0x3c] sm:$0xf]
      %v515 = vld [vmem:[%s460 + $0x40] sm:$0xf]
      %v516 = vld [vmem:[%s460 + $0x44] sm:$0xf]
      %v517 = vld [vmem:[%s460 + $0x48] sm:$0xf]
      %v518 = vld [vmem:[%s460 + $0x4c] sm:$0xf]
      %v519 = vld [vmem:[%s460 + $0x50] sm:$0xf]
      %v520 = vld [vmem:[%s460 + $0x54] sm:$0xf]
      %v521 = vld [vmem:[%s460 + $0x58] sm:$0xf]
      %v522 = vld [vmem:[%s460 + $0x5c] sm:$0xf]
      %v523 = vld [vmem:[%s460 + $0x60] sm:$0xf]
      %v524 = vld [vmem:[%s460 + $0x64] sm:$0xf]
      %v525 = vld [vmem:[%s460 + $0x68] sm:$0xf]
      %v526 = vld [vmem:[%s460 + $0x6c] sm:$0xf]
      %v527 = vld [vmem:[%s460 + $0x70] sm:$0xf]
      %v528 = vld [vmem:[%s460 + $0x74] sm:$0xf]
      %v529 = vld [vmem:[%s460 + $0x78] sm:$0xf]
      %v530 = vld [vmem:[%s460 + $0x7c] sm:$0xf]
      %v533 = vunpack.c.l.b16 %v499
      %v534 = vunpack.c.l.b16 %v500
      %v535 = vpack.c.b16 %v534, %v533
      %v538 = vunpack.c.l.b16 %v467
      %v539 = vunpack.c.l.b16 %v468
      %v540 = vpack.c.b16 %v539, %v538
      %vm542 = vcmask 130048
      %v544 = vsel %vm542, %v535, 0
      %546 = vmatprep.subr.bf16.mxu0 0
      %547 = vmatpush1.bf16.msra.mxu0 %v540
      %548 = vmatprep.subr.bf16.mxu0 0
      %549 = vmatpush1.bf16.msra.mxu0 0
      %550 = vmatprep.subr.bf16.mxu0 0
      %551 = vmatpush1.bf16.msra.mxu0 0
      %552 = vmatprep.subr.bf16.mxu0 0
      %553 = vmatpush1.bf16.msra.mxu0 0
      %554 = vmatprep.subr.bf16.mxu0 0
      %555 = vmatpush1.bf16.msra.mxu0 0
      %556 = vmatprep.subr.bf16.mxu0 0
      %557 = vmatpush1.bf16.msra.mxu0 0
      %558 = vmatprep.subr.bf16.mxu0 0
      %559 = vmatpush1.bf16.msra.mxu0 0
      %560 = vmatprep.subr.bf16.mxu0 0
      %561 = vmatpush1.bf16.msra.mxu0 0
      %562 = vmatprep.subr.bf16.mxu0 0
      %563 = vmatpush1.bf16.msra.mxu0 0
      %564 = vmatprep.subr.bf16.mxu0 0
      %565 = vmatpush1.bf16.msra.mxu0 0
      %566 = vmatprep.subr.bf16.mxu0 0
      %567 = vmatpush1.bf16.msra.mxu0 0
      %568 = vmatprep.subr.bf16.mxu0 0
      %569 = vmatpush1.bf16.msra.mxu0 0
      %570 = vmatprep.subr.bf16.mxu0 0
      %571 = vmatpush1.bf16.msra.mxu0 0
      %572 = vmatprep.subr.bf16.mxu0 0
      %573 = vmatpush1.bf16.msra.mxu0 0
      %574 = vmatprep.subr.bf16.mxu0 0
      %575 = vmatpush1.bf16.msra.mxu0 0
      %576 = vmatprep.subr.bf16.mxu0 0
      %577 = vmatpush1.bf16.msra.mxu0 0
      %578 = vmatprep.mubr.bf16.mxu0 0
      %579 = vmatmul.mubr.bf16.gmra.mrb[0].mxu0 %v544
      %v580 = vpop.f32.mrb[0].mxu0
      %v581 = vadd.f32 0.0, %v580
      %v582 = vpop.f32.mrb[0].mxu0
      %v583 = vpop.f32.mrb[0].mxu0
      %v584 = vadd.f32 0.0, %v583
      %v585 = vpop.f32.mrb[0].mxu0
      %586 = vdwg.mxu0
      %v589 = vunpack.c.l.b16 %v501
      %v590 = vunpack.c.l.b16 %v502
      %v591 = vpack.c.b16 %v590, %v589
      %v594 = vunpack.c.l.b16 %v469
      %v595 = vunpack.c.l.b16 %v470
      %v596 = vpack.c.b16 %v595, %v594
      %v599 = vsel %vm542, %v591, 0
      %601 = vmatprep.subr.bf16.mxu0 0
      %602 = vmatpush1.bf16.msra.mxu0 %v596
      %603 = vmatprep.subr.bf16.mxu0 0
      %604 = vmatpush1.bf16.msra.mxu0 0
      %605 = vmatprep.subr.bf16.mxu0 0
      %606 = vmatpush1.bf16.msra.mxu0 0
      %607 = vmatprep.subr.bf16.mxu0 0
      %608 = vmatpush1.bf16.msra.mxu0 0
      %609 = vmatprep.subr.bf16.mxu0 0
      %610 = vmatpush1.bf16.msra.mxu0 0
      %611 = vmatprep.subr.bf16.mxu0 0
      %612 = vmatpush1.bf16.msra.mxu0 0
      %613 = vmatprep.subr.bf16.mxu0 0
      %614 = vmatpush1.bf16.msra.mxu0 0
      %615 = vmatprep.subr.bf16.mxu0 0
      %616 = vmatpush1.bf16.msra.mxu0 0
      %617 = vmatprep.subr.bf16.mxu0 0
      %618 = vmatpush1.bf16.msra.mxu0 0
      %619 = vmatprep.subr.bf16.mxu0 0
      %620 = vmatpush1.bf16.msra.mxu0 0
      %621 = vmatprep.subr.bf16.mxu0 0
      %622 = vmatpush1.bf16.msra.mxu0 0
      %623 = vmatprep.subr.bf16.mxu0 0
      %624 = vmatpush1.bf16.msra.mxu0 0
      %625 = vmatprep.subr.bf16.mxu0 0
      %626 = vmatpush1.bf16.msra.mxu0 0
      %627 = vmatprep.subr.bf16.mxu0 0
      %628 = vmatpush1.bf16.msra.mxu0 0
      %629 = vmatprep.subr.bf16.mxu0 0
      %630 = vmatpush1.bf16.msra.mxu0 0
      %631 = vmatprep.subr.bf16.mxu0 0
      %632 = vmatpush1.bf16.msra.mxu0 0
      %633 = vmatprep.mubr.bf16.mxu0 0
      %634 = vmatmul.mubr.bf16.gmra.mrb[0].mxu0 %v599
      %v635 = vpop.f32.mrb[0].mxu0
      %v636 = vadd.f32 0.0, %v635
      %v637 = vpop.f32.mrb[0].mxu0
      %v638 = vpop.f32.mrb[0].mxu0
      %v639 = vadd.f32 0.0, %v638
      %v640 = vpop.f32.mrb[0].mxu0
      %641 = vdwg.mxu0
      %v644 = vunpack.c.l.b16 %v503
      %v645 = vunpack.c.l.b16 %v504
      %v646 = vpack.c.b16 %v645, %v644
      %v649 = vunpack.c.l.b16 %v471
      %v650 = vunpack.c.l.b16 %v472
      %v651 = vpack.c.b16 %v650, %v649
      %v654 = vsel %vm542, %v646, 0
      %656 = vmatprep.subr.bf16.mxu0 0
      %657 = vmatpush1.bf16.msra.mxu0 %v651
      %658 = vmatprep.subr.bf16.mxu0 0
      %659 = vmatpush1.bf16.msra.mxu0 0
      %660 = vmatprep.subr.bf16.mxu0 0
      %661 = vmatpush1.bf16.msra.mxu0 0
      %662 = vmatprep.subr.bf16.mxu0 0
      %663 = vmatpush1.bf16.msra.mxu0 0
      %664 = vmatprep.subr.bf16.mxu0 0
      %665 = vmatpush1.bf16.msra.mxu0 0
      %666 = vmatprep.subr.bf16.mxu0 0
      %667 = vmatpush1.bf16.msra.mxu0 0
      %668 = vmatprep.subr.bf16.mxu0 0
      %669 = vmatpush1.bf16.msra.mxu0 0
      %670 = vmatprep.subr.bf16.mxu0 0
      %671 = vmatpush1.bf16.msra.mxu0 0
      %672 = vmatprep.subr.bf16.mxu0 0
      %673 = vmatpush1.bf16.msra.mxu0 0
      %674 = vmatprep.subr.bf16.mxu0 0
      %675 = vmatpush1.bf16.msra.mxu0 0
      %676 = vmatprep.subr.bf16.mxu0 0
      %677 = vmatpush1.bf16.msra.mxu0 0
      %678 = vmatprep.subr.bf16.mxu0 0
      %679 = vmatpush1.bf16.msra.mxu0 0
      %680 = vmatprep.subr.bf16.mxu0 0
      %681 = vmatpush1.bf16.msra.mxu0 0
      %682 = vmatprep.subr.bf16.mxu0 0
      %683 = vmatpush1.bf16.msra.mxu0 0
      %684 = vmatprep.subr.bf16.mxu0 0
      %685 = vmatpush1.bf16.msra.mxu0 0
      %686 = vmatprep.subr.bf16.mxu0 0
      %687 = vmatpush1.bf16.msra.mxu0 0
      %688 = vmatprep.mubr.bf16.mxu0 0
      %689 = vmatmul.mubr.bf16.gmra.mrb[0].mxu0 %v654
      %v690 = vpop.f32.mrb[0].mxu0
      %v691 = vadd.f32 0.0, %v690
      %v692 = vpop.f32.mrb[0].mxu0
      %v693 = vpop.f32.mrb[0].mxu0
      %v694 = vadd.f32 0.0, %v693
      %v695 = vpop.f32.mrb[0].mxu0
      %696 = vdwg.mxu0
      %v699 = vunpack.c.l.b16 %v505
      %v700 = vunpack.c.l.b16 %v506
      %v701 = vpack.c.b16 %v700, %v699
      %v704 = vunpack.c.l.b16 %v473
      %v705 = vunpack.c.l.b16 %v474
      %v706 = vpack.c.b16 %v705, %v704
      %v709 = vsel %vm542, %v701, 0
      %711 = vmatprep.subr.bf16.mxu0 0
      %712 = vmatpush1.bf16.msra.mxu0 %v706
      %713 = vmatprep.subr.bf16.mxu0 0
      %714 = vmatpush1.bf16.msra.mxu0 0
      %715 = vmatprep.subr.bf16.mxu0 0
      %716 = vmatpush1.bf16.msra.mxu0 0
      %717 = vmatprep.subr.bf16.mxu0 0
      %718 = vmatpush1.bf16.msra.mxu0 0
      %719 = vmatprep.subr.bf16.mxu0 0
      %720 = vmatpush1.bf16.msra.mxu0 0
      %721 = vmatprep.subr.bf16.mxu0 0
      %722 = vmatpush1.bf16.msra.mxu0 0
      %723 = vmatprep.subr.bf16.mxu0 0
      %724 = vmatpush1.bf16.msra.mxu0 0
      %725 = vmatprep.subr.bf16.mxu0 0
      %726 = vmatpush1.bf16.msra.mxu0 0
      %727 = vmatprep.subr.bf16.mxu0 0
      %728 = vmatpush1.bf16.msra.mxu0 0
      %729 = vmatprep.subr.bf16.mxu0 0
      %730 = vmatpush1.bf16.msra.mxu0 0
      %731 = vmatprep.subr.bf16.mxu0 0
      %732 = vmatpush1.bf16.msra.mxu0 0
      %733 = vmatprep.subr.bf16.mxu0 0
      %734 = vmatpush1.bf16.msra.mxu0 0
      %735 = vmatprep.subr.bf16.mxu0 0
      %736 = vmatpush1.bf16.msra.mxu0 0
      %737 = vmatprep.subr.bf16.mxu0 0
      %738 = vmatpush1.bf16.msra.mxu0 0
      %739 = vmatprep.subr.bf16.mxu0 0
      %740 = vmatpush1.bf16.msra.mxu0 0
      %741 = vmatprep.subr.bf16.mxu0 0
      %742 = vmatpush1.bf16.msra.mxu0 0
      %743 = vmatprep.mubr.bf16.mxu0 0
      %744 = vmatmul.mubr.bf16.gmra.mrb[0].mxu0 %v709
      %v745 = vpop.f32.mrb[0].mxu0
      %v746 = vadd.f32 0.0, %v745
      %v747 = vpop.f32.mrb[0].mxu0
      %v748 = vpop.f32.mrb[0].mxu0
      %v749 = vadd.f32 0.0, %v748
      %v750 = vpop.f32.mrb[0].mxu0
      %751 = vdwg.mxu0
      %v754 = vunpack.c.l.b16 %v507
      %v755 = vunpack.c.l.b16 %v508
      %v756 = vpack.c.b16 %v755, %v754
      %v759 = vunpack.c.l.b16 %v475
      %v760 = vunpack.c.l.b16 %v476
      %v761 = vpack.c.b16 %v760, %v759
      %v764 = vsel %vm542, %v756, 0
      %766 = vmatprep.subr.bf16.mxu0 0
      %767 = vmatpush1.bf16.msra.mxu0 %v761
      %768 = vmatprep.subr.bf16.mxu0 0
      %769 = vmatpush1.bf16.msra.mxu0 0
      %770 = vmatprep.subr.bf16.mxu0 0
      %771 = vmatpush1.bf16.msra.mxu0 0
      %772 = vmatprep.subr.bf16.mxu0 0
      %773 = vmatpush1.bf16.msra.mxu0 0
      %774 = vmatprep.subr.bf16.mxu0 0
      %775 = vmatpush1.bf16.msra.mxu0 0
      %776 = vmatprep.subr.bf16.mxu0 0
      %777 = vmatpush1.bf16.msra.mxu0 0
      %778 = vmatprep.subr.bf16.mxu0 0
      %779 = vmatpush1.bf16.msra.mxu0 0
      %780 = vmatprep.subr.bf16.mxu0 0
      %781 = vmatpush1.bf16.msra.mxu0 0
      %782 = vmatprep.subr.bf16.mxu0 0
      %783 = vmatpush1.bf16.msra.mxu0 0
      %784 = vmatprep.subr.bf16.mxu0 0
      %785 = vmatpush1.bf16.msra.mxu0 0
      %786 = vmatprep.subr.bf16.mxu0 0
      %787 = vmatpush1.bf16.msra.mxu0 0
      %788 = vmatprep.subr.bf16.mxu0 0
      %789 = vmatpush1.bf16.msra.mxu0 0
      %790 = vmatprep.subr.bf16.mxu0 0
      %791 = vmatpush1.bf16.msra.mxu0 0
      %792 = vmatprep.subr.bf16.mxu0 0
      %793 = vmatpush1.bf16.msra.mxu0 0
      %794 = vmatprep.subr.bf16.mxu0 0
      %795 = vmatpush1.bf16.msra.mxu0 0
      %796 = vmatprep.subr.bf16.mxu0 0
      %797 = vmatpush1.bf16.msra.mxu0 0
      %798 = vmatprep.mubr.bf16.mxu0 0
      %799 = vmatmul.mubr.bf16.gmra.mrb[0].mxu0 %v764
      %v800 = vpop.f32.mrb[0].mxu0
      %v801 = vadd.f32 0.0, %v800
      %v802 = vpop.f32.mrb[0].mxu0
      %v803 = vpop.f32.mrb[0].mxu0
      %v804 = vadd.f32 0.0, %v803
      %v805 = vpop.f32.mrb[0].mxu0
      %806 = vdwg.mxu0
      %v809 = vunpack.c.l.b16 %v509
      %v810 = vunpack.c.l.b16 %v510
      %v811 = vpack.c.b16 %v810, %v809
      %v814 = vunpack.c.l.b16 %v477
      %v815 = vunpack.c.l.b16 %v478
      %v816 = vpack.c.b16 %v815, %v814
      %v819 = vsel %vm542, %v811, 0
      %821 = vmatprep.subr.bf16.mxu0 0
      %822 = vmatpush1.bf16.msra.mxu0 %v816
      %823 = vmatprep.subr.bf16.mxu0 0
      %824 = vmatpush1.bf16.msra.mxu0 0
      %825 = vmatprep.subr.bf16.mxu0 0
      %826 = vmatpush1.bf16.msra.mxu0 0
      %827 = vmatprep.subr.bf16.mxu0 0
      %828 = vmatpush1.bf16.msra.mxu0 0
      %829 = vmatprep.subr.bf16.mxu0 0
      %830 = vmatpush1.bf16.msra.mxu0 0
      %831 = vmatprep.subr.bf16.mxu0 0
      %832 = vmatpush1.bf16.msra.mxu0 0
      %833 = vmatprep.subr.bf16.mxu0 0
      %834 = vmatpush1.bf16.msra.mxu0 0
      %835 = vmatprep.subr.bf16.mxu0 0
      %836 = vmatpush1.bf16.msra.mxu0 0
      %837 = vmatprep.subr.bf16.mxu0 0
      %838 = vmatpush1.bf16.msra.mxu0 0
      %839 = vmatprep.subr.bf16.mxu0 0
      %840 = vmatpush1.bf16.msra.mxu0 0
      %841 = vmatprep.subr.bf16.mxu0 0
      %842 = vmatpush1.bf16.msra.mxu0 0
      %843 = vmatprep.subr.bf16.mxu0 0
      %844 = vmatpush1.bf16.msra.mxu0 0
      %845 = vmatprep.subr.bf16.mxu0 0
      %846 = vmatpush1.bf16.msra.mxu0 0
      %847 = vmatprep.subr.bf16.mxu0 0
      %848 = vmatpush1.bf16.msra.mxu0 0
      %849 = vmatprep.subr.bf16.mxu0 0
      %850 = vmatpush1.bf16.msra.mxu0 0
      %851 = vmatprep.subr.bf16.mxu0 0
      %852 = vmatpush1.bf16.msra.mxu0 0
      %853 = vmatprep.mubr.bf16.mxu0 0
      %854 = vmatmul.mubr.bf16.gmra.mrb[0].mxu0 %v819
      %v855 = vpop.f32.mrb[0].mxu0
      %v856 = vadd.f32 0.0, %v855
      %v857 = vpop.f32.mrb[0].mxu0
      %v858 = vpop.f32.mrb[0].mxu0
      %v859 = vadd.f32 0.0, %v858
      %v860 = vpop.f32.mrb[0].mxu0
      %861 = vdwg.mxu0
      %v864 = vunpack.c.l.b16 %v511
      %v865 = vunpack.c.l.b16 %v512
      %v866 = vpack.c.b16 %v865, %v864
      %v869 = vunpack.c.l.b16 %v479
      %v870 = vunpack.c.l.b16 %v480
      %v871 = vpack.c.b16 %v870, %v869
      %v874 = vsel %vm542, %v866, 0
      %876 = vmatprep.subr.bf16.mxu0 0
      %877 = vmatpush1.bf16.msra.mxu0 %v871
      %878 = vmatprep.subr.bf16.mxu0 0
      %879 = vmatpush1.bf16.msra.mxu0 0
      %880 = vmatprep.subr.bf16.mxu0 0
      %881 = vmatpush1.bf16.msra.mxu0 0
      %882 = vmatprep.subr.bf16.mxu0 0
      %883 = vmatpush1.bf16.msra.mxu0 0
      %884 = vmatprep.subr.bf16.mxu0 0
      %885 = vmatpush1.bf16.msra.mxu0 0
      %886 = vmatprep.subr.bf16.mxu0 0
      %887 = vmatpush1.bf16.msra.mxu0 0
      %888 = vmatprep.subr.bf16.mxu0 0
      %889 = vmatpush1.bf16.msra.mxu0 0
      %890 = vmatprep.subr.bf16.mxu0 0
      %891 = vmatpush1.bf16.msra.mxu0 0
      %892 = vmatprep.subr.bf16.mxu0 0
      %893 = vmatpush1.bf16.msra.mxu0 0
      %894 = vmatprep.subr.bf16.mxu0 0
      %895 = vmatpush1.bf16.msra.mxu0 0
      %896 = vmatprep.subr.bf16.mxu0 0
      %897 = vmatpush1.bf16.msra.mxu0 0
      %898 = vmatprep.subr.bf16.mxu0 0
      %899 = vmatpush1.bf16.msra.mxu0 0
      %900 = vmatprep.subr.bf16.mxu0 0
      %901 = vmatpush1.bf16.msra.mxu0 0
      %902 = vmatprep.subr.bf16.mxu0 0
      %903 = vmatpush1.bf16.msra.mxu0 0
      %904 = vmatprep.subr.bf16.mxu0 0
      %905 = vmatpush1.bf16.msra.mxu0 0
      %906 = vmatprep.subr.bf16.mxu0 0
      %907 = vmatpush1.bf16.msra.mxu0 0
      %908 = vmatprep.mubr.bf16.mxu0 0
      %909 = vmatmul.mubr.bf16.gmra.mrb[0].mxu0 %v874
      %v910 = vpop.f32.mrb[0].mxu0
      %v911 = vadd.f32 0.0, %v910
      %v912 = vpop.f32.mrb[0].mxu0
      %v913 = vpop.f32.mrb[0].mxu0
      %v914 = vadd.f32 0.0, %v913
      %v915 = vpop.f32.mrb[0].mxu0
      %916 = vdwg.mxu0
      %v919 = vunpack.c.l.b16 %v513
      %v920 = vunpack.c.l.b16 %v514
      %v921 = vpack.c.b16 %v920, %v919
      %v924 = vunpack.c.l.b16 %v481
      %v925 = vunpack.c.l.b16 %v482
      %v926 = vpack.c.b16 %v925, %v924
      %v929 = vsel %vm542, %v921, 0
      %931 = vmatprep.subr.bf16.mxu0 0
      %932 = vmatpush1.bf16.msra.mxu0 %v926
      %933 = vmatprep.subr.bf16.mxu0 0
      %934 = vmatpush1.bf16.msra.mxu0 0
      %935 = vmatprep.subr.bf16.mxu0 0
      %936 = vmatpush1.bf16.msra.mxu0 0
      %937 = vmatprep.subr.bf16.mxu0 0
      %938 = vmatpush1.bf16.msra.mxu0 0
      %939 = vmatprep.subr.bf16.mxu0 0
      %940 = vmatpush1.bf16.msra.mxu0 0
      %941 = vmatprep.subr.bf16.mxu0 0
      %942 = vmatpush1.bf16.msra.mxu0 0
      %943 = vmatprep.subr.bf16.mxu0 0
      %944 = vmatpush1.bf16.msra.mxu0 0
      %945 = vmatprep.subr.bf16.mxu0 0
      %946 = vmatpush1.bf16.msra.mxu0 0
      %947 = vmatprep.subr.bf16.mxu0 0
      %948 = vmatpush1.bf16.msra.mxu0 0
      %949 = vmatprep.subr.bf16.mxu0 0
      %950 = vmatpush1.bf16.msra.mxu0 0
      %951 = vmatprep.subr.bf16.mxu0 0
      %952 = vmatpush1.bf16.msra.mxu0 0
      %953 = vmatprep.subr.bf16.mxu0 0
      %954 = vmatpush1.bf16.msra.mxu0 0
      %955 = vmatprep.subr.bf16.mxu0 0
      %956 = vmatpush1.bf16.msra.mxu0 0
      %957 = vmatprep.subr.bf16.mxu0 0
      %958 = vmatpush1.bf16.msra.mxu0 0
      %959 = vmatprep.subr.bf16.mxu0 0
      %960 = vmatpush1.bf16.msra.mxu0 0
      %961 = vmatprep.subr.bf16.mxu0 0
      %962 = vmatpush1.bf16.msra.mxu0 0
      %963 = vmatprep.mubr.bf16.mxu0 0
      %964 = vmatmul.mubr.bf16.gmra.mrb[0].mxu0 %v929
      %v965 = vpop.f32.mrb[0].mxu0
      %v966 = vadd.f32 0.0, %v965
      %v967 = vpop.f32.mrb[0].mxu0
      %v968 = vpop.f32.mrb[0].mxu0
      %v969 = vadd.f32 0.0, %v968
      %v970 = vpop.f32.mrb[0].mxu0
      %971 = vdwg.mxu0
      %v974 = vunpack.c.l.b16 %v515
      %v975 = vunpack.c.l.b16 %v516
      %v976 = vpack.c.b16 %v975, %v974
      %v979 = vunpack.c.l.b16 %v483
      %v980 = vunpack.c.l.b16 %v484
      %v981 = vpack.c.b16 %v980, %v979
      %v984 = vsel %vm542, %v976, 0
      %986 = vmatprep.subr.bf16.mxu0 0
      %987 = vmatpush1.bf16.msra.mxu0 %v981
      %988 = vmatprep.subr.bf16.mxu0 0
      %989 = vmatpush1.bf16.msra.mxu0 0
      %990 = vmatprep.subr.bf16.mxu0 0
      %991 = vmatpush1.bf16.msra.mxu0 0
      %992 = vmatprep.subr.bf16.mxu0 0
      %993 = vmatpush1.bf16.msra.mxu0 0
      %994 = vmatprep.subr.bf16.mxu0 0
      %995 = vmatpush1.bf16.msra.mxu0 0
      %996 = vmatprep.subr.bf16.mxu0 0
      %997 = vmatpush1.bf16.msra.mxu0 0
      %998 = vmatprep.subr.bf16.mxu0 0
      %999 = vmatpush1.bf16.msra.mxu0 0
      %1000 = vmatprep.subr.bf16.mxu0 0
      %1001 = vmatpush1.bf16.msra.mxu0 0
      %1002 = vmatprep.subr.bf16.mxu0 0
      %1003 = vmatpush1.bf16.msra.mxu0 0
      %1004 = vmatprep.subr.bf16.mxu0 0
      %1005 = vmatpush1.bf16.msra.mxu0 0
      %1006 = vmatprep.subr.bf16.mxu0 0
      %1007 = vmatpush1.bf16.msra.mxu0 0
      %1008 = vmatprep.subr.bf16.mxu0 0
      %1009 = vmatpush1.bf16.msra.mxu0 0
      %1010 = vmatprep.subr.bf16.mxu0 0
      %1011 = vmatpush1.bf16.msra.mxu0 0
      %1012 = vmatprep.subr.bf16.mxu0 0
      %1013 = vmatpush1.bf16.msra.mxu0 0
      %1014 = vmatprep.subr.bf16.mxu0 0
      %1015 = vmatpush1.bf16.msra.mxu0 0
      %1016 = vmatprep.subr.bf16.mxu0 0
      %1017 = vmatpush1.bf16.msra.mxu0 0
      %1018 = vmatprep.mubr.bf16.mxu0 0
      %1019 = vmatmul.mubr.bf16.gmra.mrb[0].mxu0 %v984
      %v1020 = vpop.f32.mrb[0].mxu0
      %v1021 = vadd.f32 0.0, %v1020
      %v1022 = vpop.f32.mrb[0].mxu0
      %v1023 = vpop.f32.mrb[0].mxu0
      %v1024 = vadd.f32 0.0, %v1023
      %v1025 = vpop.f32.mrb[0].mxu0
      %1026 = vdwg.mxu0
      %v1029 = vunpack.c.l.b16 %v517
      %v1030 = vunpack.c.l.b16 %v518
      %v1031 = vpack.c.b16 %v1030, %v1029
      %v1034 = vunpack.c.l.b16 %v485
      %v1035 = vunpack.c.l.b16 %v486
      %v1036 = vpack.c.b16 %v1035, %v1034
      %v1039 = vsel %vm542, %v1031, 0
      %1041 = vmatprep.subr.bf16.mxu0 0
      %1042 = vmatpush1.bf16.msra.mxu0 %v1036
      %1043 = vmatprep.subr.bf16.mxu0 0
      %1044 = vmatpush1.bf16.msra.mxu0 0
      %1045 = vmatprep.subr.bf16.mxu0 0
      %1046 = vmatpush1.bf16.msra.mxu0 0
      %1047 = vmatprep.subr.bf16.mxu0 0
      %1048 = vmatpush1.bf16.msra.mxu0 0
      %1049 = vmatprep.subr.bf16.mxu0 0
      %1050 = vmatpush1.bf16.msra.mxu0 0
      %1051 = vmatprep.subr.bf16.mxu0 0
      %1052 = vmatpush1.bf16.msra.mxu0 0
      %1053 = vmatprep.subr.bf16.mxu0 0
      %1054 = vmatpush1.bf16.msra.mxu0 0
      %1055 = vmatprep.subr.bf16.mxu0 0
      %1056 = vmatpush1.bf16.msra.mxu0 0
      %1057 = vmatprep.subr.bf16.mxu0 0
      %1058 = vmatpush1.bf16.msra.mxu0 0
      %1059 = vmatprep.subr.bf16.mxu0 0
      %1060 = vmatpush1.bf16.msra.mxu0 0
      %1061 = vmatprep.subr.bf16.mxu0 0
      %1062 = vmatpush1.bf16.msra.mxu0 0
      %1063 = vmatprep.subr.bf16.mxu0 0
      %1064 = vmatpush1.bf16.msra.mxu0 0
      %1065 = vmatprep.subr.bf16.mxu0 0
      %1066 = vmatpush1.bf16.msra.mxu0 0
      %1067 = vmatprep.subr.bf16.mxu0 0
      %1068 = vmatpush1.bf16.msra.mxu0 0
      %1069 = vmatprep.subr.bf16.mxu0 0
      %1070 = vmatpush1.bf16.msra.mxu0 0
      %1071 = vmatprep.subr.bf16.mxu0 0
      %1072 = vmatpush1.bf16.msra.mxu0 0
      %1073 = vmatprep.mubr.bf16.mxu0 0
      %1074 = vmatmul.mubr.bf16.gmra.mrb[0].mxu0 %v1039
      %v1075 = vpop.f32.mrb[0].mxu0
      %v1076 = vadd.f32 0.0, %v1075
      %v1077 = vpop.f32.mrb[0].mxu0
      %v1078 = vpop.f32.mrb[0].mxu0
      %v1079 = vadd.f32 0.0, %v1078
      %v1080 = vpop.f32.mrb[0].mxu0
      %1081 = vdwg.mxu0
      %v1084 = vunpack.c.l.b16 %v519
      %v1085 = vunpack.c.l.b16 %v520
      %v1086 = vpack.c.b16 %v1085, %v1084
      %v1089 = vunpack.c.l.b16 %v487
      %v1090 = vunpack.c.l.b16 %v488
      %v1091 = vpack.c.b16 %v1090, %v1089
      %v1094 = vsel %vm542, %v1086, 0
      %1096 = vmatprep.subr.bf16.mxu0 0
      %1097 = vmatpush1.bf16.msra.mxu0 %v1091
      %1098 = vmatprep.subr.bf16.mxu0 0
      %1099 = vmatpush1.bf16.msra.mxu0 0
      %1100 = vmatprep.subr.bf16.mxu0 0
      %1101 = vmatpush1.bf16.msra.mxu0 0
      %1102 = vmatprep.subr.bf16.mxu0 0
      %1103 = vmatpush1.bf16.msra.mxu0 0
      %1104 = vmatprep.subr.bf16.mxu0 0
      %1105 = vmatpush1.bf16.msra.mxu0 0
      %1106 = vmatprep.subr.bf16.mxu0 0
      %1107 = vmatpush1.bf16.msra.mxu0 0
      %1108 = vmatprep.subr.bf16.mxu0 0
      %1109 = vmatpush1.bf16.msra.mxu0 0
      %1110 = vmatprep.subr.bf16.mxu0 0
      %1111 = vmatpush1.bf16.msra.mxu0 0
      %1112 = vmatprep.subr.bf16.mxu0 0
      %1113 = vmatpush1.bf16.msra.mxu0 0
      %1114 = vmatprep.subr.bf16.mxu0 0
      %1115 = vmatpush1.bf16.msra.mxu0 0
      %1116 = vmatprep.subr.bf16.mxu0 0
      %1117 = vmatpush1.bf16.msra.mxu0 0
      %1118 = vmatprep.subr.bf16.mxu0 0
      %1119 = vmatpush1.bf16.msra.mxu0 0
      %1120 = vmatprep.subr.bf16.mxu0 0
      %1121 = vmatpush1.bf16.msra.mxu0 0
      %1122 = vmatprep.subr.bf16.mxu0 0
      %1123 = vmatpush1.bf16.msra.mxu0 0
      %1124 = vmatprep.subr.bf16.mxu0 0
      %1125 = vmatpush1.bf16.msra.mxu0 0
      %1126 = vmatprep.subr.bf16.mxu0 0
      %1127 = vmatpush1.bf16.msra.mxu0 0
      %1128 = vmatprep.mubr.bf16.mxu0 0
      %1129 = vmatmul.mubr.bf16.gmra.mrb[0].mxu0 %v1094
      %v1130 = vpop.f32.mrb[0].mxu0
      %v1131 = vadd.f32 0.0, %v1130
      %v1132 = vpop.f32.mrb[0].mxu0
      %v1133 = vpop.f32.mrb[0].mxu0
      %v1134 = vadd.f32 0.0, %v1133
      %v1135 = vpop.f32.mrb[0].mxu0
      %1136 = vdwg.mxu0
      %v1139 = vunpack.c.l.b16 %v521
      %v1140 = vunpack.c.l.b16 %v522
      %v1141 = vpack.c.b16 %v1140, %v1139
      %v1144 = vunpack.c.l.b16 %v489
      %v1145 = vunpack.c.l.b16 %v490
      %v1146 = vpack.c.b16 %v1145, %v1144
      %v1149 = vsel %vm542, %v1141, 0
      %1151 = vmatprep.subr.bf16.mxu0 0
      %1152 = vmatpush1.bf16.msra.mxu0 %v1146
      %1153 = vmatprep.subr.bf16.mxu0 0
      %1154 = vmatpush1.bf16.msra.mxu0 0
      %1155 = vmatprep.subr.bf16.mxu0 0
      %1156 = vmatpush1.bf16.msra.mxu0 0
      %1157 = vmatprep.subr.bf16.mxu0 0
      %1158 = vmatpush1.bf16.msra.mxu0 0
      %1159 = vmatprep.subr.bf16.mxu0 0
      %1160 = vmatpush1.bf16.msra.mxu0 0
      %1161 = vmatprep.subr.bf16.mxu0 0
      %1162 = vmatpush1.bf16.msra.mxu0 0
      %1163 = vmatprep.subr.bf16.mxu0 0
      %1164 = vmatpush1.bf16.msra.mxu0 0
      %1165 = vmatprep.subr.bf16.mxu0 0
      %1166 = vmatpush1.bf16.msra.mxu0 0
      %1167 = vmatprep.subr.bf16.mxu0 0
      %1168 = vmatpush1.bf16.msra.mxu0 0
      %1169 = vmatprep.subr.bf16.mxu0 0
      %1170 = vmatpush1.bf16.msra.mxu0 0
      %1171 = vmatprep.subr.bf16.mxu0 0
      %1172 = vmatpush1.bf16.msra.mxu0 0
      %1173 = vmatprep.subr.bf16.mxu0 0
      %1174 = vmatpush1.bf16.msra.mxu0 0
      %1175 = vmatprep.subr.bf16.mxu0 0
      %1176 = vmatpush1.bf16.msra.mxu0 0
      %1177 = vmatprep.subr.bf16.mxu0 0
      %1178 = vmatpush1.bf16.msra.mxu0 0
      %1179 = vmatprep.subr.bf16.mxu0 0
      %1180 = vmatpush1.bf16.msra.mxu0 0
      %1181 = vmatprep.subr.bf16.mxu0 0
      %1182 = vmatpush1.bf16.msra.mxu0 0
      %1183 = vmatprep.mubr.bf16.mxu0 0
      %1184 = vmatmul.mubr.bf16.gmra.mrb[0].mxu0 %v1149
      %v1185 = vpop.f32.mrb[0].mxu0
      %v1186 = vadd.f32 0.0, %v1185
      %v1187 = vpop.f32.mrb[0].mxu0
      %v1188 = vpop.f32.mrb[0].mxu0
      %v1189 = vadd.f32 0.0, %v1188
      %v1190 = vpop.f32.mrb[0].mxu0
      %1191 = vdwg.mxu0
      %v1194 = vunpack.c.l.b16 %v523
      %v1195 = vunpack.c.l.b16 %v524
      %v1196 = vpack.c.b16 %v1195, %v1194
      %v1199 = vunpack.c.l.b16 %v491
      %v1200 = vunpack.c.l.b16 %v492
      %v1201 = vpack.c.b16 %v1200, %v1199
      %v1204 = vsel %vm542, %v1196, 0
      %1206 = vmatprep.subr.bf16.mxu0 0
      %1207 = vmatpush1.bf16.msra.mxu0 %v1201
      %1208 = vmatprep.subr.bf16.mxu0 0
      %1209 = vmatpush1.bf16.msra.mxu0 0
      %1210 = vmatprep.subr.bf16.mxu0 0
      %1211 = vmatpush1.bf16.msra.mxu0 0
      %1212 = vmatprep.subr.bf16.mxu0 0
      %1213 = vmatpush1.bf16.msra.mxu0 0
      %1214 = vmatprep.subr.bf16.mxu0 0
      %1215 = vmatpush1.bf16.msra.mxu0 0
      %1216 = vmatprep.subr.bf16.mxu0 0
      %1217 = vmatpush1.bf16.msra.mxu0 0
      %1218 = vmatprep.subr.bf16.mxu0 0
      %1219 = vmatpush1.bf16.msra.mxu0 0
      %1220 = vmatprep.subr.bf16.mxu0 0
      %1221 = vmatpush1.bf16.msra.mxu0 0
      %1222 = vmatprep.subr.bf16.mxu0 0
      %1223 = vmatpush1.bf16.msra.mxu0 0
      %1224 = vmatprep.subr.bf16.mxu0 0
      %1225 = vmatpush1.bf16.msra.mxu0 0
      %1226 = vmatprep.subr.bf16.mxu0 0
      %1227 = vmatpush1.bf16.msra.mxu0 0
      %1228 = vmatprep.subr.bf16.mxu0 0
      %1229 = vmatpush1.bf16.msra.mxu0 0
      %1230 = vmatprep.subr.bf16.mxu0 0
      %1231 = vmatpush1.bf16.msra.mxu0 0
      %1232 = vmatprep.subr.bf16.mxu0 0
      %1233 = vmatpush1.bf16.msra.mxu0 0
      %1234 = vmatprep.subr.bf16.mxu0 0
      %1235 = vmatpush1.bf16.msra.mxu0 0
      %1236 = vmatprep.subr.bf16.mxu0 0
      %1237 = vmatpush1.bf16.msra.mxu0 0
      %1238 = vmatprep.mubr.bf16.mxu0 0
      %1239 = vmatmul.mubr.bf16.gmra.mrb[0].mxu0 %v1204
      %v1240 = vpop.f32.mrb[0].mxu0
      %v1241 = vadd.f32 0.0, %v1240
      %v1242 = vpop.f32.mrb[0].mxu0
      %v1243 = vpop.f32.mrb[0].mxu0
      %v1244 = vadd.f32 0.0, %v1243
      %v1245 = vpop.f32.mrb[0].mxu0
      %1246 = vdwg.mxu0
      %v1249 = vunpack.c.l.b16 %v525
      %v1250 = vunpack.c.l.b16 %v526
      %v1251 = vpack.c.b16 %v1250, %v1249
      %v1254 = vunpack.c.l.b16 %v493
      %v1255 = vunpack.c.l.b16 %v494
      %v1256 = vpack.c.b16 %v1255, %v1254
      %v1259 = vsel %vm542, %v1251, 0
      %1261 = vmatprep.subr.bf16.mxu0 0
      %1262 = vmatpush1.bf16.msra.mxu0 %v1256
      %1263 = vmatprep.subr.bf16.mxu0 0
      %1264 = vmatpush1.bf16.msra.mxu0 0
      %1265 = vmatprep.subr.bf16.mxu0 0
      %1266 = vmatpush1.bf16.msra.mxu0 0
      %1267 = vmatprep.subr.bf16.mxu0 0
      %1268 = vmatpush1.bf16.msra.mxu0 0
      %1269 = vmatprep.subr.bf16.mxu0 0
      %1270 = vmatpush1.bf16.msra.mxu0 0
      %1271 = vmatprep.subr.bf16.mxu0 0
      %1272 = vmatpush1.bf16.msra.mxu0 0
      %1273 = vmatprep.subr.bf16.mxu0 0
      %1274 = vmatpush1.bf16.msra.mxu0 0
      %1275 = vmatprep.subr.bf16.mxu0 0
      %1276 = vmatpush1.bf16.msra.mxu0 0
      %1277 = vmatprep.subr.bf16.mxu0 0
      %1278 = vmatpush1.bf16.msra.mxu0 0
      %1279 = vmatprep.subr.bf16.mxu0 0
      %1280 = vmatpush1.bf16.msra.mxu0 0
      %1281 = vmatprep.subr.bf16.mxu0 0
      %1282 = vmatpush1.bf16.msra.mxu0 0
      %1283 = vmatprep.subr.bf16.mxu0 0
      %1284 = vmatpush1.bf16.msra.mxu0 0
      %1285 = vmatprep.subr.bf16.mxu0 0
      %1286 = vmatpush1.bf16.msra.mxu0 0
      %1287 = vmatprep.subr.bf16.mxu0 0
      %1288 = vmatpush1.bf16.msra.mxu0 0
      %1289 = vmatprep.subr.bf16.mxu0 0
      %1290 = vmatpush1.bf16.msra.mxu0 0
      %1291 = vmatprep.subr.bf16.mxu0 0
      %1292 = vmatpush1.bf16.msra.mxu0 0
      %1293 = vmatprep.mubr.bf16.mxu0 0
      %1294 = vmatmul.mubr.bf16.gmra.mrb[0].mxu0 %v1259
      %v1295 = vpop.f32.mrb[0].mxu0
      %v1296 = vadd.f32 0.0, %v1295
      %v1297 = vpop.f32.mrb[0].mxu0
      %v1298 = vpop.f32.mrb[0].mxu0
      %v1299 = vadd.f32 0.0, %v1298
      %v1300 = vpop.f32.mrb[0].mxu0
      %1301 = vdwg.mxu0
      %v1304 = vunpack.c.l.b16 %v527
      %v1305 = vunpack.c.l.b16 %v528
      %v1306 = vpack.c.b16 %v1305, %v1304
      %v1309 = vunpack.c.l.b16 %v495
      %v1310 = vunpack.c.l.b16 %v496
      %v1311 = vpack.c.b16 %v1310, %v1309
      %v1314 = vsel %vm542, %v1306, 0
      %1316 = vmatprep.subr.bf16.mxu0 0
      %1317 = vmatpush1.bf16.msra.mxu0 %v1311
      %1318 = vmatprep.subr.bf16.mxu0 0
      %1319 = vmatpush1.bf16.msra.mxu0 0
      %1320 = vmatprep.subr.bf16.mxu0 0
      %1321 = vmatpush1.bf16.msra.mxu0 0
      %1322 = vmatprep.subr.bf16.mxu0 0
      %1323 = vmatpush1.bf16.msra.mxu0 0
      %1324 = vmatprep.subr.bf16.mxu0 0
      %1325 = vmatpush1.bf16.msra.mxu0 0
      %1326 = vmatprep.subr.bf16.mxu0 0
      %1327 = vmatpush1.bf16.msra.mxu0 0
      %1328 = vmatprep.subr.bf16.mxu0 0
      %1329 = vmatpush1.bf16.msra.mxu0 0
      %1330 = vmatprep.subr.bf16.mxu0 0
      %1331 = vmatpush1.bf16.msra.mxu0 0
      %1332 = vmatprep.subr.bf16.mxu0 0
      %1333 = vmatpush1.bf16.msra.mxu0 0
      %1334 = vmatprep.subr.bf16.mxu0 0
      %1335 = vmatpush1.bf16.msra.mxu0 0
      %1336 = vmatprep.subr.bf16.mxu0 0
      %1337 = vmatpush1.bf16.msra.mxu0 0
      %1338 = vmatprep.subr.bf16.mxu0 0
      %1339 = vmatpush1.bf16.msra.mxu0 0
      %1340 = vmatprep.subr.bf16.mxu0 0
      %1341 = vmatpush1.bf16.msra.mxu0 0
      %1342 = vmatprep.subr.bf16.mxu0 0
      %1343 = vmatpush1.bf16.msra.mxu0 0
      %1344 = vmatprep.subr.bf16.mxu0 0
      %1345 = vmatpush1.bf16.msra.mxu0 0
      %1346 = vmatprep.subr.bf16.mxu0 0
      %1347 = vmatpush1.bf16.msra.mxu0 0
      %1348 = vmatprep.mubr.bf16.mxu0 0
      %1349 = vmatmul.mubr.bf16.gmra.mrb[0].mxu0 %v1314
      %v1350 = vpop.f32.mrb[0].mxu0
      %v1351 = vadd.f32 0.0, %v1350
      %v1352 = vpop.f32.mrb[0].mxu0
      %v1353 = vpop.f32.mrb[0].mxu0
      %v1354 = vadd.f32 0.0, %v1353
      %v1355 = vpop.f32.mrb[0].mxu0
      %1356 = vdwg.mxu0
      %v1359 = vunpack.c.l.b16 %v529
      %v1360 = vunpack.c.l.b16 %v530
      %v1361 = vpack.c.b16 %v1360, %v1359
      %v1364 = vunpack.c.l.b16 %v497
      %v1365 = vunpack.c.l.b16 %v498
      %v1366 = vpack.c.b16 %v1365, %v1364
      %v1369 = vsel %vm542, %v1361, 0
      %1371 = vmatprep.subr.bf16.mxu0 0
      %1372 = vmatpush1.bf16.msra.mxu0 %v1366
      %1373 = vmatprep.subr.bf16.mxu0 0
      %1374 = vmatpush1.bf16.msra.mxu0 0
      %1375 = vmatprep.subr.bf16.mxu0 0
      %1376 = vmatpush1.bf16.msra.mxu0 0
      %1377 = vmatprep.subr.bf16.mxu0 0
      %1378 = vmatpush1.bf16.msra.mxu0 0
      %1379 = vmatprep.subr.bf16.mxu0 0
      %1380 = vmatpush1.bf16.msra.mxu0 0
      %1381 = vmatprep.subr.bf16.mxu0 0
      %1382 = vmatpush1.bf16.msra.mxu0 0
      %1383 = vmatprep.subr.bf16.mxu0 0
      %1384 = vmatpush1.bf16.msra.mxu0 0
      %1385 = vmatprep.subr.bf16.mxu0 0
      %1386 = vmatpush1.bf16.msra.mxu0 0
      %1387 = vmatprep.subr.bf16.mxu0 0
      %1388 = vmatpush1.bf16.msra.mxu0 0
      %1389 = vmatprep.subr.bf16.mxu0 0
      %1390 = vmatpush1.bf16.msra.mxu0 0
      %1391 = vmatprep.subr.bf16.mxu0 0
      %1392 = vmatpush1.bf16.msra.mxu0 0
      %1393 = vmatprep.subr.bf16.mxu0 0
      %1394 = vmatpush1.bf16.msra.mxu0 0
      %1395 = vmatprep.subr.bf16.mxu0 0
      %1396 = vmatpush1.bf16.msra.mxu0 0
      %1397 = vmatprep.subr.bf16.mxu0 0
      %1398 = vmatpush1.bf16.msra.mxu0 0
      %1399 = vmatprep.subr.bf16.mxu0 0
      %1400 = vmatpush1.bf16.msra.mxu0 0
      %1401 = vmatprep.subr.bf16.mxu0 0
      %1402 = vmatpush1.bf16.msra.mxu0 0
      %1403 = vmatprep.mubr.bf16.mxu0 0
      %1404 = vmatmul.mubr.bf16.gmra.mrb[0].mxu0 %v1369
      %v1405 = vpop.f32.mrb[0].mxu0
      %v1406 = vadd.f32 0.0, %v1405
      %v1407 = vpop.f32.mrb[0].mxu0
      %v1408 = vpop.f32.mrb[0].mxu0
      %v1409 = vadd.f32 0.0, %v1408
      %v1410 = vpop.f32.mrb[0].mxu0
      %1411 = vdwg.mxu0
      %v1412 = vunpack.c.l.bf16 %v467
      %v1413 = vunpack.c.l.bf16 %v468
      %v1414 = vunpack.c.l.bf16 %v469
      %v1415 = vunpack.c.l.bf16 %v470
      %v1416 = vunpack.c.l.bf16 %v471
      %v1417 = vunpack.c.l.bf16 %v472
      %v1418 = vunpack.c.l.bf16 %v473
      %v1419 = vunpack.c.l.bf16 %v474
      %v1420 = vunpack.c.l.bf16 %v475
      %v1421 = vunpack.c.l.bf16 %v476
      %v1422 = vunpack.c.l.bf16 %v477
      %v1423 = vunpack.c.l.bf16 %v478
      %v1424 = vunpack.c.l.bf16 %v479
      %v1425 = vunpack.c.l.bf16 %v480
      %v1426 = vunpack.c.l.bf16 %v481
      %v1427 = vunpack.c.l.bf16 %v482
      %v1428 = vunpack.c.l.bf16 %v483
      %v1429 = vunpack.c.l.bf16 %v484
      %v1430 = vunpack.c.l.bf16 %v485
      %v1431 = vunpack.c.l.bf16 %v486
      %v1432 = vunpack.c.l.bf16 %v487
      %v1433 = vunpack.c.l.bf16 %v488
      %v1434 = vunpack.c.l.bf16 %v489
      %v1435 = vunpack.c.l.bf16 %v490
      %v1436 = vunpack.c.l.bf16 %v491
      %v1437 = vunpack.c.l.bf16 %v492
      %v1438 = vunpack.c.l.bf16 %v493
      %v1439 = vunpack.c.l.bf16 %v494
      %v1440 = vunpack.c.l.bf16 %v495
      %v1441 = vunpack.c.l.bf16 %v496
      %v1442 = vunpack.c.l.bf16 %v497
      %v1443 = vunpack.c.l.bf16 %v498
      %v1444 = vadd.f32 %v1412, %v581
      %v1445 = vadd.f32 %v1413, %v584
      %v1446 = vadd.f32 %v1414, %v636
      %v1447 = vadd.f32 %v1415, %v639
      %v1448 = vadd.f32 %v1416, %v691
      %v1449 = vadd.f32 %v1417, %v694
      %v1450 = vadd.f32 %v1418, %v746
      %v1451 = vadd.f32 %v1419, %v749
      %v1452 = vadd.f32 %v1420, %v801
      %v1453 = vadd.f32 %v1421, %v804
      %v1454 = vadd.f32 %v1422, %v856
      %v1455 = vadd.f32 %v1423, %v859
      %v1456 = vadd.f32 %v1424, %v911
      %v1457 = vadd.f32 %v1425, %v914
      %v1458 = vadd.f32 %v1426, %v966
      %v1459 = vadd.f32 %v1427, %v969
      %v1460 = vadd.f32 %v1428, %v1021
      %v1461 = vadd.f32 %v1429, %v1024
      %v1462 = vadd.f32 %v1430, %v1076
      %v1463 = vadd.f32 %v1431, %v1079
      %v1464 = vadd.f32 %v1432, %v1131
      %v1465 = vadd.f32 %v1433, %v1134
      %v1466 = vadd.f32 %v1434, %v1186
      %v1467 = vadd.f32 %v1435, %v1189
      %v1468 = vadd.f32 %v1436, %v1241
      %v1469 = vadd.f32 %v1437, %v1244
      %v1470 = vadd.f32 %v1438, %v1296
      %v1471 = vadd.f32 %v1439, %v1299
      %v1472 = vadd.f32 %v1440, %v1351
      %v1473 = vadd.f32 %v1441, %v1354
      %v1474 = vadd.f32 %v1442, %v1406
      %v1475 = vadd.f32 %v1443, %v1409
      %v1476 = vpack.c.bf16 %v1445, %v1444
      %v1477 = vpack.c.bf16 %v1447, %v1446
      %v1478 = vpack.c.bf16 %v1449, %v1448
      %v1479 = vpack.c.bf16 %v1451, %v1450
      %v1480 = vpack.c.bf16 %v1453, %v1452
      %v1481 = vpack.c.bf16 %v1455, %v1454
      %v1482 = vpack.c.bf16 %v1457, %v1456
      %v1483 = vpack.c.bf16 %v1459, %v1458
      %v1484 = vpack.c.bf16 %v1461, %v1460
      %v1485 = vpack.c.bf16 %v1463, %v1462
      %v1486 = vpack.c.bf16 %v1465, %v1464
      %v1487 = vpack.c.bf16 %v1467, %v1466
      %v1488 = vpack.c.bf16 %v1469, %v1468
      %v1489 = vpack.c.bf16 %v1471, %v1470
      %v1490 = vpack.c.bf16 %v1473, %v1472
      %v1491 = vpack.c.bf16 %v1475, %v1474
      %v1492 = vld [vmem:[%s2] sm:$0xf]
      %v1493 = vld [vmem:[%s2 + $0x4] sm:$0xf]
      %v1494 = vld [vmem:[%s2 + $0x8] sm:$0xf]
      %v1495 = vld [vmem:[%s2 + $0xc] sm:$0xf]
      %v1496 = vld [vmem:[%s2 + $0x10] sm:$0xf]
      %v1497 = vld [vmem:[%s2 + $0x14] sm:$0xf]
      %v1498 = vld [vmem:[%s2 + $0x18] sm:$0xf]
      %v1499 = vld [vmem:[%s2 + $0x1c] sm:$0xf]
      %v1500 = vld [vmem:[%s2 + $0x20] sm:$0xf]
      %v1501 = vld [vmem:[%s2 + $0x24] sm:$0xf]
      %v1502 = vld [vmem:[%s2 + $0x28] sm:$0xf]
      %v1503 = vld [vmem:[%s2 + $0x2c] sm:$0xf]
      %v1504 = vld [vmem:[%s2 + $0x30] sm:$0xf]
      %v1505 = vld [vmem:[%s2 + $0x34] sm:$0xf]
      %v1506 = vld [vmem:[%s2 + $0x38] sm:$0xf]
      %v1507 = vld [vmem:[%s2 + $0x3c] sm:$0xf]
      %v1508 = vld [vmem:[%s3] sm:$0x1]
      %v1510 = vlaneseq
      %v1511 = vshrl.u32 %v1510, 7
      %v1512 = vsub.s32 0, %v1511
      %v1513 = vrot.slane %v1508, %v1512
      %v1531 = vunpack.c.l.b16 %v1492
      %v1532 = vunpack.c.l.b16 %v1493
      %v1533 = vunpack.c.l.b16 %v1494
      %v1534 = vunpack.c.l.b16 %v1495
      %v1535 = vunpack.c.l.b16 %v1496
      %v1536 = vunpack.c.l.b16 %v1497
      %v1537 = vunpack.c.l.b16 %v1498
      %v1538 = vunpack.c.l.b16 %v1499
      %v1539 = vunpack.c.l.b16 %v1500
      %v1540 = vunpack.c.l.b16 %v1501
      %v1541 = vunpack.c.l.b16 %v1502
      %v1542 = vunpack.c.l.b16 %v1503
      %v1543 = vunpack.c.l.b16 %v1504
      %v1544 = vunpack.c.l.b16 %v1505
      %v1545 = vunpack.c.l.b16 %v1506
      %v1546 = vunpack.c.l.b16 %v1507
      %v1547 = vpack.c.b16 %v1532, %v1531
      %v1548 = vpack.c.b16 %v1534, %v1533
      %v1549 = vpack.c.b16 %v1536, %v1535
      %v1550 = vpack.c.b16 %v1538, %v1537
      %v1551 = vpack.c.b16 %v1540, %v1539
      %v1552 = vpack.c.b16 %v1542, %v1541
      %v1553 = vpack.c.b16 %v1544, %v1543
      %v1554 = vpack.c.b16 %v1546, %v1545
      %1563 = vmatprep.subr.bf16.mxu0 0
      %1564 = vmatpush1.bf16.msra.mxu0 %v1547
      %1565 = vmatprep.subr.bf16.mxu0 0
      %1566 = vmatpush1.bf16.msra.mxu0 %v1548
      %1567 = vmatprep.subr.bf16.mxu0 0
      %1568 = vmatpush1.bf16.msra.mxu0 %v1549
      %1569 = vmatprep.subr.bf16.mxu0 0
      %1570 = vmatpush1.bf16.msra.mxu0 %v1550
      %1571 = vmatprep.subr.bf16.mxu0 0
      %1572 = vmatpush1.bf16.msra.mxu0 %v1551
      %1573 = vmatprep.subr.bf16.mxu0 0
      %1574 = vmatpush1.bf16.msra.mxu0 %v1552
      %1575 = vmatprep.subr.bf16.mxu0 0
      %1576 = vmatpush1.bf16.msra.mxu0 %v1553
      %1577 = vmatprep.subr.bf16.mxu0 0
      %1578 = vmatpush1.bf16.msra.mxu0 %v1554
      %1579 = vmatprep.subr.bf16.mxu0 0
      %1580 = vmatpush1.bf16.msra.mxu0 0
      %1581 = vmatprep.subr.bf16.mxu0 0
      %1582 = vmatpush1.bf16.msra.mxu0 0
      %1583 = vmatprep.subr.bf16.mxu0 0
      %1584 = vmatpush1.bf16.msra.mxu0 0
      %1585 = vmatprep.subr.bf16.mxu0 0
      %1586 = vmatpush1.bf16.msra.mxu0 0
      %1587 = vmatprep.subr.bf16.mxu0 0
      %1588 = vmatpush1.bf16.msra.mxu0 0
      %1589 = vmatprep.subr.bf16.mxu0 0
      %1590 = vmatpush1.bf16.msra.mxu0 0
      %1591 = vmatprep.subr.bf16.mxu0 0
      %1592 = vmatpush1.bf16.msra.mxu0 0
      %1593 = vmatprep.subr.bf16.mxu0 0
      %1594 = vmatpush1.bf16.msra.mxu0 0
      %1595 = vmatprep.mubr.bf16.mxu0 0
      %1596 = vmatmul.mubr.bf16.gmra.mrb[0].mxu0 %v1476
      %v1597 = vpop.f32.mrb[0].mxu0
      %v1598 = vadd.f32 %v1513, %v1597
      %v1599 = vpop.f32.mrb[0].mxu0
      %v1600 = vpop.f32.mrb[0].mxu0
      %v1601 = vadd.f32 %v1513, %v1600
      %v1602 = vpop.f32.mrb[0].mxu0
      %1603 = vmatprep.mubr.bf16.mxu0 0
      %1604 = vmatmul.mubr.bf16.gmra.mrb[0].mxu0 %v1477
      %v1605 = vpop.f32.mrb[0].mxu0
      %v1606 = vadd.f32 %v1513, %v1605
      %v1607 = vpop.f32.mrb[0].mxu0
      %v1608 = vpop.f32.mrb[0].mxu0
      %v1609 = vadd.f32 %v1513, %v1608
      %v1610 = vpop.f32.mrb[0].mxu0
      %1611 = vmatprep.mubr.bf16.mxu0 0
      %1612 = vmatmul.mubr.bf16.gmra.mrb[0].mxu0 %v1478
      %v1613 = vpop.f32.mrb[0].mxu0
      %v1614 = vadd.f32 %v1513, %v1613
      %v1615 = vpop.f32.mrb[0].mxu0
      %v1616 = vpop.f32.mrb[0].mxu0
      %v1617 = vadd.f32 %v1513, %v1616
      %v1618 = vpop.f32.mrb[0].mxu0
      %1619 = vmatprep.mubr.bf16.mxu0 0
      %1620 = vmatmul.mubr.bf16.gmra.mrb[0].mxu0 %v1479
      %v1621 = vpop.f32.mrb[0].mxu0
      %v1622 = vadd.f32 %v1513, %v1621
      %v1623 = vpop.f32.mrb[0].mxu0
      %v1624 = vpop.f32.mrb[0].mxu0
      %v1625 = vadd.f32 %v1513, %v1624
      %v1626 = vpop.f32.mrb[0].mxu0
      %1627 = vmatprep.mubr.bf16.mxu0 0
      %1628 = vmatmul.mubr.bf16.gmra.mrb[0].mxu0 %v1480
      %v1629 = vpop.f32.mrb[0].mxu0
      %v1630 = vadd.f32 %v1513, %v1629
      %v1631 = vpop.f32.mrb[0].mxu0
      %v1632 = vpop.f32.mrb[0].mxu0
      %v1633 = vadd.f32 %v1513, %v1632
      %v1634 = vpop.f32.mrb[0].mxu0
      %1635 = vmatprep.mubr.bf16.mxu0 0
      %1636 = vmatmul.mubr.bf16.gmra.mrb[0].mxu0 %v1481
      %v1637 = vpop.f32.mrb[0].mxu0
      %v1638 = vadd.f32 %v1513, %v1637
      %v1639 = vpop.f32.mrb[0].mxu0
      %v1640 = vpop.f32.mrb[0].mxu0
      %v1641 = vadd.f32 %v1513, %v1640
      %v1642 = vpop.f32.mrb[0].mxu0
      %1643 = vmatprep.mubr.bf16.mxu0 0
      %1644 = vmatmul.mubr.bf16.gmra.mrb[0].mxu0 %v1482
      %v1645 = vpop.f32.mrb[0].mxu0
      %v1646 = vadd.f32 %v1513, %v1645
      %v1647 = vpop.f32.mrb[0].mxu0
      %v1648 = vpop.f32.mrb[0].mxu0
      %v1649 = vadd.f32 %v1513, %v1648
      %v1650 = vpop.f32.mrb[0].mxu0
      %1651 = vmatprep.mubr.bf16.mxu0 0
      %1652 = vmatmul.mubr.bf16.gmra.mrb[0].mxu0 %v1483
      %v1653 = vpop.f32.mrb[0].mxu0
      %v1654 = vadd.f32 %v1513, %v1653
      %v1655 = vpop.f32.mrb[0].mxu0
      %v1656 = vpop.f32.mrb[0].mxu0
      %v1657 = vadd.f32 %v1513, %v1656
      %v1658 = vpop.f32.mrb[0].mxu0
      %1659 = vmatprep.mubr.bf16.mxu0 0
      %1660 = vmatmul.mubr.bf16.gmra.mrb[0].mxu0 %v1484
      %v1661 = vpop.f32.mrb[0].mxu0
      %v1662 = vadd.f32 %v1513, %v1661
      %v1663 = vpop.f32.mrb[0].mxu0
      %v1664 = vpop.f32.mrb[0].mxu0
      %v1665 = vadd.f32 %v1513, %v1664
      %v1666 = vpop.f32.mrb[0].mxu0
      %1667 = vmatprep.mubr.bf16.mxu0 0
      %1668 = vmatmul.mubr.bf16.gmra.mrb[0].mxu0 %v1485
      %v1669 = vpop.f32.mrb[0].mxu0
      %v1670 = vadd.f32 %v1513, %v1669
      %v1671 = vpop.f32.mrb[0].mxu0
      %v1672 = vpop.f32.mrb[0].mxu0
      %v1673 = vadd.f32 %v1513, %v1672
      %v1674 = vpop.f32.mrb[0].mxu0
      %1675 = vmatprep.mubr.bf16.mxu0 0
      %1676 = vmatmul.mubr.bf16.gmra.mrb[0].mxu0 %v1486
      %v1677 = vpop.f32.mrb[0].mxu0
      %v1678 = vadd.f32 %v1513, %v1677
      %v1679 = vpop.f32.mrb[0].mxu0
      %v1680 = vpop.f32.mrb[0].mxu0
      %v1681 = vadd.f32 %v1513, %v1680
      %v1682 = vpop.f32.mrb[0].mxu0
      %1683 = vmatprep.mubr.bf16.mxu0 0
      %1684 = vmatmul.mubr.bf16.gmra.mrb[0].mxu0 %v1487
      %v1685 = vpop.f32.mrb[0].mxu0
      %v1686 = vadd.f32 %v1513, %v1685
      %v1687 = vpop.f32.mrb[0].mxu0
      %v1688 = vpop.f32.mrb[0].mxu0
      %v1689 = vadd.f32 %v1513, %v1688
      %v1690 = vpop.f32.mrb[0].mxu0
      %1691 = vmatprep.mubr.bf16.mxu0 0
      %1692 = vmatmul.mubr.bf16.gmra.mrb[0].mxu0 %v1488
      %v1693 = vpop.f32.mrb[0].mxu0
      %v1694 = vadd.f32 %v1513, %v1693
      %v1695 = vpop.f32.mrb[0].mxu0
      %v1696 = vpop.f32.mrb[0].mxu0
      %v1697 = vadd.f32 %v1513, %v1696
      %v1698 = vpop.f32.mrb[0].mxu0
      %1699 = vmatprep.mubr.bf16.mxu0 0
      %1700 = vmatmul.mubr.bf16.gmra.mrb[0].mxu0 %v1489
      %v1701 = vpop.f32.mrb[0].mxu0
      %v1702 = vadd.f32 %v1513, %v1701
      %v1703 = vpop.f32.mrb[0].mxu0
      %v1704 = vpop.f32.mrb[0].mxu0
      %v1705 = vadd.f32 %v1513, %v1704
      %v1706 = vpop.f32.mrb[0].mxu0
      %1707 = vmatprep.mubr.bf16.mxu0 0
      %1708 = vmatmul.mubr.bf16.gmra.mrb[0].mxu0 %v1490
      %v1709 = vpop.f32.mrb[0].mxu0
      %v1710 = vadd.f32 %v1513, %v1709
      %v1711 = vpop.f32.mrb[0].mxu0
      %v1712 = vpop.f32.mrb[0].mxu0
      %v1713 = vadd.f32 %v1513, %v1712
      %v1714 = vpop.f32.mrb[0].mxu0
      %1715 = vmatprep.mubr.bf16.mxu0 0
      %1716 = vmatmul.mubr.bf16.gmra.mrb[0].mxu0 %v1491
      %v1717 = vpop.f32.mrb[0].mxu0
      %v1718 = vadd.f32 %v1513, %v1717
      %v1719 = vpop.f32.mrb[0].mxu0
      %v1720 = vpop.f32.mrb[0].mxu0
      %v1721 = vadd.f32 %v1513, %v1720
      %v1722 = vpop.f32.mrb[0].mxu0
      %1723 = vdwg.mxu0
      %v1724 = vmax.f32 %v1598, 0.0
      %v1725 = vmax.f32 %v1601, 0.0
      %v1726 = vmax.f32 %v1606, 0.0
      %v1727 = vmax.f32 %v1609, 0.0
      %v1728 = vmax.f32 %v1614, 0.0
      %v1729 = vmax.f32 %v1617, 0.0
      %v1730 = vmax.f32 %v1622, 0.0
      %v1731 = vmax.f32 %v1625, 0.0
      %v1732 = vmax.f32 %v1630, 0.0
      %v1733 = vmax.f32 %v1633, 0.0
      %v1734 = vmax.f32 %v1638, 0.0
      %v1735 = vmax.f32 %v1641, 0.0
      %v1736 = vmax.f32 %v1646, 0.0
      %v1737 = vmax.f32 %v1649, 0.0
      %v1738 = vmax.f32 %v1654, 0.0
      %v1739 = vmax.f32 %v1657, 0.0
      %v1740 = vmax.f32 %v1662, 0.0
      %v1741 = vmax.f32 %v1665, 0.0
      %v1742 = vmax.f32 %v1670, 0.0
      %v1743 = vmax.f32 %v1673, 0.0
      %v1744 = vmax.f32 %v1678, 0.0
      %v1745 = vmax.f32 %v1681, 0.0
      %v1746 = vmax.f32 %v1686, 0.0
      %v1747 = vmax.f32 %v1689, 0.0
      %v1748 = vmax.f32 %v1694, 0.0
      %v1749 = vmax.f32 %v1697, 0.0
      %v1750 = vmax.f32 %v1702, 0.0
      %v1751 = vmax.f32 %v1705, 0.0
      %v1752 = vmax.f32 %v1710, 0.0
      %v1753 = vmax.f32 %v1713, 0.0
      %v1754 = vmax.f32 %v1718, 0.0
      %v1755 = vmax.f32 %v1721, 0.0
      %v1756 = vpack.c.bf16 %v1725, %v1724
      %v1757 = vpack.c.bf16 %v1727, %v1726
      %v1758 = vpack.c.bf16 %v1729, %v1728
      %v1759 = vpack.c.bf16 %v1731, %v1730
      %v1760 = vpack.c.bf16 %v1733, %v1732
      %v1761 = vpack.c.bf16 %v1735, %v1734
      %v1762 = vpack.c.bf16 %v1737, %v1736
      %v1763 = vpack.c.bf16 %v1739, %v1738
      %v1764 = vpack.c.bf16 %v1741, %v1740
      %v1765 = vpack.c.bf16 %v1743, %v1742
      %v1766 = vpack.c.bf16 %v1745, %v1744
      %v1767 = vpack.c.bf16 %v1747, %v1746
      %v1768 = vpack.c.bf16 %v1749, %v1748
      %v1769 = vpack.c.bf16 %v1751, %v1750
      %v1770 = vpack.c.bf16 %v1753, %v1752
      %v1771 = vpack.c.bf16 %v1755, %v1754
      %v1772 = vld [vmem:[%s4] sm:$0xf]
      %v1773 = vld [vmem:[%s4 + $0x4] sm:$0xf]
      %v1774 = vld [vmem:[%s4 + $0x8] sm:$0xf]
      %v1775 = vld [vmem:[%s4 + $0xc] sm:$0xf]
      %v1776 = vld [vmem:[%s4 + $0x10] sm:$0xf]
      %v1777 = vld [vmem:[%s4 + $0x14] sm:$0xf]
      %v1778 = vld [vmem:[%s4 + $0x18] sm:$0xf]
      %v1779 = vld [vmem:[%s4 + $0x1c] sm:$0xf]
      %v1780 = vld [vmem:[%s4 + $0x20] sm:$0xf]
      %v1781 = vld [vmem:[%s4 + $0x24] sm:$0xf]
      %v1782 = vld [vmem:[%s4 + $0x28] sm:$0xf]
      %v1783 = vld [vmem:[%s4 + $0x2c] sm:$0xf]
      %v1784 = vld [vmem:[%s4 + $0x30] sm:$0xf]
      %v1785 = vld [vmem:[%s4 + $0x34] sm:$0xf]
      %v1786 = vld [vmem:[%s4 + $0x38] sm:$0xf]
      %v1787 = vld [vmem:[%s4 + $0x3c] sm:$0xf]
      %v1788 = vld [vmem:[%s5] sm:$0x1]
      %v1790 = vlaneseq
      %v1791 = vshrl.u32 %v1790, 7
      %v1792 = vsub.s32 0, %v1791
      %v1793 = vrot.slane %v1788, %v1792
      %v1811 = vunpack.c.l.b16 %v1772
      %v1812 = vunpack.c.l.b16 %v1773
      %v1813 = vunpack.c.l.b16 %v1774
      %v1814 = vunpack.c.l.b16 %v1775
      %v1815 = vunpack.c.l.b16 %v1776
      %v1816 = vunpack.c.l.b16 %v1777
      %v1817 = vunpack.c.l.b16 %v1778
      %v1818 = vunpack.c.l.b16 %v1779
      %v1819 = vunpack.c.l.b16 %v1780
      %v1820 = vunpack.c.l.b16 %v1781
      %v1821 = vunpack.c.l.b16 %v1782
      %v1822 = vunpack.c.l.b16 %v1783
      %v1823 = vunpack.c.l.b16 %v1784
      %v1824 = vunpack.c.l.b16 %v1785
      %v1825 = vunpack.c.l.b16 %v1786
      %v1826 = vunpack.c.l.b16 %v1787
      %v1827 = vpack.c.b16 %v1812, %v1811
      %v1828 = vpack.c.b16 %v1814, %v1813
      %v1829 = vpack.c.b16 %v1816, %v1815
      %v1830 = vpack.c.b16 %v1818, %v1817
      %v1831 = vpack.c.b16 %v1820, %v1819
      %v1832 = vpack.c.b16 %v1822, %v1821
      %v1833 = vpack.c.b16 %v1824, %v1823
      %v1834 = vpack.c.b16 %v1826, %v1825
      %1843 = vmatprep.subr.bf16.mxu0 0
      %1844 = vmatpush1.bf16.msra.mxu0 %v1827
      %1845 = vmatprep.subr.bf16.mxu0 0
      %1846 = vmatpush1.bf16.msra.mxu0 %v1828
      %1847 = vmatprep.subr.bf16.mxu0 0
      %1848 = vmatpush1.bf16.msra.mxu0 %v1829
      %1849 = vmatprep.subr.bf16.mxu0 0
      %1850 = vmatpush1.bf16.msra.mxu0 %v1830
      %1851 = vmatprep.subr.bf16.mxu0 0
      %1852 = vmatpush1.bf16.msra.mxu0 %v1831
      %1853 = vmatprep.subr.bf16.mxu0 0
      %1854 = vmatpush1.bf16.msra.mxu0 %v1832
      %1855 = vmatprep.subr.bf16.mxu0 0
      %1856 = vmatpush1.bf16.msra.mxu0 %v1833
      %1857 = vmatprep.subr.bf16.mxu0 0
      %1858 = vmatpush1.bf16.msra.mxu0 %v1834
      %1859 = vmatprep.subr.bf16.mxu0 0
      %1860 = vmatpush1.bf16.msra.mxu0 0
      %1861 = vmatprep.subr.bf16.mxu0 0
      %1862 = vmatpush1.bf16.msra.mxu0 0
      %1863 = vmatprep.subr.bf16.mxu0 0
      %1864 = vmatpush1.bf16.msra.mxu0 0
      %1865 = vmatprep.subr.bf16.mxu0 0
      %1866 = vmatpush1.bf16.msra.mxu0 0
      %1867 = vmatprep.subr.bf16.mxu0 0
      %1868 = vmatpush1.bf16.msra.mxu0 0
      %1869 = vmatprep.subr.bf16.mxu0 0
      %1870 = vmatpush1.bf16.msra.mxu0 0
      %1871 = vmatprep.subr.bf16.mxu0 0
      %1872 = vmatpush1.bf16.msra.mxu0 0
      %1873 = vmatprep.subr.bf16.mxu0 0
      %1874 = vmatpush1.bf16.msra.mxu0 0
      %1875 = vmatprep.mubr.bf16.mxu0 0
      %1876 = vmatmul.mubr.bf16.gmra.mrb[0].mxu0 %v1756
      %v1877 = vpop.f32.mrb[0].mxu0
      %v1878 = vadd.f32 %v1793, %v1877
      %v1879 = vpop.f32.mrb[0].mxu0
      %v1880 = vpop.f32.mrb[0].mxu0
      %v1881 = vadd.f32 %v1793, %v1880
      %v1882 = vpop.f32.mrb[0].mxu0
      %1883 = vmatprep.mubr.bf16.mxu0 0
      %1884 = vmatmul.mubr.bf16.gmra.mrb[0].mxu0 %v1757
      %v1885 = vpop.f32.mrb[0].mxu0
      %v1886 = vadd.f32 %v1793, %v1885
      %v1887 = vpop.f32.mrb[0].mxu0
      %v1888 = vpop.f32.mrb[0].mxu0
      %v1889 = vadd.f32 %v1793, %v1888
      %v1890 = vpop.f32.mrb[0].mxu0
      %1891 = vmatprep.mubr.bf16.mxu0 0
      %1892 = vmatmul.mubr.bf16.gmra.mrb[0].mxu0 %v1758
      %v1893 = vpop.f32.mrb[0].mxu0
      %v1894 = vadd.f32 %v1793, %v1893
      %v1895 = vpop.f32.mrb[0].mxu0
      %v1896 = vpop.f32.mrb[0].mxu0
      %v1897 = vadd.f32 %v1793, %v1896
      %v1898 = vpop.f32.mrb[0].mxu0
      %1899 = vmatprep.mubr.bf16.mxu0 0
      %1900 = vmatmul.mubr.bf16.gmra.mrb[0].mxu0 %v1759
      %v1901 = vpop.f32.mrb[0].mxu0
      %v1902 = vadd.f32 %v1793, %v1901
      %v1903 = vpop.f32.mrb[0].mxu0
      %v1904 = vpop.f32.mrb[0].mxu0
      %v1905 = vadd.f32 %v1793, %v1904
      %v1906 = vpop.f32.mrb[0].mxu0
      %1907 = vmatprep.mubr.bf16.mxu0 0
      %1908 = vmatmul.mubr.bf16.gmra.mrb[0].mxu0 %v1760
      %v1909 = vpop.f32.mrb[0].mxu0
      %v1910 = vadd.f32 %v1793, %v1909
      %v1911 = vpop.f32.mrb[0].mxu0
      %v1912 = vpop.f32.mrb[0].mxu0
      %v1913 = vadd.f32 %v1793, %v1912
      %v1914 = vpop.f32.mrb[0].mxu0
      %1915 = vmatprep.mubr.bf16.mxu0 0
      %1916 = vmatmul.mubr.bf16.gmra.mrb[0].mxu0 %v1761
      %v1917 = vpop.f32.mrb[0].mxu0
      %v1918 = vadd.f32 %v1793, %v1917
      %v1919 = vpop.f32.mrb[0].mxu0
      %v1920 = vpop.f32.mrb[0].mxu0
      %v1921 = vadd.f32 %v1793, %v1920
      %v1922 = vpop.f32.mrb[0].mxu0
      %1923 = vmatprep.mubr.bf16.mxu0 0
      %1924 = vmatmul.mubr.bf16.gmra.mrb[0].mxu0 %v1762
      %v1925 = vpop.f32.mrb[0].mxu0
      %v1926 = vadd.f32 %v1793, %v1925
      %v1927 = vpop.f32.mrb[0].mxu0
      %v1928 = vpop.f32.mrb[0].mxu0
      %v1929 = vadd.f32 %v1793, %v1928
      %v1930 = vpop.f32.mrb[0].mxu0
      %1931 = vmatprep.mubr.bf16.mxu0 0
      %1932 = vmatmul.mubr.bf16.gmra.mrb[0].mxu0 %v1763
      %v1933 = vpop.f32.mrb[0].mxu0
      %v1934 = vadd.f32 %v1793, %v1933
      %v1935 = vpop.f32.mrb[0].mxu0
      %v1936 = vpop.f32.mrb[0].mxu0
      %v1937 = vadd.f32 %v1793, %v1936
      %v1938 = vpop.f32.mrb[0].mxu0
      %1939 = vmatprep.mubr.bf16.mxu0 0
      %1940 = vmatmul.mubr.bf16.gmra.mrb[0].mxu0 %v1764
      %v1941 = vpop.f32.mrb[0].mxu0
      %v1942 = vadd.f32 %v1793, %v1941
      %v1943 = vpop.f32.mrb[0].mxu0
      %v1944 = vpop.f32.mrb[0].mxu0
      %v1945 = vadd.f32 %v1793, %v1944
      %v1946 = vpop.f32.mrb[0].mxu0
      %1947 = vmatprep.mubr.bf16.mxu0 0
      %1948 = vmatmul.mubr.bf16.gmra.mrb[0].mxu0 %v1765
      %v1949 = vpop.f32.mrb[0].mxu0
      %v1950 = vadd.f32 %v1793, %v1949
      %v1951 = vpop.f32.mrb[0].mxu0
      %v1952 = vpop.f32.mrb[0].mxu0
      %v1953 = vadd.f32 %v1793, %v1952
      %v1954 = vpop.f32.mrb[0].mxu0
      %1955 = vmatprep.mubr.bf16.mxu0 0
      %1956 = vmatmul.mubr.bf16.gmra.mrb[0].mxu0 %v1766
      %v1957 = vpop.f32.mrb[0].mxu0
      %v1958 = vadd.f32 %v1793, %v1957
      %v1959 = vpop.f32.mrb[0].mxu0
      %v1960 = vpop.f32.mrb[0].mxu0
      %v1961 = vadd.f32 %v1793, %v1960
      %v1962 = vpop.f32.mrb[0].mxu0
      %1963 = vmatprep.mubr.bf16.mxu0 0
      %1964 = vmatmul.mubr.bf16.gmra.mrb[0].mxu0 %v1767
      %v1965 = vpop.f32.mrb[0].mxu0
      %v1966 = vadd.f32 %v1793, %v1965
      %v1967 = vpop.f32.mrb[0].mxu0
      %v1968 = vpop.f32.mrb[0].mxu0
      %v1969 = vadd.f32 %v1793, %v1968
      %v1970 = vpop.f32.mrb[0].mxu0
      %1971 = vmatprep.mubr.bf16.mxu0 0
      %1972 = vmatmul.mubr.bf16.gmra.mrb[0].mxu0 %v1768
      %v1973 = vpop.f32.mrb[0].mxu0
      %v1974 = vadd.f32 %v1793, %v1973
      %v1975 = vpop.f32.mrb[0].mxu0
      %v1976 = vpop.f32.mrb[0].mxu0
      %v1977 = vadd.f32 %v1793, %v1976
      %v1978 = vpop.f32.mrb[0].mxu0
      %1979 = vmatprep.mubr.bf16.mxu0 0
      %1980 = vmatmul.mubr.bf16.gmra.mrb[0].mxu0 %v1769
      %v1981 = vpop.f32.mrb[0].mxu0
      %v1982 = vadd.f32 %v1793, %v1981
      %v1983 = vpop.f32.mrb[0].mxu0
      %v1984 = vpop.f32.mrb[0].mxu0
      %v1985 = vadd.f32 %v1793, %v1984
      %v1986 = vpop.f32.mrb[0].mxu0
      %1987 = vmatprep.mubr.bf16.mxu0 0
      %1988 = vmatmul.mubr.bf16.gmra.mrb[0].mxu0 %v1770
      %v1989 = vpop.f32.mrb[0].mxu0
      %v1990 = vadd.f32 %v1793, %v1989
      %v1991 = vpop.f32.mrb[0].mxu0
      %v1992 = vpop.f32.mrb[0].mxu0
      %v1993 = vadd.f32 %v1793, %v1992
      %v1994 = vpop.f32.mrb[0].mxu0
      %1995 = vmatprep.mubr.bf16.mxu0 0
      %1996 = vmatmul.mubr.bf16.gmra.mrb[0].mxu0 %v1771
      %v1997 = vpop.f32.mrb[0].mxu0
      %v1998 = vadd.f32 %v1793, %v1997
      %v1999 = vpop.f32.mrb[0].mxu0
      %v2000 = vpop.f32.mrb[0].mxu0
      %v2001 = vadd.f32 %v1793, %v2000
      %v2002 = vpop.f32.mrb[0].mxu0
      %2003 = vdwg.mxu0
      %v2004 = vmax.f32 %v1878, 0.0
      %v2005 = vmax.f32 %v1881, 0.0
      %v2006 = vmax.f32 %v1886, 0.0
      %v2007 = vmax.f32 %v1889, 0.0
      %v2008 = vmax.f32 %v1894, 0.0
      %v2009 = vmax.f32 %v1897, 0.0
      %v2010 = vmax.f32 %v1902, 0.0
      %v2011 = vmax.f32 %v1905, 0.0
      %v2012 = vmax.f32 %v1910, 0.0
      %v2013 = vmax.f32 %v1913, 0.0
      %v2014 = vmax.f32 %v1918, 0.0
      %v2015 = vmax.f32 %v1921, 0.0
      %v2016 = vmax.f32 %v1926, 0.0
      %v2017 = vmax.f32 %v1929, 0.0
      %v2018 = vmax.f32 %v1934, 0.0
      %v2019 = vmax.f32 %v1937, 0.0
      %v2020 = vmax.f32 %v1942, 0.0
      %v2021 = vmax.f32 %v1945, 0.0
      %v2022 = vmax.f32 %v1950, 0.0
      %v2023 = vmax.f32 %v1953, 0.0
      %v2024 = vmax.f32 %v1958, 0.0
      %v2025 = vmax.f32 %v1961, 0.0
      %v2026 = vmax.f32 %v1966, 0.0
      %v2027 = vmax.f32 %v1969, 0.0
      %v2028 = vmax.f32 %v1974, 0.0
      %v2029 = vmax.f32 %v1977, 0.0
      %v2030 = vmax.f32 %v1982, 0.0
      %v2031 = vmax.f32 %v1985, 0.0
      %v2032 = vmax.f32 %v1990, 0.0
      %v2033 = vmax.f32 %v1993, 0.0
      %v2034 = vmax.f32 %v1998, 0.0
      %v2035 = vmax.f32 %v2001, 0.0
      %v2036 = vpack.c.bf16 %v2005, %v2004
      %v2037 = vpack.c.bf16 %v2007, %v2006
      %v2038 = vpack.c.bf16 %v2009, %v2008
      %v2039 = vpack.c.bf16 %v2011, %v2010
      %v2040 = vpack.c.bf16 %v2013, %v2012
      %v2041 = vpack.c.bf16 %v2015, %v2014
      %v2042 = vpack.c.bf16 %v2017, %v2016
      %v2043 = vpack.c.bf16 %v2019, %v2018
      %v2044 = vpack.c.bf16 %v2021, %v2020
      %v2045 = vpack.c.bf16 %v2023, %v2022
      %v2046 = vpack.c.bf16 %v2025, %v2024
      %v2047 = vpack.c.bf16 %v2027, %v2026
      %v2048 = vpack.c.bf16 %v2029, %v2028
      %v2049 = vpack.c.bf16 %v2031, %v2030
      %v2050 = vpack.c.bf16 %v2033, %v2032
      %v2051 = vpack.c.bf16 %v2035, %v2034
      %2052 = vmatprep.subr.bf16.mxu0 0
      %2053 = vmatpush1.bf16.msra.mxu0 %v2036
      %2054 = vmatprep.subr.bf16.mxu0 0
      %2055 = vmatpush1.bf16.msra.mxu0 0
      %2056 = vmatprep.subr.bf16.mxu0 0
      %2057 = vmatpush1.bf16.msra.mxu0 0
      %2058 = vmatprep.subr.bf16.mxu0 0
      %2059 = vmatpush1.bf16.msra.mxu0 0
      %2060 = vmatprep.subr.bf16.mxu0 0
      %2061 = vmatpush1.bf16.msra.mxu0 0
      %2062 = vmatprep.subr.bf16.mxu0 0
      %2063 = vmatpush1.bf16.msra.mxu0 0
      %2064 = vmatprep.subr.bf16.mxu0 0
      %2065 = vmatpush1.bf16.msra.mxu0 0
      %2066 = vmatprep.subr.bf16.mxu0 0
      %2067 = vmatpush1.bf16.msra.mxu0 0
      %2068 = vmatprep.subr.bf16.mxu0 0
      %2069 = vmatpush1.bf16.msra.mxu0 0
      %2070 = vmatprep.subr.bf16.mxu0 0
      %2071 = vmatpush1.bf16.msra.mxu0 0
      %2072 = vmatprep.subr.bf16.mxu0 0
      %2073 = vmatpush1.bf16.msra.mxu0 0
      %2074 = vmatprep.subr.bf16.mxu0 0
      %2075 = vmatpush1.bf16.msra.mxu0 0
      %2076 = vmatprep.subr.bf16.mxu0 0
      %2077 = vmatpush1.bf16.msra.mxu0 0
      %2078 = vmatprep.subr.bf16.mxu0 0
      %2079 = vmatpush1.bf16.msra.mxu0 0
      %2080 = vmatprep.subr.bf16.mxu0 0
      %2081 = vmatpush1.bf16.msra.mxu0 0
      %2082 = vmatprep.subr.bf16.mxu0 0
      %2083 = vmatpush1.bf16.msra.mxu0 0
      %2084 = vmatprep.mubr.bf16.mxu0 0
      %2085 = vmatmul.mubr.bf16.gmra.mrb[0].mxu0 %v544
      %v2086 = vpop.f32.mrb[0].mxu0
      %v2087 = vadd.f32 0.0, %v2086
      %v2088 = vpop.f32.mrb[0].mxu0
      %v2089 = vpop.f32.mrb[0].mxu0
      %v2090 = vadd.f32 0.0, %v2089
      %v2091 = vpop.f32.mrb[0].mxu0
      %2092 = vdwg.mxu0
      %2093 = vmatprep.subr.bf16.mxu0 0
      %2094 = vmatpush1.bf16.msra.mxu0 %v2037
      %2095 = vmatprep.subr.bf16.mxu0 0
      %2096 = vmatpush1.bf16.msra.mxu0 0
      %2097 = vmatprep.subr.bf16.mxu0 0
      %2098 = vmatpush1.bf16.msra.mxu0 0
      %2099 = vmatprep.subr.bf16.mxu0 0
      %2100 = vmatpush1.bf16.msra.mxu0 0
      %2101 = vmatprep.subr.bf16.mxu0 0
      %2102 = vmatpush1.bf16.msra.mxu0 0
      %2103 = vmatprep.subr.bf16.mxu0 0
      %2104 = vmatpush1.bf16.msra.mxu0 0
      %2105 = vmatprep.subr.bf16.mxu0 0
      %2106 = vmatpush1.bf16.msra.mxu0 0
      %2107 = vmatprep.subr.bf16.mxu0 0
      %2108 = vmatpush1.bf16.msra.mxu0 0
      %2109 = vmatprep.subr.bf16.mxu0 0
      %2110 = vmatpush1.bf16.msra.mxu0 0
      %2111 = vmatprep.subr.bf16.mxu0 0
      %2112 = vmatpush1.bf16.msra.mxu0 0
      %2113 = vmatprep.subr.bf16.mxu0 0
      %2114 = vmatpush1.bf16.msra.mxu0 0
      %2115 = vmatprep.subr.bf16.mxu0 0
      %2116 = vmatpush1.bf16.msra.mxu0 0
      %2117 = vmatprep.subr.bf16.mxu0 0
      %2118 = vmatpush1.bf16.msra.mxu0 0
      %2119 = vmatprep.subr.bf16.mxu0 0
      %2120 = vmatpush1.bf16.msra.mxu0 0
      %2121 = vmatprep.subr.bf16.mxu0 0
      %2122 = vmatpush1.bf16.msra.mxu0 0
      %2123 = vmatprep.subr.bf16.mxu0 0
      %2124 = vmatpush1.bf16.msra.mxu0 0
      %2125 = vmatprep.mubr.bf16.mxu0 0
      %2126 = vmatmul.mubr.bf16.gmra.mrb[0].mxu0 %v599
      %v2127 = vpop.f32.mrb[0].mxu0
      %v2128 = vadd.f32 0.0, %v2127
      %v2129 = vpop.f32.mrb[0].mxu0
      %v2130 = vpop.f32.mrb[0].mxu0
      %v2131 = vadd.f32 0.0, %v2130
      %v2132 = vpop.f32.mrb[0].mxu0
      %2133 = vdwg.mxu0
      %2134 = vmatprep.subr.bf16.mxu0 0
      %2135 = vmatpush1.bf16.msra.mxu0 %v2038
      %2136 = vmatprep.subr.bf16.mxu0 0
      %2137 = vmatpush1.bf16.msra.mxu0 0
      %2138 = vmatprep.subr.bf16.mxu0 0
      %2139 = vmatpush1.bf16.msra.mxu0 0
      %2140 = vmatprep.subr.bf16.mxu0 0
      %2141 = vmatpush1.bf16.msra.mxu0 0
      %2142 = vmatprep.subr.bf16.mxu0 0
      %2143 = vmatpush1.bf16.msra.mxu0 0
      %2144 = vmatprep.subr.bf16.mxu0 0
      %2145 = vmatpush1.bf16.msra.mxu0 0
      %2146 = vmatprep.subr.bf16.mxu0 0
      %2147 = vmatpush1.bf16.msra.mxu0 0
      %2148 = vmatprep.subr.bf16.mxu0 0
      %2149 = vmatpush1.bf16.msra.mxu0 0
      %2150 = vmatprep.subr.bf16.mxu0 0
      %2151 = vmatpush1.bf16.msra.mxu0 0
      %2152 = vmatprep.subr.bf16.mxu0 0
      %2153 = vmatpush1.bf16.msra.mxu0 0
      %2154 = vmatprep.subr.bf16.mxu0 0
      %2155 = vmatpush1.bf16.msra.mxu0 0
      %2156 = vmatprep.subr.bf16.mxu0 0
      %2157 = vmatpush1.bf16.msra.mxu0 0
      %2158 = vmatprep.subr.bf16.mxu0 0
      %2159 = vmatpush1.bf16.msra.mxu0 0
      %2160 = vmatprep.subr.bf16.mxu0 0
      %2161 = vmatpush1.bf16.msra.mxu0 0
      %2162 = vmatprep.subr.bf16.mxu0 0
      %2163 = vmatpush1.bf16.msra.mxu0 0
      %2164 = vmatprep.subr.bf16.mxu0 0
      %2165 = vmatpush1.bf16.msra.mxu0 0
      %2166 = vmatprep.mubr.bf16.mxu0 0
      %2167 = vmatmul.mubr.bf16.gmra.mrb[0].mxu0 %v654
      %v2168 = vpop.f32.mrb[0].mxu0
      %v2169 = vadd.f32 0.0, %v2168
      %v2170 = vpop.f32.mrb[0].mxu0
      %v2171 = vpop.f32.mrb[0].mxu0
      %v2172 = vadd.f32 0.0, %v2171
      %v2173 = vpop.f32.mrb[0].mxu0
      %2174 = vdwg.mxu0
      %2175 = vmatprep.subr.bf16.mxu0 0
      %2176 = vmatpush1.bf16.msra.mxu0 %v2039
      %2177 = vmatprep.subr.bf16.mxu0 0
      %2178 = vmatpush1.bf16.msra.mxu0 0
      %2179 = vmatprep.subr.bf16.mxu0 0
      %2180 = vmatpush1.bf16.msra.mxu0 0
      %2181 = vmatprep.subr.bf16.mxu0 0
      %2182 = vmatpush1.bf16.msra.mxu0 0
      %2183 = vmatprep.subr.bf16.mxu0 0
      %2184 = vmatpush1.bf16.msra.mxu0 0
      %2185 = vmatprep.subr.bf16.mxu0 0
      %2186 = vmatpush1.bf16.msra.mxu0 0
      %2187 = vmatprep.subr.bf16.mxu0 0
      %2188 = vmatpush1.bf16.msra.mxu0 0
      %2189 = vmatprep.subr.bf16.mxu0 0
      %2190 = vmatpush1.bf16.msra.mxu0 0
      %2191 = vmatprep.subr.bf16.mxu0 0
      %2192 = vmatpush1.bf16.msra.mxu0 0
      %2193 = vmatprep.subr.bf16.mxu0 0
      %2194 = vmatpush1.bf16.msra.mxu0 0
      %2195 = vmatprep.subr.bf16.mxu0 0
      %2196 = vmatpush1.bf16.msra.mxu0 0
      %2197 = vmatprep.subr.bf16.mxu0 0
      %2198 = vmatpush1.bf16.msra.mxu0 0
      %2199 = vmatprep.subr.bf16.mxu0 0
      %2200 = vmatpush1.bf16.msra.mxu0 0
      %2201 = vmatprep.subr.bf16.mxu0 0
      %2202 = vmatpush1.bf16.msra.mxu0 0
      %2203 = vmatprep.subr.bf16.mxu0 0
      %2204 = vmatpush1.bf16.msra.mxu0 0
      %2205 = vmatprep.subr.bf16.mxu0 0
      %2206 = vmatpush1.bf16.msra.mxu0 0
      %2207 = vmatprep.mubr.bf16.mxu0 0
      %2208 = vmatmul.mubr.bf16.gmra.mrb[0].mxu0 %v709
      %v2209 = vpop.f32.mrb[0].mxu0
      %v2210 = vadd.f32 0.0, %v2209
      %v2211 = vpop.f32.mrb[0].mxu0
      %v2212 = vpop.f32.mrb[0].mxu0
      %v2213 = vadd.f32 0.0, %v2212
      %v2214 = vpop.f32.mrb[0].mxu0
      %2215 = vdwg.mxu0
      %2216 = vmatprep.subr.bf16.mxu0 0
      %2217 = vmatpush1.bf16.msra.mxu0 %v2040
      %2218 = vmatprep.subr.bf16.mxu0 0
      %2219 = vmatpush1.bf16.msra.mxu0 0
      %2220 = vmatprep.subr.bf16.mxu0 0
      %2221 = vmatpush1.bf16.msra.mxu0 0
      %2222 = vmatprep.subr.bf16.mxu0 0
      %2223 = vmatpush1.bf16.msra.mxu0 0
      %2224 = vmatprep.subr.bf16.mxu0 0
      %2225 = vmatpush1.bf16.msra.mxu0 0
      %2226 = vmatprep.subr.bf16.mxu0 0
      %2227 = vmatpush1.bf16.msra.mxu0 0
      %2228 = vmatprep.subr.bf16.mxu0 0
      %2229 = vmatpush1.bf16.msra.mxu0 0
      %2230 = vmatprep.subr.bf16.mxu0 0
      %2231 = vmatpush1.bf16.msra.mxu0 0
      %2232 = vmatprep.subr.bf16.mxu0 0
      %2233 = vmatpush1.bf16.msra.mxu0 0
      %2234 = vmatprep.subr.bf16.mxu0 0
      %2235 = vmatpush1.bf16.msra.mxu0 0
      %2236 = vmatprep.subr.bf16.mxu0 0
      %2237 = vmatpush1.bf16.msra.mxu0 0
      %2238 = vmatprep.subr.bf16.mxu0 0
      %2239 = vmatpush1.bf16.msra.mxu0 0
      %2240 = vmatprep.subr.bf16.mxu0 0
      %2241 = vmatpush1.bf16.msra.mxu0 0
      %2242 = vmatprep.subr.bf16.mxu0 0
      %2243 = vmatpush1.bf16.msra.mxu0 0
      %2244 = vmatprep.subr.bf16.mxu0 0
      %2245 = vmatpush1.bf16.msra.mxu0 0
      %2246 = vmatprep.subr.bf16.mxu0 0
      %2247 = vmatpush1.bf16.msra.mxu0 0
      %2248 = vmatprep.mubr.bf16.mxu0 0
      %2249 = vmatmul.mubr.bf16.gmra.mrb[0].mxu0 %v764
      %v2250 = vpop.f32.mrb[0].mxu0
      %v2251 = vadd.f32 0.0, %v2250
      %v2252 = vpop.f32.mrb[0].mxu0
      %v2253 = vpop.f32.mrb[0].mxu0
      %v2254 = vadd.f32 0.0, %v2253
      %v2255 = vpop.f32.mrb[0].mxu0
      %2256 = vdwg.mxu0
      %2257 = vmatprep.subr.bf16.mxu0 0
      %2258 = vmatpush1.bf16.msra.mxu0 %v2041
      %2259 = vmatprep.subr.bf16.mxu0 0
      %2260 = vmatpush1.bf16.msra.mxu0 0
      %2261 = vmatprep.subr.bf16.mxu0 0
      %2262 = vmatpush1.bf16.msra.mxu0 0
      %2263 = vmatprep.subr.bf16.mxu0 0
      %2264 = vmatpush1.bf16.msra.mxu0 0
      %2265 = vmatprep.subr.bf16.mxu0 0
      %2266 = vmatpush1.bf16.msra.mxu0 0
      %2267 = vmatprep.subr.bf16.mxu0 0
      %2268 = vmatpush1.bf16.msra.mxu0 0
      %2269 = vmatprep.subr.bf16.mxu0 0
      %2270 = vmatpush1.bf16.msra.mxu0 0
      %2271 = vmatprep.subr.bf16.mxu0 0
      %2272 = vmatpush1.bf16.msra.mxu0 0
      %2273 = vmatprep.subr.bf16.mxu0 0
      %2274 = vmatpush1.bf16.msra.mxu0 0
      %2275 = vmatprep.subr.bf16.mxu0 0
      %2276 = vmatpush1.bf16.msra.mxu0 0
      %2277 = vmatprep.subr.bf16.mxu0 0
      %2278 = vmatpush1.bf16.msra.mxu0 0
      %2279 = vmatprep.subr.bf16.mxu0 0
      %2280 = vmatpush1.bf16.msra.mxu0 0
      %2281 = vmatprep.subr.bf16.mxu0 0
      %2282 = vmatpush1.bf16.msra.mxu0 0
      %2283 = vmatprep.subr.bf16.mxu0 0
      %2284 = vmatpush1.bf16.msra.mxu0 0
      %2285 = vmatprep.subr.bf16.mxu0 0
      %2286 = vmatpush1.bf16.msra.mxu0 0
      %2287 = vmatprep.subr.bf16.mxu0 0
      %2288 = vmatpush1.bf16.msra.mxu0 0
      %2289 = vmatprep.mubr.bf16.mxu0 0
      %2290 = vmatmul.mubr.bf16.gmra.mrb[0].mxu0 %v819
      %v2291 = vpop.f32.mrb[0].mxu0
      %v2292 = vadd.f32 0.0, %v2291
      %v2293 = vpop.f32.mrb[0].mxu0
      %v2294 = vpop.f32.mrb[0].mxu0
      %v2295 = vadd.f32 0.0, %v2294
      %v2296 = vpop.f32.mrb[0].mxu0
      %2297 = vdwg.mxu0
      %2298 = vmatprep.subr.bf16.mxu0 0
      %2299 = vmatpush1.bf16.msra.mxu0 %v2042
      %2300 = vmatprep.subr.bf16.mxu0 0
      %2301 = vmatpush1.bf16.msra.mxu0 0
      %2302 = vmatprep.subr.bf16.mxu0 0
      %2303 = vmatpush1.bf16.msra.mxu0 0
      %2304 = vmatprep.subr.bf16.mxu0 0
      %2305 = vmatpush1.bf16.msra.mxu0 0
      %2306 = vmatprep.subr.bf16.mxu0 0
      %2307 = vmatpush1.bf16.msra.mxu0 0
      %2308 = vmatprep.subr.bf16.mxu0 0
      %2309 = vmatpush1.bf16.msra.mxu0 0
      %2310 = vmatprep.subr.bf16.mxu0 0
      %2311 = vmatpush1.bf16.msra.mxu0 0
      %2312 = vmatprep.subr.bf16.mxu0 0
      %2313 = vmatpush1.bf16.msra.mxu0 0
      %2314 = vmatprep.subr.bf16.mxu0 0
      %2315 = vmatpush1.bf16.msra.mxu0 0
      %2316 = vmatprep.subr.bf16.mxu0 0
      %2317 = vmatpush1.bf16.msra.mxu0 0
      %2318 = vmatprep.subr.bf16.mxu0 0
      %2319 = vmatpush1.bf16.msra.mxu0 0
      %2320 = vmatprep.subr.bf16.mxu0 0
      %2321 = vmatpush1.bf16.msra.mxu0 0
      %2322 = vmatprep.subr.bf16.mxu0 0
      %2323 = vmatpush1.bf16.msra.mxu0 0
      %2324 = vmatprep.subr.bf16.mxu0 0
      %2325 = vmatpush1.bf16.msra.mxu0 0
      %2326 = vmatprep.subr.bf16.mxu0 0
      %2327 = vmatpush1.bf16.msra.mxu0 0
      %2328 = vmatprep.subr.bf16.mxu0 0
      %2329 = vmatpush1.bf16.msra.mxu0 0
      %2330 = vmatprep.mubr.bf16.mxu0 0
      %2331 = vmatmul.mubr.bf16.gmra.mrb[0].mxu0 %v874
      %v2332 = vpop.f32.mrb[0].mxu0
      %v2333 = vadd.f32 0.0, %v2332
      %v2334 = vpop.f32.mrb[0].mxu0
      %v2335 = vpop.f32.mrb[0].mxu0
      %v2336 = vadd.f32 0.0, %v2335
      %v2337 = vpop.f32.mrb[0].mxu0
      %2338 = vdwg.mxu0
      %2339 = vmatprep.subr.bf16.mxu0 0
      %2340 = vmatpush1.bf16.msra.mxu0 %v2043
      %2341 = vmatprep.subr.bf16.mxu0 0
      %2342 = vmatpush1.bf16.msra.mxu0 0
      %2343 = vmatprep.subr.bf16.mxu0 0
      %2344 = vmatpush1.bf16.msra.mxu0 0
      %2345 = vmatprep.subr.bf16.mxu0 0
      %2346 = vmatpush1.bf16.msra.mxu0 0
      %2347 = vmatprep.subr.bf16.mxu0 0
      %2348 = vmatpush1.bf16.msra.mxu0 0
      %2349 = vmatprep.subr.bf16.mxu0 0
      %2350 = vmatpush1.bf16.msra.mxu0 0
      %2351 = vmatprep.subr.bf16.mxu0 0
      %2352 = vmatpush1.bf16.msra.mxu0 0
      %2353 = vmatprep.subr.bf16.mxu0 0
      %2354 = vmatpush1.bf16.msra.mxu0 0
      %2355 = vmatprep.subr.bf16.mxu0 0
      %2356 = vmatpush1.bf16.msra.mxu0 0
      %2357 = vmatprep.subr.bf16.mxu0 0
      %2358 = vmatpush1.bf16.msra.mxu0 0
      %2359 = vmatprep.subr.bf16.mxu0 0
      %2360 = vmatpush1.bf16.msra.mxu0 0
      %2361 = vmatprep.subr.bf16.mxu0 0
      %2362 = vmatpush1.bf16.msra.mxu0 0
      %2363 = vmatprep.subr.bf16.mxu0 0
      %2364 = vmatpush1.bf16.msra.mxu0 0
      %2365 = vmatprep.subr.bf16.mxu0 0
      %2366 = vmatpush1.bf16.msra.mxu0 0
      %2367 = vmatprep.subr.bf16.mxu0 0
      %2368 = vmatpush1.bf16.msra.mxu0 0
      %2369 = vmatprep.subr.bf16.mxu0 0
      %2370 = vmatpush1.bf16.msra.mxu0 0
      %2371 = vmatprep.mubr.bf16.mxu0 0
      %2372 = vmatmul.mubr.bf16.gmra.mrb[0].mxu0 %v929
      %v2373 = vpop.f32.mrb[0].mxu0
      %v2374 = vadd.f32 0.0, %v2373
      %v2375 = vpop.f32.mrb[0].mxu0
      %v2376 = vpop.f32.mrb[0].mxu0
      %v2377 = vadd.f32 0.0, %v2376
      %v2378 = vpop.f32.mrb[0].mxu0
      %2379 = vdwg.mxu0
      %2380 = vmatprep.subr.bf16.mxu0 0
      %2381 = vmatpush1.bf16.msra.mxu0 %v2044
      %2382 = vmatprep.subr.bf16.mxu0 0
      %2383 = vmatpush1.bf16.msra.mxu0 0
      %2384 = vmatprep.subr.bf16.mxu0 0
      %2385 = vmatpush1.bf16.msra.mxu0 0
      %2386 = vmatprep.subr.bf16.mxu0 0
      %2387 = vmatpush1.bf16.msra.mxu0 0
      %2388 = vmatprep.subr.bf16.mxu0 0
      %2389 = vmatpush1.bf16.msra.mxu0 0
      %2390 = vmatprep.subr.bf16.mxu0 0
      %2391 = vmatpush1.bf16.msra.mxu0 0
      %2392 = vmatprep.subr.bf16.mxu0 0
      %2393 = vmatpush1.bf16.msra.mxu0 0
      %2394 = vmatprep.subr.bf16.mxu0 0
      %2395 = vmatpush1.bf16.msra.mxu0 0
      %2396 = vmatprep.subr.bf16.mxu0 0
      %2397 = vmatpush1.bf16.msra.mxu0 0
      %2398 = vmatprep.subr.bf16.mxu0 0
      %2399 = vmatpush1.bf16.msra.mxu0 0
      %2400 = vmatprep.subr.bf16.mxu0 0
      %2401 = vmatpush1.bf16.msra.mxu0 0
      %2402 = vmatprep.subr.bf16.mxu0 0
      %2403 = vmatpush1.bf16.msra.mxu0 0
      %2404 = vmatprep.subr.bf16.mxu0 0
      %2405 = vmatpush1.bf16.msra.mxu0 0
      %2406 = vmatprep.subr.bf16.mxu0 0
      %2407 = vmatpush1.bf16.msra.mxu0 0
      %2408 = vmatprep.subr.bf16.mxu0 0
      %2409 = vmatpush1.bf16.msra.mxu0 0
      %2410 = vmatprep.subr.bf16.mxu0 0
      %2411 = vmatpush1.bf16.msra.mxu0 0
      %2412 = vmatprep.mubr.bf16.mxu0 0
      %2413 = vmatmul.mubr.bf16.gmra.mrb[0].mxu0 %v984
      %v2414 = vpop.f32.mrb[0].mxu0
      %v2415 = vadd.f32 0.0, %v2414
      %v2416 = vpop.f32.mrb[0].mxu0
      %v2417 = vpop.f32.mrb[0].mxu0
      %v2418 = vadd.f32 0.0, %v2417
      %v2419 = vpop.f32.mrb[0].mxu0
      %2420 = vdwg.mxu0
      %2421 = vmatprep.subr.bf16.mxu0 0
      %2422 = vmatpush1.bf16.msra.mxu0 %v2045
      %2423 = vmatprep.subr.bf16.mxu0 0
      %2424 = vmatpush1.bf16.msra.mxu0 0
      %2425 = vmatprep.subr.bf16.mxu0 0
      %2426 = vmatpush1.bf16.msra.mxu0 0
      %2427 = vmatprep.subr.bf16.mxu0 0
      %2428 = vmatpush1.bf16.msra.mxu0 0
      %2429 = vmatprep.subr.bf16.mxu0 0
      %2430 = vmatpush1.bf16.msra.mxu0 0
      %2431 = vmatprep.subr.bf16.mxu0 0
      %2432 = vmatpush1.bf16.msra.mxu0 0
      %2433 = vmatprep.subr.bf16.mxu0 0
      %2434 = vmatpush1.bf16.msra.mxu0 0
      %2435 = vmatprep.subr.bf16.mxu0 0
      %2436 = vmatpush1.bf16.msra.mxu0 0
      %2437 = vmatprep.subr.bf16.mxu0 0
      %2438 = vmatpush1.bf16.msra.mxu0 0
      %2439 = vmatprep.subr.bf16.mxu0 0
      %2440 = vmatpush1.bf16.msra.mxu0 0
      %2441 = vmatprep.subr.bf16.mxu0 0
      %2442 = vmatpush1.bf16.msra.mxu0 0
      %2443 = vmatprep.subr.bf16.mxu0 0
      %2444 = vmatpush1.bf16.msra.mxu0 0
      %2445 = vmatprep.subr.bf16.mxu0 0
      %2446 = vmatpush1.bf16.msra.mxu0 0
      %2447 = vmatprep.subr.bf16.mxu0 0
      %2448 = vmatpush1.bf16.msra.mxu0 0
      %2449 = vmatprep.subr.bf16.mxu0 0
      %2450 = vmatpush1.bf16.msra.mxu0 0
      %2451 = vmatprep.subr.bf16.mxu0 0
      %2452 = vmatpush1.bf16.msra.mxu0 0
      %2453 = vmatprep.mubr.bf16.mxu0 0
      %2454 = vmatmul.mubr.bf16.gmra.mrb[0].mxu0 %v1039
      %v2455 = vpop.f32.mrb[0].mxu0
      %v2456 = vadd.f32 0.0, %v2455
      %v2457 = vpop.f32.mrb[0].mxu0
      %v2458 = vpop.f32.mrb[0].mxu0
      %v2459 = vadd.f32 0.0, %v2458
      %v2460 = vpop.f32.mrb[0].mxu0
      %2461 = vdwg.mxu0
      %2462 = vmatprep.subr.bf16.mxu0 0
      %2463 = vmatpush1.bf16.msra.mxu0 %v2046
      %2464 = vmatprep.subr.bf16.mxu0 0
      %2465 = vmatpush1.bf16.msra.mxu0 0
      %2466 = vmatprep.subr.bf16.mxu0 0
      %2467 = vmatpush1.bf16.msra.mxu0 0
      %2468 = vmatprep.subr.bf16.mxu0 0
      %2469 = vmatpush1.bf16.msra.mxu0 0
      %2470 = vmatprep.subr.bf16.mxu0 0
      %2471 = vmatpush1.bf16.msra.mxu0 0
      %2472 = vmatprep.subr.bf16.mxu0 0
      %2473 = vmatpush1.bf16.msra.mxu0 0
      %2474 = vmatprep.subr.bf16.mxu0 0
      %2475 = vmatpush1.bf16.msra.mxu0 0
      %2476 = vmatprep.subr.bf16.mxu0 0
      %2477 = vmatpush1.bf16.msra.mxu0 0
      %2478 = vmatprep.subr.bf16.mxu0 0
      %2479 = vmatpush1.bf16.msra.mxu0 0
      %2480 = vmatprep.subr.bf16.mxu0 0
      %2481 = vmatpush1.bf16.msra.mxu0 0
      %2482 = vmatprep.subr.bf16.mxu0 0
      %2483 = vmatpush1.bf16.msra.mxu0 0
      %2484 = vmatprep.subr.bf16.mxu0 0
      %2485 = vmatpush1.bf16.msra.mxu0 0
      %2486 = vmatprep.subr.bf16.mxu0 0
      %2487 = vmatpush1.bf16.msra.mxu0 0
      %2488 = vmatprep.subr.bf16.mxu0 0
      %2489 = vmatpush1.bf16.msra.mxu0 0
      %2490 = vmatprep.subr.bf16.mxu0 0
      %2491 = vmatpush1.bf16.msra.mxu0 0
      %2492 = vmatprep.subr.bf16.mxu0 0
      %2493 = vmatpush1.bf16.msra.mxu0 0
      %2494 = vmatprep.mubr.bf16.mxu0 0
      %2495 = vmatmul.mubr.bf16.gmra.mrb[0].mxu0 %v1094
      %v2496 = vpop.f32.mrb[0].mxu0
      %v2497 = vadd.f32 0.0, %v2496
      %v2498 = vpop.f32.mrb[0].mxu0
      %v2499 = vpop.f32.mrb[0].mxu0
      %v2500 = vadd.f32 0.0, %v2499
      %v2501 = vpop.f32.mrb[0].mxu0
      %2502 = vdwg.mxu0
      %2503 = vmatprep.subr.bf16.mxu0 0
      %2504 = vmatpush1.bf16.msra.mxu0 %v2047
      %2505 = vmatprep.subr.bf16.mxu0 0
      %2506 = vmatpush1.bf16.msra.mxu0 0
      %2507 = vmatprep.subr.bf16.mxu0 0
      %2508 = vmatpush1.bf16.msra.mxu0 0
      %2509 = vmatprep.subr.bf16.mxu0 0
      %2510 = vmatpush1.bf16.msra.mxu0 0
      %2511 = vmatprep.subr.bf16.mxu0 0
      %2512 = vmatpush1.bf16.msra.mxu0 0
      %2513 = vmatprep.subr.bf16.mxu0 0
      %2514 = vmatpush1.bf16.msra.mxu0 0
      %2515 = vmatprep.subr.bf16.mxu0 0
      %2516 = vmatpush1.bf16.msra.mxu0 0
      %2517 = vmatprep.subr.bf16.mxu0 0
      %2518 = vmatpush1.bf16.msra.mxu0 0
      %2519 = vmatprep.subr.bf16.mxu0 0
      %2520 = vmatpush1.bf16.msra.mxu0 0
      %2521 = vmatprep.subr.bf16.mxu0 0
      %2522 = vmatpush1.bf16.msra.mxu0 0
      %2523 = vmatprep.subr.bf16.mxu0 0
      %2524 = vmatpush1.bf16.msra.mxu0 0
      %2525 = vmatprep.subr.bf16.mxu0 0
      %2526 = vmatpush1.bf16.msra.mxu0 0
      %2527 = vmatprep.subr.bf16.mxu0 0
      %2528 = vmatpush1.bf16.msra.mxu0 0
      %2529 = vmatprep.subr.bf16.mxu0 0
      %2530 = vmatpush1.bf16.msra.mxu0 0
      %2531 = vmatprep.subr.bf16.mxu0 0
      %2532 = vmatpush1.bf16.msra.mxu0 0
      %2533 = vmatprep.subr.bf16.mxu0 0
      %2534 = vmatpush1.bf16.msra.mxu0 0
      %2535 = vmatprep.mubr.bf16.mxu0 0
      %2536 = vmatmul.mubr.bf16.gmra.mrb[0].mxu0 %v1149
      %v2537 = vpop.f32.mrb[0].mxu0
      %v2538 = vadd.f32 0.0, %v2537
      %v2539 = vpop.f32.mrb[0].mxu0
      %v2540 = vpop.f32.mrb[0].mxu0
      %v2541 = vadd.f32 0.0, %v2540
      %v2542 = vpop.f32.mrb[0].mxu0
      %2543 = vdwg.mxu0
      %2544 = vmatprep.subr.bf16.mxu0 0
      %2545 = vmatpush1.bf16.msra.mxu0 %v2048
      %2546 = vmatprep.subr.bf16.mxu0 0
      %2547 = vmatpush1.bf16.msra.mxu0 0
      %2548 = vmatprep.subr.bf16.mxu0 0
      %2549 = vmatpush1.bf16.msra.mxu0 0
      %2550 = vmatprep.subr.bf16.mxu0 0
      %2551 = vmatpush1.bf16.msra.mxu0 0
      %2552 = vmatprep.subr.bf16.mxu0 0
      %2553 = vmatpush1.bf16.msra.mxu0 0
      %2554 = vmatprep.subr.bf16.mxu0 0
      %2555 = vmatpush1.bf16.msra.mxu0 0
      %2556 = vmatprep.subr.bf16.mxu0 0
      %2557 = vmatpush1.bf16.msra.mxu0 0
      %2558 = vmatprep.subr.bf16.mxu0 0
      %2559 = vmatpush1.bf16.msra.mxu0 0
      %2560 = vmatprep.subr.bf16.mxu0 0
      %2561 = vmatpush1.bf16.msra.mxu0 0
      %2562 = vmatprep.subr.bf16.mxu0 0
      %2563 = vmatpush1.bf16.msra.mxu0 0
      %2564 = vmatprep.subr.bf16.mxu0 0
      %2565 = vmatpush1.bf16.msra.mxu0 0
      %2566 = vmatprep.subr.bf16.mxu0 0
      %2567 = vmatpush1.bf16.msra.mxu0 0
      %2568 = vmatprep.subr.bf16.mxu0 0
      %2569 = vmatpush1.bf16.msra.mxu0 0
      %2570 = vmatprep.subr.bf16.mxu0 0
      %2571 = vmatpush1.bf16.msra.mxu0 0
      %2572 = vmatprep.subr.bf16.mxu0 0
      %2573 = vmatpush1.bf16.msra.mxu0 0
      %2574 = vmatprep.subr.bf16.mxu0 0
      %2575 = vmatpush1.bf16.msra.mxu0 0
      %2576 = vmatprep.mubr.bf16.mxu0 0
      %2577 = vmatmul.mubr.bf16.gmra.mrb[0].mxu0 %v1204
      %v2578 = vpop.f32.mrb[0].mxu0
      %v2579 = vadd.f32 0.0, %v2578
      %v2580 = vpop.f32.mrb[0].mxu0
      %v2581 = vpop.f32.mrb[0].mxu0
      %v2582 = vadd.f32 0.0, %v2581
      %v2583 = vpop.f32.mrb[0].mxu0
      %2584 = vdwg.mxu0
      %2585 = vmatprep.subr.bf16.mxu0 0
      %2586 = vmatpush1.bf16.msra.mxu0 %v2049
      %2587 = vmatprep.subr.bf16.mxu0 0
      %2588 = vmatpush1.bf16.msra.mxu0 0
      %2589 = vmatprep.subr.bf16.mxu0 0
      %2590 = vmatpush1.bf16.msra.mxu0 0
      %2591 = vmatprep.subr.bf16.mxu0 0
      %2592 = vmatpush1.bf16.msra.mxu0 0
      %2593 = vmatprep.subr.bf16.mxu0 0
      %2594 = vmatpush1.bf16.msra.mxu0 0
      %2595 = vmatprep.subr.bf16.mxu0 0
      %2596 = vmatpush1.bf16.msra.mxu0 0
      %2597 = vmatprep.subr.bf16.mxu0 0
      %2598 = vmatpush1.bf16.msra.mxu0 0
      %2599 = vmatprep.subr.bf16.mxu0 0
      %2600 = vmatpush1.bf16.msra.mxu0 0
      %2601 = vmatprep.subr.bf16.mxu0 0
      %2602 = vmatpush1.bf16.msra.mxu0 0
      %2603 = vmatprep.subr.bf16.mxu0 0
      %2604 = vmatpush1.bf16.msra.mxu0 0
      %2605 = vmatprep.subr.bf16.mxu0 0
      %2606 = vmatpush1.bf16.msra.mxu0 0
      %2607 = vmatprep.subr.bf16.mxu0 0
      %2608 = vmatpush1.bf16.msra.mxu0 0
      %2609 = vmatprep.subr.bf16.mxu0 0
      %2610 = vmatpush1.bf16.msra.mxu0 0
      %2611 = vmatprep.subr.bf16.mxu0 0
      %2612 = vmatpush1.bf16.msra.mxu0 0
      %2613 = vmatprep.subr.bf16.mxu0 0
      %2614 = vmatpush1.bf16.msra.mxu0 0
      %2615 = vmatprep.subr.bf16.mxu0 0
      %2616 = vmatpush1.bf16.msra.mxu0 0
      %2617 = vmatprep.mubr.bf16.mxu0 0
      %2618 = vmatmul.mubr.bf16.gmra.mrb[0].mxu0 %v1259
      %v2619 = vpop.f32.mrb[0].mxu0
      %v2620 = vadd.f32 0.0, %v2619
      %v2621 = vpop.f32.mrb[0].mxu0
      %v2622 = vpop.f32.mrb[0].mxu0
      %v2623 = vadd.f32 0.0, %v2622
      %v2624 = vpop.f32.mrb[0].mxu0
      %2625 = vdwg.mxu0
      %2626 = vmatprep.subr.bf16.mxu0 0
      %2627 = vmatpush1.bf16.msra.mxu0 %v2050
      %2628 = vmatprep.subr.bf16.mxu0 0
      %2629 = vmatpush1.bf16.msra.mxu0 0
      %2630 = vmatprep.subr.bf16.mxu0 0
      %2631 = vmatpush1.bf16.msra.mxu0 0
      %2632 = vmatprep.subr.bf16.mxu0 0
      %2633 = vmatpush1.bf16.msra.mxu0 0
      %2634 = vmatprep.subr.bf16.mxu0 0
      %2635 = vmatpush1.bf16.msra.mxu0 0
      %2636 = vmatprep.subr.bf16.mxu0 0
      %2637 = vmatpush1.bf16.msra.mxu0 0
      %2638 = vmatprep.subr.bf16.mxu0 0
      %2639 = vmatpush1.bf16.msra.mxu0 0
      %2640 = vmatprep.subr.bf16.mxu0 0
      %2641 = vmatpush1.bf16.msra.mxu0 0
      %2642 = vmatprep.subr.bf16.mxu0 0
      %2643 = vmatpush1.bf16.msra.mxu0 0
      %2644 = vmatprep.subr.bf16.mxu0 0
      %2645 = vmatpush1.bf16.msra.mxu0 0
      %2646 = vmatprep.subr.bf16.mxu0 0
      %2647 = vmatpush1.bf16.msra.mxu0 0
      %2648 = vmatprep.subr.bf16.mxu0 0
      %2649 = vmatpush1.bf16.msra.mxu0 0
      %2650 = vmatprep.subr.bf16.mxu0 0
      %2651 = vmatpush1.bf16.msra.mxu0 0
      %2652 = vmatprep.subr.bf16.mxu0 0
      %2653 = vmatpush1.bf16.msra.mxu0 0
      %2654 = vmatprep.subr.bf16.mxu0 0
      %2655 = vmatpush1.bf16.msra.mxu0 0
      %2656 = vmatprep.subr.bf16.mxu0 0
      %2657 = vmatpush1.bf16.msra.mxu0 0
      %2658 = vmatprep.mubr.bf16.mxu0 0
      %2659 = vmatmul.mubr.bf16.gmra.mrb[0].mxu0 %v1314
      %v2660 = vpop.f32.mrb[0].mxu0
      %v2661 = vadd.f32 0.0, %v2660
      %v2662 = vpop.f32.mrb[0].mxu0
      %v2663 = vpop.f32.mrb[0].mxu0
      %v2664 = vadd.f32 0.0, %v2663
      %v2665 = vpop.f32.mrb[0].mxu0
      %2666 = vdwg.mxu0
      %2667 = vmatprep.subr.bf16.mxu0 0
      %2668 = vmatpush1.bf16.msra.mxu0 %v2051
      %2669 = vmatprep.subr.bf16.mxu0 0
      %2670 = vmatpush1.bf16.msra.mxu0 0
      %2671 = vmatprep.subr.bf16.mxu0 0
      %2672 = vmatpush1.bf16.msra.mxu0 0
      %2673 = vmatprep.subr.bf16.mxu0 0
      %2674 = vmatpush1.bf16.msra.mxu0 0
      %2675 = vmatprep.subr.bf16.mxu0 0
      %2676 = vmatpush1.bf16.msra.mxu0 0
      %2677 = vmatprep.subr.bf16.mxu0 0
      %2678 = vmatpush1.bf16.msra.mxu0 0
      %2679 = vmatprep.subr.bf16.mxu0 0
      %2680 = vmatpush1.bf16.msra.mxu0 0
      %2681 = vmatprep.subr.bf16.mxu0 0
      %2682 = vmatpush1.bf16.msra.mxu0 0
      %2683 = vmatprep.subr.bf16.mxu0 0
      %2684 = vmatpush1.bf16.msra.mxu0 0
      %2685 = vmatprep.subr.bf16.mxu0 0
      %2686 = vmatpush1.bf16.msra.mxu0 0
      %2687 = vmatprep.subr.bf16.mxu0 0
      %2688 = vmatpush1.bf16.msra.mxu0 0
      %2689 = vmatprep.subr.bf16.mxu0 0
      %2690 = vmatpush1.bf16.msra.mxu0 0
      %2691 = vmatprep.subr.bf16.mxu0 0
      %2692 = vmatpush1.bf16.msra.mxu0 0
      %2693 = vmatprep.subr.bf16.mxu0 0
      %2694 = vmatpush1.bf16.msra.mxu0 0
      %2695 = vmatprep.subr.bf16.mxu0 0
      %2696 = vmatpush1.bf16.msra.mxu0 0
      %2697 = vmatprep.subr.bf16.mxu0 0
      %2698 = vmatpush1.bf16.msra.mxu0 0
      %2699 = vmatprep.mubr.bf16.mxu0 0
      %2700 = vmatmul.mubr.bf16.gmra.mrb[0].mxu0 %v1369
      %v2701 = vpop.f32.mrb[0].mxu0
      %v2702 = vadd.f32 0.0, %v2701
      %v2703 = vpop.f32.mrb[0].mxu0
      %v2704 = vpop.f32.mrb[0].mxu0
      %v2705 = vadd.f32 0.0, %v2704
      %v2706 = vpop.f32.mrb[0].mxu0
      %2707 = vdwg.mxu0
      %v2708 = vunpack.c.l.bf16 %v2036
      %v2709 = vunpack.c.h.bf16 %v2036
      %v2710 = vunpack.c.l.bf16 %v2037
      %v2711 = vunpack.c.h.bf16 %v2037
      %v2712 = vunpack.c.l.bf16 %v2038
      %v2713 = vunpack.c.h.bf16 %v2038
      %v2714 = vunpack.c.l.bf16 %v2039
      %v2715 = vunpack.c.h.bf16 %v2039
      %v2716 = vunpack.c.l.bf16 %v2040
      %v2717 = vunpack.c.h.bf16 %v2040
      %v2718 = vunpack.c.l.bf16 %v2041
      %v2719 = vunpack.c.h.bf16 %v2041
      %v2720 = vunpack.c.l.bf16 %v2042
      %v2721 = vunpack.c.h.bf16 %v2042
      %v2722 = vunpack.c.l.bf16 %v2043
      %v2723 = vunpack.c.h.bf16 %v2043
      %v2724 = vunpack.c.l.bf16 %v2044
      %v2725 = vunpack.c.h.bf16 %v2044
      %v2726 = vunpack.c.l.bf16 %v2045
      %v2727 = vunpack.c.h.bf16 %v2045
      %v2728 = vunpack.c.l.bf16 %v2046
      %v2729 = vunpack.c.h.bf16 %v2046
      %v2730 = vunpack.c.l.bf16 %v2047
      %v2731 = vunpack.c.h.bf16 %v2047
      %v2732 = vunpack.c.l.bf16 %v2048
      %v2733 = vunpack.c.h.bf16 %v2048
      %v2734 = vunpack.c.l.bf16 %v2049
      %v2735 = vunpack.c.h.bf16 %v2049
      %v2736 = vunpack.c.l.bf16 %v2050
      %v2737 = vunpack.c.h.bf16 %v2050
      %v2738 = vunpack.c.l.bf16 %v2051
      %v2739 = vunpack.c.h.bf16 %v2051
      %v2740 = vadd.f32 %v2708, %v2087
      %v2741 = vadd.f32 %v2709, %v2090
      %v2742 = vadd.f32 %v2710, %v2128
      %v2743 = vadd.f32 %v2711, %v2131
      %v2744 = vadd.f32 %v2712, %v2169
      %v2745 = vadd.f32 %v2713, %v2172
      %v2746 = vadd.f32 %v2714, %v2210
      %v2747 = vadd.f32 %v2715, %v2213
      %v2748 = vadd.f32 %v2716, %v2251
      %v2749 = vadd.f32 %v2717, %v2254
      %v2750 = vadd.f32 %v2718, %v2292
      %v2751 = vadd.f32 %v2719, %v2295
      %v2752 = vadd.f32 %v2720, %v2333
      %v2753 = vadd.f32 %v2721, %v2336
      %v2754 = vadd.f32 %v2722, %v2374
      %v2755 = vadd.f32 %v2723, %v2377
      %v2756 = vadd.f32 %v2724, %v2415
      %v2757 = vadd.f32 %v2725, %v2418
      %v2758 = vadd.f32 %v2726, %v2456
      %v2759 = vadd.f32 %v2727, %v2459
      %v2760 = vadd.f32 %v2728, %v2497
      %v2761 = vadd.f32 %v2729, %v2500
      %v2762 = vadd.f32 %v2730, %v2538
      %v2763 = vadd.f32 %v2731, %v2541
      %v2764 = vadd.f32 %v2732, %v2579
      %v2765 = vadd.f32 %v2733, %v2582
      %v2766 = vadd.f32 %v2734, %v2620
      %v2767 = vadd.f32 %v2735, %v2623
      %v2768 = vadd.f32 %v2736, %v2661
      %v2769 = vadd.f32 %v2737, %v2664
      %v2770 = vadd.f32 %v2738, %v2702
      %v2771 = vadd.f32 %v2739, %v2705
      %v2772 = vpack.c.bf16 %v2741, %v2740
      %v2773 = vpack.c.bf16 %v2743, %v2742
      %v2774 = vpack.c.bf16 %v2745, %v2744
      %v2775 = vpack.c.bf16 %v2747, %v2746
      %v2776 = vpack.c.bf16 %v2749, %v2748
      %v2777 = vpack.c.bf16 %v2751, %v2750
      %v2778 = vpack.c.bf16 %v2753, %v2752
      %v2779 = vpack.c.bf16 %v2755, %v2754
      %v2780 = vpack.c.bf16 %v2757, %v2756
      %v2781 = vpack.c.bf16 %v2759, %v2758
      %v2782 = vpack.c.bf16 %v2761, %v2760
      %v2783 = vpack.c.bf16 %v2763, %v2762
      %v2784 = vpack.c.bf16 %v2765, %v2764
      %v2785 = vpack.c.bf16 %v2767, %v2766
      %v2786 = vpack.c.bf16 %v2769, %v2768
      %v2787 = vpack.c.bf16 %v2771, %v2770
      %s2788 = scalar_lea.vmem %s2, 64
      %v2789 = vld [vmem:[%s2788] sm:$0xf]
      %v2790 = vld [vmem:[%s2788 + $0x4] sm:$0xf]
      %v2791 = vld [vmem:[%s2788 + $0x8] sm:$0xf]
      %v2792 = vld [vmem:[%s2788 + $0xc] sm:$0xf]
      %v2793 = vld [vmem:[%s2788 + $0x10] sm:$0xf]
      %v2794 = vld [vmem:[%s2788 + $0x14] sm:$0xf]
      %v2795 = vld [vmem:[%s2788 + $0x18] sm:$0xf]
      %v2796 = vld [vmem:[%s2788 + $0x1c] sm:$0xf]
      %v2797 = vld [vmem:[%s2788 + $0x20] sm:$0xf]
      %v2798 = vld [vmem:[%s2788 + $0x24] sm:$0xf]
      %v2799 = vld [vmem:[%s2788 + $0x28] sm:$0xf]
      %v2800 = vld [vmem:[%s2788 + $0x2c] sm:$0xf]
      %v2801 = vld [vmem:[%s2788 + $0x30] sm:$0xf]
      %v2802 = vld [vmem:[%s2788 + $0x34] sm:$0xf]
      %v2803 = vld [vmem:[%s2788 + $0x38] sm:$0xf]
      %v2804 = vld [vmem:[%s2788 + $0x3c] sm:$0xf]
      %s2805 = scalar_lea.vmem %s3, 1
      %v2806 = vld [vmem:[%s2805] sm:$0x1]
      %v2808 = vlaneseq
      %v2809 = vshrl.u32 %v2808, 7
      %v2810 = vsub.s32 0, %v2809
      %v2811 = vrot.slane %v2806, %v2810
      %v2829 = vunpack.c.l.b16 %v2789
      %v2830 = vunpack.c.l.b16 %v2790
      %v2831 = vunpack.c.l.b16 %v2791
      %v2832 = vunpack.c.l.b16 %v2792
      %v2833 = vunpack.c.l.b16 %v2793
      %v2834 = vunpack.c.l.b16 %v2794
      %v2835 = vunpack.c.l.b16 %v2795
      %v2836 = vunpack.c.l.b16 %v2796
      %v2837 = vunpack.c.l.b16 %v2797
      %v2838 = vunpack.c.l.b16 %v2798
      %v2839 = vunpack.c.l.b16 %v2799
      %v2840 = vunpack.c.l.b16 %v2800
      %v2841 = vunpack.c.l.b16 %v2801
      %v2842 = vunpack.c.l.b16 %v2802
      %v2843 = vunpack.c.l.b16 %v2803
      %v2844 = vunpack.c.l.b16 %v2804
      %v2845 = vpack.c.b16 %v2830, %v2829
      %v2846 = vpack.c.b16 %v2832, %v2831
      %v2847 = vpack.c.b16 %v2834, %v2833
      %v2848 = vpack.c.b16 %v2836, %v2835
      %v2849 = vpack.c.b16 %v2838, %v2837
      %v2850 = vpack.c.b16 %v2840, %v2839
      %v2851 = vpack.c.b16 %v2842, %v2841
      %v2852 = vpack.c.b16 %v2844, %v2843
      %2861 = vmatprep.subr.bf16.mxu0 0
      %2862 = vmatpush1.bf16.msra.mxu0 %v2845
      %2863 = vmatprep.subr.bf16.mxu0 0
      %2864 = vmatpush1.bf16.msra.mxu0 %v2846
      %2865 = vmatprep.subr.bf16.mxu0 0
      %2866 = vmatpush1.bf16.msra.mxu0 %v2847
      %2867 = vmatprep.subr.bf16.mxu0 0
      %2868 = vmatpush1.bf16.msra.mxu0 %v2848
      %2869 = vmatprep.subr.bf16.mxu0 0
      %2870 = vmatpush1.bf16.msra.mxu0 %v2849
      %2871 = vmatprep.subr.bf16.mxu0 0
      %2872 = vmatpush1.bf16.msra.mxu0 %v2850
      %2873 = vmatprep.subr.bf16.mxu0 0
      %2874 = vmatpush1.bf16.msra.mxu0 %v2851
      %2875 = vmatprep.subr.bf16.mxu0 0
      %2876 = vmatpush1.bf16.msra.mxu0 %v2852
      %2877 = vmatprep.subr.bf16.mxu0 0
      %2878 = vmatpush1.bf16.msra.mxu0 0
      %2879 = vmatprep.subr.bf16.mxu0 0
      %2880 = vmatpush1.bf16.msra.mxu0 0
      %2881 = vmatprep.subr.bf16.mxu0 0
      %2882 = vmatpush1.bf16.msra.mxu0 0
      %2883 = vmatprep.subr.bf16.mxu0 0
      %2884 = vmatpush1.bf16.msra.mxu0 0
      %2885 = vmatprep.subr.bf16.mxu0 0
      %2886 = vmatpush1.bf16.msra.mxu0 0
      %2887 = vmatprep.subr.bf16.mxu0 0
      %2888 = vmatpush1.bf16.msra.mxu0 0
      %2889 = vmatprep.subr.bf16.mxu0 0
      %2890 = vmatpush1.bf16.msra.mxu0 0
      %2891 = vmatprep.subr.bf16.mxu0 0
      %2892 = vmatpush1.bf16.msra.mxu0 0
      %2893 = vmatprep.mubr.bf16.mxu0 0
      %2894 = vmatmul.mubr.bf16.gmra.mrb[0].mxu0 %v2772
      %v2895 = vpop.f32.mrb[0].mxu0
      %v2896 = vadd.f32 %v2811, %v2895
      %v2897 = vpop.f32.mrb[0].mxu0
      %v2898 = vpop.f32.mrb[0].mxu0
      %v2899 = vadd.f32 %v2811, %v2898
      %v2900 = vpop.f32.mrb[0].mxu0
      %2901 = vmatprep.mubr.bf16.mxu0 0
      %2902 = vmatmul.mubr.bf16.gmra.mrb[0].mxu0 %v2773
      %v2903 = vpop.f32.mrb[0].mxu0
      %v2904 = vadd.f32 %v2811, %v2903
      %v2905 = vpop.f32.mrb[0].mxu0
      %v2906 = vpop.f32.mrb[0].mxu0
      %v2907 = vadd.f32 %v2811, %v2906
      %v2908 = vpop.f32.mrb[0].mxu0
      %2909 = vmatprep.mubr.bf16.mxu0 0
      %2910 = vmatmul.mubr.bf16.gmra.mrb[0].mxu0 %v2774
      %v2911 = vpop.f32.mrb[0].mxu0
      %v2912 = vadd.f32 %v2811, %v2911
      %v2913 = vpop.f32.mrb[0].mxu0
      %v2914 = vpop.f32.mrb[0].mxu0
      %v2915 = vadd.f32 %v2811, %v2914
      %v2916 = vpop.f32.mrb[0].mxu0
      %2917 = vmatprep.mubr.bf16.mxu0 0
      %2918 = vmatmul.mubr.bf16.gmra.mrb[0].mxu0 %v2775
      %v2919 = vpop.f32.mrb[0].mxu0
      %v2920 = vadd.f32 %v2811, %v2919
      %v2921 = vpop.f32.mrb[0].mxu0
      %v2922 = vpop.f32.mrb[0].mxu0
      %v2923 = vadd.f32 %v2811, %v2922
      %v2924 = vpop.f32.mrb[0].mxu0
      %2925 = vmatprep.mubr.bf16.mxu0 0
      %2926 = vmatmul.mubr.bf16.gmra.mrb[0].mxu0 %v2776
      %v2927 = vpop.f32.mrb[0].mxu0
      %v2928 = vadd.f32 %v2811, %v2927
      %v2929 = vpop.f32.mrb[0].mxu0
      %v2930 = vpop.f32.mrb[0].mxu0
      %v2931 = vadd.f32 %v2811, %v2930
      %v2932 = vpop.f32.mrb[0].mxu0
      %2933 = vmatprep.mubr.bf16.mxu0 0
      %2934 = vmatmul.mubr.bf16.gmra.mrb[0].mxu0 %v2777
      %v2935 = vpop.f32.mrb[0].mxu0
      %v2936 = vadd.f32 %v2811, %v2935
      %v2937 = vpop.f32.mrb[0].mxu0
      %v2938 = vpop.f32.mrb[0].mxu0
      %v2939 = vadd.f32 %v2811, %v2938
      %v2940 = vpop.f32.mrb[0].mxu0
      %2941 = vmatprep.mubr.bf16.mxu0 0
      %2942 = vmatmul.mubr.bf16.gmra.mrb[0].mxu0 %v2778
      %v2943 = vpop.f32.mrb[0].mxu0
      %v2944 = vadd.f32 %v2811, %v2943
      %v2945 = vpop.f32.mrb[0].mxu0
      %v2946 = vpop.f32.mrb[0].mxu0
      %v2947 = vadd.f32 %v2811, %v2946
      %v2948 = vpop.f32.mrb[0].mxu0
      %2949 = vmatprep.mubr.bf16.mxu0 0
      %2950 = vmatmul.mubr.bf16.gmra.mrb[0].mxu0 %v2779
      %v2951 = vpop.f32.mrb[0].mxu0
      %v2952 = vadd.f32 %v2811, %v2951
      %v2953 = vpop.f32.mrb[0].mxu0
      %v2954 = vpop.f32.mrb[0].mxu0
      %v2955 = vadd.f32 %v2811, %v2954
      %v2956 = vpop.f32.mrb[0].mxu0
      %2957 = vmatprep.mubr.bf16.mxu0 0
      %2958 = vmatmul.mubr.bf16.gmra.mrb[0].mxu0 %v2780
      %v2959 = vpop.f32.mrb[0].mxu0
      %v2960 = vadd.f32 %v2811, %v2959
      %v2961 = vpop.f32.mrb[0].mxu0
      %v2962 = vpop.f32.mrb[0].mxu0
      %v2963 = vadd.f32 %v2811, %v2962
      %v2964 = vpop.f32.mrb[0].mxu0
      %2965 = vmatprep.mubr.bf16.mxu0 0
      %2966 = vmatmul.mubr.bf16.gmra.mrb[0].mxu0 %v2781
      %v2967 = vpop.f32.mrb[0].mxu0
      %v2968 = vadd.f32 %v2811, %v2967
      %v2969 = vpop.f32.mrb[0].mxu0
      %v2970 = vpop.f32.mrb[0].mxu0
      %v2971 = vadd.f32 %v2811, %v2970
      %v2972 = vpop.f32.mrb[0].mxu0
      %2973 = vmatprep.mubr.bf16.mxu0 0
      %2974 = vmatmul.mubr.bf16.gmra.mrb[0].mxu0 %v2782
      %v2975 = vpop.f32.mrb[0].mxu0
      %v2976 = vadd.f32 %v2811, %v2975
      %v2977 = vpop.f32.mrb[0].mxu0
      %v2978 = vpop.f32.mrb[0].mxu0
      %v2979 = vadd.f32 %v2811, %v2978
      %v2980 = vpop.f32.mrb[0].mxu0
      %2981 = vmatprep.mubr.bf16.mxu0 0
      %2982 = vmatmul.mubr.bf16.gmra.mrb[0].mxu0 %v2783
      %v2983 = vpop.f32.mrb[0].mxu0
      %v2984 = vadd.f32 %v2811, %v2983
      %v2985 = vpop.f32.mrb[0].mxu0
      %v2986 = vpop.f32.mrb[0].mxu0
      %v2987 = vadd.f32 %v2811, %v2986
      %v2988 = vpop.f32.mrb[0].mxu0
      %2989 = vmatprep.mubr.bf16.mxu0 0
      %2990 = vmatmul.mubr.bf16.gmra.mrb[0].mxu0 %v2784
      %v2991 = vpop.f32.mrb[0].mxu0
      %v2992 = vadd.f32 %v2811, %v2991
      %v2993 = vpop.f32.mrb[0].mxu0
      %v2994 = vpop.f32.mrb[0].mxu0
      %v2995 = vadd.f32 %v2811, %v2994
      %v2996 = vpop.f32.mrb[0].mxu0
      %2997 = vmatprep.mubr.bf16.mxu0 0
      %2998 = vmatmul.mubr.bf16.gmra.mrb[0].mxu0 %v2785
      %v2999 = vpop.f32.mrb[0].mxu0
      %v3000 = vadd.f32 %v2811, %v2999
      %v3001 = vpop.f32.mrb[0].mxu0
      %v3002 = vpop.f32.mrb[0].mxu0
      %v3003 = vadd.f32 %v2811, %v3002
      %v3004 = vpop.f32.mrb[0].mxu0
      %3005 = vmatprep.mubr.bf16.mxu0 0
      %3006 = vmatmul.mubr.bf16.gmra.mrb[0].mxu0 %v2786
      %v3007 = vpop.f32.mrb[0].mxu0
      %v3008 = vadd.f32 %v2811, %v3007
      %v3009 = vpop.f32.mrb[0].mxu0
      %v3010 = vpop.f32.mrb[0].mxu0
      %v3011 = vadd.f32 %v2811, %v3010
      %v3012 = vpop.f32.mrb[0].mxu0
      %3013 = vmatprep.mubr.bf16.mxu0 0
      %3014 = vmatmul.mubr.bf16.gmra.mrb[0].mxu0 %v2787
      %v3015 = vpop.f32.mrb[0].mxu0
      %v3016 = vadd.f32 %v2811, %v3015
      %v3017 = vpop.f32.mrb[0].mxu0
      %v3018 = vpop.f32.mrb[0].mxu0
      %v3019 = vadd.f32 %v2811, %v3018
      %v3020 = vpop.f32.mrb[0].mxu0
      %3021 = vdwg.mxu0
      %v3022 = vmax.f32 %v2896, 0.0
      %v3023 = vmax.f32 %v2899, 0.0
      %v3024 = vmax.f32 %v2904, 0.0
      %v3025 = vmax.f32 %v2907, 0.0
      %v3026 = vmax.f32 %v2912, 0.0
      %v3027 = vmax.f32 %v2915, 0.0
      %v3028 = vmax.f32 %v2920, 0.0
      %v3029 = vmax.f32 %v2923, 0.0
      %v3030 = vmax.f32 %v2928, 0.0
      %v3031 = vmax.f32 %v2931, 0.0
      %v3032 = vmax.f32 %v2936, 0.0
      %v3033 = vmax.f32 %v2939, 0.0
      %v3034 = vmax.f32 %v2944, 0.0
      %v3035 = vmax.f32 %v2947, 0.0
      %v3036 = vmax.f32 %v2952, 0.0
      %v3037 = vmax.f32 %v2955, 0.0
      %v3038 = vmax.f32 %v2960, 0.0
      %v3039 = vmax.f32 %v2963, 0.0
      %v3040 = vmax.f32 %v2968, 0.0
      %v3041 = vmax.f32 %v2971, 0.0
      %v3042 = vmax.f32 %v2976, 0.0
      %v3043 = vmax.f32 %v2979, 0.0
      %v3044 = vmax.f32 %v2984, 0.0
      %v3045 = vmax.f32 %v2987, 0.0
      %v3046 = vmax.f32 %v2992, 0.0
      %v3047 = vmax.f32 %v2995, 0.0
      %v3048 = vmax.f32 %v3000, 0.0
      %v3049 = vmax.f32 %v3003, 0.0
      %v3050 = vmax.f32 %v3008, 0.0
      %v3051 = vmax.f32 %v3011, 0.0
      %v3052 = vmax.f32 %v3016, 0.0
      %v3053 = vmax.f32 %v3019, 0.0
      %v3054 = vpack.c.bf16 %v3023, %v3022
      %v3055 = vpack.c.bf16 %v3025, %v3024
      %v3056 = vpack.c.bf16 %v3027, %v3026
      %v3057 = vpack.c.bf16 %v3029, %v3028
      %v3058 = vpack.c.bf16 %v3031, %v3030
      %v3059 = vpack.c.bf16 %v3033, %v3032
      %v3060 = vpack.c.bf16 %v3035, %v3034
      %v3061 = vpack.c.bf16 %v3037, %v3036
      %v3062 = vpack.c.bf16 %v3039, %v3038
      %v3063 = vpack.c.bf16 %v3041, %v3040
      %v3064 = vpack.c.bf16 %v3043, %v3042
      %v3065 = vpack.c.bf16 %v3045, %v3044
      %v3066 = vpack.c.bf16 %v3047, %v3046
      %v3067 = vpack.c.bf16 %v3049, %v3048
      %v3068 = vpack.c.bf16 %v3051, %v3050
      %v3069 = vpack.c.bf16 %v3053, %v3052
      %s3070 = scalar_lea.vmem %s4, 64
      %v3071 = vld [vmem:[%s3070] sm:$0xf]
      %v3072 = vld [vmem:[%s3070 + $0x4] sm:$0xf]
      %v3073 = vld [vmem:[%s3070 + $0x8] sm:$0xf]
      %v3074 = vld [vmem:[%s3070 + $0xc] sm:$0xf]
      %v3075 = vld [vmem:[%s3070 + $0x10] sm:$0xf]
      %v3076 = vld [vmem:[%s3070 + $0x14] sm:$0xf]
      %v3077 = vld [vmem:[%s3070 + $0x18] sm:$0xf]
      %v3078 = vld [vmem:[%s3070 + $0x1c] sm:$0xf]
      %v3079 = vld [vmem:[%s3070 + $0x20] sm:$0xf]
      %v3080 = vld [vmem:[%s3070 + $0x24] sm:$0xf]
      %v3081 = vld [vmem:[%s3070 + $0x28] sm:$0xf]
      %v3082 = vld [vmem:[%s3070 + $0x2c] sm:$0xf]
      %v3083 = vld [vmem:[%s3070 + $0x30] sm:$0xf]
      %v3084 = vld [vmem:[%s3070 + $0x34] sm:$0xf]
      %v3085 = vld [vmem:[%s3070 + $0x38] sm:$0xf]
      %v3086 = vld [vmem:[%s3070 + $0x3c] sm:$0xf]
      %s3087 = scalar_lea.vmem %s5, 1
      %v3088 = vld [vmem:[%s3087] sm:$0x1]
      %v3090 = vlaneseq
      %v3091 = vshrl.u32 %v3090, 7
      %v3092 = vsub.s32 0, %v3091
      %v3093 = vrot.slane %v3088, %v3092
      %v3111 = vunpack.c.l.b16 %v3071
      %v3112 = vunpack.c.l.b16 %v3072
      %v3113 = vunpack.c.l.b16 %v3073
      %v3114 = vunpack.c.l.b16 %v3074
      %v3115 = vunpack.c.l.b16 %v3075
      %v3116 = vunpack.c.l.b16 %v3076
      %v3117 = vunpack.c.l.b16 %v3077
      %v3118 = vunpack.c.l.b16 %v3078
      %v3119 = vunpack.c.l.b16 %v3079
      %v3120 = vunpack.c.l.b16 %v3080
      %v3121 = vunpack.c.l.b16 %v3081
      %v3122 = vunpack.c.l.b16 %v3082
      %v3123 = vunpack.c.l.b16 %v3083
      %v3124 = vunpack.c.l.b16 %v3084
      %v3125 = vunpack.c.l.b16 %v3085
      %v3126 = vunpack.c.l.b16 %v3086
      %v3127 = vpack.c.b16 %v3112, %v3111
      %v3128 = vpack.c.b16 %v3114, %v3113
      %v3129 = vpack.c.b16 %v3116, %v3115
      %v3130 = vpack.c.b16 %v3118, %v3117
      %v3131 = vpack.c.b16 %v3120, %v3119
      %v3132 = vpack.c.b16 %v3122, %v3121
      %v3133 = vpack.c.b16 %v3124, %v3123
      %v3134 = vpack.c.b16 %v3126, %v3125
      %3143 = vmatprep.subr.bf16.mxu0 0
      %3144 = vmatpush1.bf16.msra.mxu0 %v3127
      %3145 = vmatprep.subr.bf16.mxu0 0
      %3146 = vmatpush1.bf16.msra.mxu0 %v3128
      %3147 = vmatprep.subr.bf16.mxu0 0
      %3148 = vmatpush1.bf16.msra.mxu0 %v3129
      %3149 = vmatprep.subr.bf16.mxu0 0
      %3150 = vmatpush1.bf16.msra.mxu0 %v3130
      %3151 = vmatprep.subr.bf16.mxu0 0
      %3152 = vmatpush1.bf16.msra.mxu0 %v3131
      %3153 = vmatprep.subr.bf16.mxu0 0
      %3154 = vmatpush1.bf16.msra.mxu0 %v3132
      %3155 = vmatprep.subr.bf16.mxu0 0
      %3156 = vmatpush1.bf16.msra.mxu0 %v3133
      %3157 = vmatprep.subr.bf16.mxu0 0
      %3158 = vmatpush1.bf16.msra.mxu0 %v3134
      %3159 = vmatprep.subr.bf16.mxu0 0
      %3160 = vmatpush1.bf16.msra.mxu0 0
      %3161 = vmatprep.subr.bf16.mxu0 0
      %3162 = vmatpush1.bf16.msra.mxu0 0
      %3163 = vmatprep.subr.bf16.mxu0 0
      %3164 = vmatpush1.bf16.msra.mxu0 0
      %3165 = vmatprep.subr.bf16.mxu0 0
      %3166 = vmatpush1.bf16.msra.mxu0 0
      %3167 = vmatprep.subr.bf16.mxu0 0
      %3168 = vmatpush1.bf16.msra.mxu0 0
      %3169 = vmatprep.subr.bf16.mxu0 0
      %3170 = vmatpush1.bf16.msra.mxu0 0
      %3171 = vmatprep.subr.bf16.mxu0 0
      %3172 = vmatpush1.bf16.msra.mxu0 0
      %3173 = vmatprep.subr.bf16.mxu0 0
      %3174 = vmatpush1.bf16.msra.mxu0 0
      %3175 = vmatprep.mubr.bf16.mxu0 0
      %3176 = vmatmul.mubr.bf16.gmra.mrb[0].mxu0 %v3054
      %v3177 = vpop.f32.mrb[0].mxu0
      %v3178 = vadd.f32 %v3093, %v3177
      %v3179 = vpop.f32.mrb[0].mxu0
      %v3180 = vpop.f32.mrb[0].mxu0
      %v3181 = vadd.f32 %v3093, %v3180
      %v3182 = vpop.f32.mrb[0].mxu0
      %3183 = vmatprep.mubr.bf16.mxu0 0
      %3184 = vmatmul.mubr.bf16.gmra.mrb[0].mxu0 %v3055
      %v3185 = vpop.f32.mrb[0].mxu0
      %v3186 = vadd.f32 %v3093, %v3185
      %v3187 = vpop.f32.mrb[0].mxu0
      %v3188 = vpop.f32.mrb[0].mxu0
      %v3189 = vadd.f32 %v3093, %v3188
      %v3190 = vpop.f32.mrb[0].mxu0
      %3191 = vmatprep.mubr.bf16.mxu0 0
      %3192 = vmatmul.mubr.bf16.gmra.mrb[0].mxu0 %v3056
      %v3193 = vpop.f32.mrb[0].mxu0
      %v3194 = vadd.f32 %v3093, %v3193
      %v3195 = vpop.f32.mrb[0].mxu0
      %v3196 = vpop.f32.mrb[0].mxu0
      %v3197 = vadd.f32 %v3093, %v3196
      %v3198 = vpop.f32.mrb[0].mxu0
      %3199 = vmatprep.mubr.bf16.mxu0 0
      %3200 = vmatmul.mubr.bf16.gmra.mrb[0].mxu0 %v3057
      %v3201 = vpop.f32.mrb[0].mxu0
      %v3202 = vadd.f32 %v3093, %v3201
      %v3203 = vpop.f32.mrb[0].mxu0
      %v3204 = vpop.f32.mrb[0].mxu0
      %v3205 = vadd.f32 %v3093, %v3204
      %v3206 = vpop.f32.mrb[0].mxu0
      %3207 = vmatprep.mubr.bf16.mxu0 0
      %3208 = vmatmul.mubr.bf16.gmra.mrb[0].mxu0 %v3058
      %v3209 = vpop.f32.mrb[0].mxu0
      %v3210 = vadd.f32 %v3093, %v3209
      %v3211 = vpop.f32.mrb[0].mxu0
      %v3212 = vpop.f32.mrb[0].mxu0
      %v3213 = vadd.f32 %v3093, %v3212
      %v3214 = vpop.f32.mrb[0].mxu0
      %3215 = vmatprep.mubr.bf16.mxu0 0
      %3216 = vmatmul.mubr.bf16.gmra.mrb[0].mxu0 %v3059
      %v3217 = vpop.f32.mrb[0].mxu0
      %v3218 = vadd.f32 %v3093, %v3217
      %v3219 = vpop.f32.mrb[0].mxu0
      %v3220 = vpop.f32.mrb[0].mxu0
      %v3221 = vadd.f32 %v3093, %v3220
      %v3222 = vpop.f32.mrb[0].mxu0
      %3223 = vmatprep.mubr.bf16.mxu0 0
      %3224 = vmatmul.mubr.bf16.gmra.mrb[0].mxu0 %v3060
      %v3225 = vpop.f32.mrb[0].mxu0
      %v3226 = vadd.f32 %v3093, %v3225
      %v3227 = vpop.f32.mrb[0].mxu0
      %v3228 = vpop.f32.mrb[0].mxu0
      %v3229 = vadd.f32 %v3093, %v3228
      %v3230 = vpop.f32.mrb[0].mxu0
      %3231 = vmatprep.mubr.bf16.mxu0 0
      %3232 = vmatmul.mubr.bf16.gmra.mrb[0].mxu0 %v3061
      %v3233 = vpop.f32.mrb[0].mxu0
      %v3234 = vadd.f32 %v3093, %v3233
      %v3235 = vpop.f32.mrb[0].mxu0
      %v3236 = vpop.f32.mrb[0].mxu0
      %v3237 = vadd.f32 %v3093, %v3236
      %v3238 = vpop.f32.mrb[0].mxu0
      %3239 = vmatprep.mubr.bf16.mxu0 0
      %3240 = vmatmul.mubr.bf16.gmra.mrb[0].mxu0 %v3062
      %v3241 = vpop.f32.mrb[0].mxu0
      %v3242 = vadd.f32 %v3093, %v3241
      %v3243 = vpop.f32.mrb[0].mxu0
      %v3244 = vpop.f32.mrb[0].mxu0
      %v3245 = vadd.f32 %v3093, %v3244
      %v3246 = vpop.f32.mrb[0].mxu0
      %3247 = vmatprep.mubr.bf16.mxu0 0
      %3248 = vmatmul.mubr.bf16.gmra.mrb[0].mxu0 %v3063
      %v3249 = vpop.f32.mrb[0].mxu0
      %v3250 = vadd.f32 %v3093, %v3249
      %v3251 = vpop.f32.mrb[0].mxu0
      %v3252 = vpop.f32.mrb[0].mxu0
      %v3253 = vadd.f32 %v3093, %v3252
      %v3254 = vpop.f32.mrb[0].mxu0
      %3255 = vmatprep.mubr.bf16.mxu0 0
      %3256 = vmatmul.mubr.bf16.gmra.mrb[0].mxu0 %v3064
      %v3257 = vpop.f32.mrb[0].mxu0
      %v3258 = vadd.f32 %v3093, %v3257
      %v3259 = vpop.f32.mrb[0].mxu0
      %v3260 = vpop.f32.mrb[0].mxu0
      %v3261 = vadd.f32 %v3093, %v3260
      %v3262 = vpop.f32.mrb[0].mxu0
      %3263 = vmatprep.mubr.bf16.mxu0 0
      %3264 = vmatmul.mubr.bf16.gmra.mrb[0].mxu0 %v3065
      %v3265 = vpop.f32.mrb[0].mxu0
      %v3266 = vadd.f32 %v3093, %v3265
      %v3267 = vpop.f32.mrb[0].mxu0
      %v3268 = vpop.f32.mrb[0].mxu0
      %v3269 = vadd.f32 %v3093, %v3268
      %v3270 = vpop.f32.mrb[0].mxu0
      %3271 = vmatprep.mubr.bf16.mxu0 0
      %3272 = vmatmul.mubr.bf16.gmra.mrb[0].mxu0 %v3066
      %v3273 = vpop.f32.mrb[0].mxu0
      %v3274 = vadd.f32 %v3093, %v3273
      %v3275 = vpop.f32.mrb[0].mxu0
      %v3276 = vpop.f32.mrb[0].mxu0
      %v3277 = vadd.f32 %v3093, %v3276
      %v3278 = vpop.f32.mrb[0].mxu0
      %3279 = vmatprep.mubr.bf16.mxu0 0
      %3280 = vmatmul.mubr.bf16.gmra.mrb[0].mxu0 %v3067
      %v3281 = vpop.f32.mrb[0].mxu0
      %v3282 = vadd.f32 %v3093, %v3281
      %v3283 = vpop.f32.mrb[0].mxu0
      %v3284 = vpop.f32.mrb[0].mxu0
      %v3285 = vadd.f32 %v3093, %v3284
      %v3286 = vpop.f32.mrb[0].mxu0
      %3287 = vmatprep.mubr.bf16.mxu0 0
      %3288 = vmatmul.mubr.bf16.gmra.mrb[0].mxu0 %v3068
      %v3289 = vpop.f32.mrb[0].mxu0
      %v3290 = vadd.f32 %v3093, %v3289
      %v3291 = vpop.f32.mrb[0].mxu0
      %v3292 = vpop.f32.mrb[0].mxu0
      %v3293 = vadd.f32 %v3093, %v3292
      %v3294 = vpop.f32.mrb[0].mxu0
      %3295 = vmatprep.mubr.bf16.mxu0 0
      %3296 = vmatmul.mubr.bf16.gmra.mrb[0].mxu0 %v3069
      %v3297 = vpop.f32.mrb[0].mxu0
      %v3298 = vadd.f32 %v3093, %v3297
      %v3299 = vpop.f32.mrb[0].mxu0
      %v3300 = vpop.f32.mrb[0].mxu0
      %v3301 = vadd.f32 %v3093, %v3300
      %v3302 = vpop.f32.mrb[0].mxu0
      %3303 = vdwg.mxu0
      %v3304 = vmax.f32 %v3178, 0.0
      %v3305 = vmax.f32 %v3181, 0.0
      %v3306 = vmax.f32 %v3186, 0.0
      %v3307 = vmax.f32 %v3189, 0.0
      %v3308 = vmax.f32 %v3194, 0.0
      %v3309 = vmax.f32 %v3197, 0.0
      %v3310 = vmax.f32 %v3202, 0.0
      %v3311 = vmax.f32 %v3205, 0.0
      %v3312 = vmax.f32 %v3210, 0.0
      %v3313 = vmax.f32 %v3213, 0.0
      %v3314 = vmax.f32 %v3218, 0.0
      %v3315 = vmax.f32 %v3221, 0.0
      %v3316 = vmax.f32 %v3226, 0.0
      %v3317 = vmax.f32 %v3229, 0.0
      %v3318 = vmax.f32 %v3234, 0.0
      %v3319 = vmax.f32 %v3237, 0.0
      %v3320 = vmax.f32 %v3242, 0.0
      %v3321 = vmax.f32 %v3245, 0.0
      %v3322 = vmax.f32 %v3250, 0.0
      %v3323 = vmax.f32 %v3253, 0.0
      %v3324 = vmax.f32 %v3258, 0.0
      %v3325 = vmax.f32 %v3261, 0.0
      %v3326 = vmax.f32 %v3266, 0.0
      %v3327 = vmax.f32 %v3269, 0.0
      %v3328 = vmax.f32 %v3274, 0.0
      %v3329 = vmax.f32 %v3277, 0.0
      %v3330 = vmax.f32 %v3282, 0.0
      %v3331 = vmax.f32 %v3285, 0.0
      %v3332 = vmax.f32 %v3290, 0.0
      %v3333 = vmax.f32 %v3293, 0.0
      %v3334 = vmax.f32 %v3298, 0.0
      %v3335 = vmax.f32 %v3301, 0.0
      %v3336 = vpack.c.bf16 %v3305, %v3304
      %v3337 = vpack.c.bf16 %v3307, %v3306
      %v3338 = vpack.c.bf16 %v3309, %v3308
      %v3339 = vpack.c.bf16 %v3311, %v3310
      %v3340 = vpack.c.bf16 %v3313, %v3312
      %v3341 = vpack.c.bf16 %v3315, %v3314
      %v3342 = vpack.c.bf16 %v3317, %v3316
      %v3343 = vpack.c.bf16 %v3319, %v3318
      %v3344 = vpack.c.bf16 %v3321, %v3320
      %v3345 = vpack.c.bf16 %v3323, %v3322
      %v3346 = vpack.c.bf16 %v3325, %v3324
      %v3347 = vpack.c.bf16 %v3327, %v3326
      %v3348 = vpack.c.bf16 %v3329, %v3328
      %v3349 = vpack.c.bf16 %v3331, %v3330
      %v3350 = vpack.c.bf16 %v3333, %v3332
      %v3351 = vpack.c.bf16 %v3335, %v3334
      %v3352 = vunpack.c.l.bf16 %v3336
      %v3353 = vunpack.c.h.bf16 %v3336
      %v3354 = vunpack.c.l.bf16 %v3337
      %v3355 = vunpack.c.h.bf16 %v3337
      %v3356 = vunpack.c.l.bf16 %v3338
      %v3357 = vunpack.c.h.bf16 %v3338
      %v3358 = vunpack.c.l.bf16 %v3339
      %v3359 = vunpack.c.h.bf16 %v3339
      %v3360 = vunpack.c.l.bf16 %v3340
      %v3361 = vunpack.c.h.bf16 %v3340
      %v3362 = vunpack.c.l.bf16 %v3341
      %v3363 = vunpack.c.h.bf16 %v3341
      %v3364 = vunpack.c.l.bf16 %v3342
      %v3365 = vunpack.c.h.bf16 %v3342
      %v3366 = vunpack.c.l.bf16 %v3343
      %v3367 = vunpack.c.h.bf16 %v3343
      %v3368 = vunpack.c.l.bf16 %v3344
      %v3369 = vunpack.c.h.bf16 %v3344
      %v3370 = vunpack.c.l.bf16 %v3345
      %v3371 = vunpack.c.h.bf16 %v3345
      %v3372 = vunpack.c.l.bf16 %v3346
      %v3373 = vunpack.c.h.bf16 %v3346
      %v3374 = vunpack.c.l.bf16 %v3347
      %v3375 = vunpack.c.h.bf16 %v3347
      %v3376 = vunpack.c.l.bf16 %v3348
      %v3377 = vunpack.c.h.bf16 %v3348
      %v3378 = vunpack.c.l.bf16 %v3349
      %v3379 = vunpack.c.h.bf16 %v3349
      %v3380 = vunpack.c.l.bf16 %v3350
      %v3381 = vunpack.c.h.bf16 %v3350
      %v3382 = vunpack.c.l.bf16 %v3351
      %v3383 = vunpack.c.h.bf16 %v3351
      %v3384 = vadd.f32 %v3352, %v3353
      %v3385 = vrot.slane %v3384, 4
      %v3386 = vadd.f32 %v3384, %v3385
      %v3387 = vrot.slane %v3386, 2
      %v3388 = vadd.f32 %v3386, %v3387
      %v3389 = vrot.slane %v3388, 1
      %v3390 = vadd.f32 %v3388, %v3389
      %v3391 = vadd.f32 %v3354, %v3355
      %v3392 = vrot.slane %v3391, 4
      %v3393 = vadd.f32 %v3391, %v3392
      %v3394 = vrot.slane %v3393, 2
      %v3395 = vadd.f32 %v3393, %v3394
      %v3396 = vrot.slane %v3395, 1
      %v3397 = vadd.f32 %v3395, %v3396
      %v3398 = vadd.f32 %v3356, %v3357
      %v3399 = vrot.slane %v3398, 4
      %v3400 = vadd.f32 %v3398, %v3399
      %v3401 = vrot.slane %v3400, 2
      %v3402 = vadd.f32 %v3400, %v3401
      %v3403 = vrot.slane %v3402, 1
      %v3404 = vadd.f32 %v3402, %v3403
      %v3405 = vadd.f32 %v3358, %v3359
      %v3406 = vrot.slane %v3405, 4
      %v3407 = vadd.f32 %v3405, %v3406
      %v3408 = vrot.slane %v3407, 2
      %v3409 = vadd.f32 %v3407, %v3408
      %v3410 = vrot.slane %v3409, 1
      %v3411 = vadd.f32 %v3409, %v3410
      %v3412 = vadd.f32 %v3360, %v3361
      %v3413 = vrot.slane %v3412, 4
      %v3414 = vadd.f32 %v3412, %v3413
      %v3415 = vrot.slane %v3414, 2
      %v3416 = vadd.f32 %v3414, %v3415
      %v3417 = vrot.slane %v3416, 1
      %v3418 = vadd.f32 %v3416, %v3417
      %v3419 = vadd.f32 %v3362, %v3363
      %v3420 = vrot.slane %v3419, 4
      %v3421 = vadd.f32 %v3419, %v3420
      %v3422 = vrot.slane %v3421, 2
      %v3423 = vadd.f32 %v3421, %v3422
      %v3424 = vrot.slane %v3423, 1
      %v3425 = vadd.f32 %v3423, %v3424
      %v3426 = vadd.f32 %v3364, %v3365
      %v3427 = vrot.slane %v3426, 4
      %v3428 = vadd.f32 %v3426, %v3427
      %v3429 = vrot.slane %v3428, 2
      %v3430 = vadd.f32 %v3428, %v3429
      %v3431 = vrot.slane %v3430, 1
      %v3432 = vadd.f32 %v3430, %v3431
      %v3433 = vadd.f32 %v3366, %v3367
      %v3434 = vrot.slane %v3433, 4
      %v3435 = vadd.f32 %v3433, %v3434
      %v3436 = vrot.slane %v3435, 2
      %v3437 = vadd.f32 %v3435, %v3436
      %v3438 = vrot.slane %v3437, 1
      %v3439 = vadd.f32 %v3437, %v3438
      %v3440 = vadd.f32 %v3368, %v3369
      %v3441 = vrot.slane %v3440, 4
      %v3442 = vadd.f32 %v3440, %v3441
      %v3443 = vrot.slane %v3442, 2
      %v3444 = vadd.f32 %v3442, %v3443
      %v3445 = vrot.slane %v3444, 1
      %v3446 = vadd.f32 %v3444, %v3445
      %v3447 = vadd.f32 %v3370, %v3371
      %v3448 = vrot.slane %v3447, 4
      %v3449 = vadd.f32 %v3447, %v3448
      %v3450 = vrot.slane %v3449, 2
      %v3451 = vadd.f32 %v3449, %v3450
      %v3452 = vrot.slane %v3451, 1
      %v3453 = vadd.f32 %v3451, %v3452
      %v3454 = vadd.f32 %v3372, %v3373
      %v3455 = vrot.slane %v3454, 4
      %v3456 = vadd.f32 %v3454, %v3455
      %v3457 = vrot.slane %v3456, 2
      %v3458 = vadd.f32 %v3456, %v3457
      %v3459 = vrot.slane %v3458, 1
      %v3460 = vadd.f32 %v3458, %v3459
      %v3461 = vadd.f32 %v3374, %v3375
      %v3462 = vrot.slane %v3461, 4
      %v3463 = vadd.f32 %v3461, %v3462
      %v3464 = vrot.slane %v3463, 2
      %v3465 = vadd.f32 %v3463, %v3464
      %v3466 = vrot.slane %v3465, 1
      %v3467 = vadd.f32 %v3465, %v3466
      %v3468 = vadd.f32 %v3376, %v3377
      %v3469 = vrot.slane %v3468, 4
      %v3470 = vadd.f32 %v3468, %v3469
      %v3471 = vrot.slane %v3470, 2
      %v3472 = vadd.f32 %v3470, %v3471
      %v3473 = vrot.slane %v3472, 1
      %v3474 = vadd.f32 %v3472, %v3473
      %v3475 = vadd.f32 %v3378, %v3379
      %v3476 = vrot.slane %v3475, 4
      %v3477 = vadd.f32 %v3475, %v3476
      %v3478 = vrot.slane %v3477, 2
      %v3479 = vadd.f32 %v3477, %v3478
      %v3480 = vrot.slane %v3479, 1
      %v3481 = vadd.f32 %v3479, %v3480
      %v3482 = vadd.f32 %v3380, %v3381
      %v3483 = vrot.slane %v3482, 4
      %v3484 = vadd.f32 %v3482, %v3483
      %v3485 = vrot.slane %v3484, 2
      %v3486 = vadd.f32 %v3484, %v3485
      %v3487 = vrot.slane %v3486, 1
      %v3488 = vadd.f32 %v3486, %v3487
      %v3489 = vadd.f32 %v3382, %v3383
      %v3490 = vrot.slane %v3489, 4
      %v3491 = vadd.f32 %v3489, %v3490
      %v3492 = vrot.slane %v3491, 2
      %v3493 = vadd.f32 %v3491, %v3492
      %v3494 = vrot.slane %v3493, 1
      %v3495 = vadd.f32 %v3493, %v3494
      %v3496 = vpack.c.bf16 %v3390, %v3390
      %v3497 = vpack.c.bf16 %v3397, %v3397
      %v3498 = vpack.c.bf16 %v3404, %v3404
      %v3499 = vpack.c.bf16 %v3411, %v3411
      %v3500 = vpack.c.bf16 %v3418, %v3418
      %v3501 = vpack.c.bf16 %v3425, %v3425
      %v3502 = vpack.c.bf16 %v3432, %v3432
      %v3503 = vpack.c.bf16 %v3439, %v3439
      %v3504 = vpack.c.bf16 %v3446, %v3446
      %v3505 = vpack.c.bf16 %v3453, %v3453
      %v3506 = vpack.c.bf16 %v3460, %v3460
      %v3507 = vpack.c.bf16 %v3467, %v3467
      %v3508 = vpack.c.bf16 %v3474, %v3474
      %v3509 = vpack.c.bf16 %v3481, %v3481
      %v3510 = vpack.c.bf16 %v3488, %v3488
      %v3511 = vpack.c.bf16 %v3495, %v3495
      %v3512 = vld [vmem:[%s6] sm:$0xf]
      %v3513 = vld [vmem:[%s6 + $0x4] sm:$0xf]
      %v3514 = vld [vmem:[%s6 + $0x8] sm:$0xf]
      %v3515 = vld [vmem:[%s6 + $0xc] sm:$0xf]
      %v3516 = vld [vmem:[%s6 + $0x10] sm:$0xf]
      %v3517 = vld [vmem:[%s6 + $0x14] sm:$0xf]
      %v3518 = vld [vmem:[%s6 + $0x18] sm:$0xf]
      %v3519 = vld [vmem:[%s6 + $0x1c] sm:$0xf]
      %v3520 = vld [vmem:[%s6 + $0x20] sm:$0xf]
      %v3521 = vld [vmem:[%s6 + $0x24] sm:$0xf]
      %v3522 = vld [vmem:[%s6 + $0x28] sm:$0xf]
      %v3523 = vld [vmem:[%s6 + $0x2c] sm:$0xf]
      %v3524 = vld [vmem:[%s6 + $0x30] sm:$0xf]
      %v3525 = vld [vmem:[%s6 + $0x34] sm:$0xf]
      %v3526 = vld [vmem:[%s6 + $0x38] sm:$0xf]
      %v3527 = vld [vmem:[%s6 + $0x3c] sm:$0xf]
      %v3528 = vld [vmem:[%s7] sm:$0x1]
      %v3530 = vlaneseq
      %v3531 = vshrl.u32 %v3530, 7
      %v3532 = vsub.s32 0, %v3531
      %v3533 = vrot.slane %v3528, %v3532
      %v3551 = vunpack.c.l.b16 %v3496
      %v3552 = vunpack.c.l.b16 %v3497
      %v3553 = vunpack.c.l.b16 %v3498
      %v3554 = vunpack.c.l.b16 %v3499
      %v3555 = vunpack.c.l.b16 %v3500
      %v3556 = vunpack.c.l.b16 %v3501
      %v3557 = vunpack.c.l.b16 %v3502
      %v3558 = vunpack.c.l.b16 %v3503
      %v3559 = vunpack.c.l.b16 %v3504
      %v3560 = vunpack.c.l.b16 %v3505
      %v3561 = vunpack.c.l.b16 %v3506
      %v3562 = vunpack.c.l.b16 %v3507
      %v3563 = vunpack.c.l.b16 %v3508
      %v3564 = vunpack.c.l.b16 %v3509
      %v3565 = vunpack.c.l.b16 %v3510
      %v3566 = vunpack.c.l.b16 %v3511
      %vm3567 = vcmask 1041409
      %v3568 = vsel %vm3567, %v3552, %v3551
      %vm3569 = vcmask 1042434
      %v3570 = vsel %vm3569, %v3553, %v3568
      %vm3571 = vcmask 1043459
      %v3572 = vsel %vm3571, %v3554, %v3570
      %vm3573 = vcmask 1044484
      %v3574 = vsel %vm3573, %v3555, %v3572
      %vm3575 = vcmask 1045509
      %v3576 = vsel %vm3575, %v3556, %v3574
      %vm3577 = vcmask 1046534
      %v3578 = vsel %vm3577, %v3557, %v3576
      %vm3579 = vcmask 1047559
      %v3580 = vsel %vm3579, %v3558, %v3578
      %v3581 = vsel %vm3567, %v3560, %v3559
      %v3582 = vsel %vm3569, %v3561, %v3581
      %v3583 = vsel %vm3571, %v3562, %v3582
      %v3584 = vsel %vm3573, %v3563, %v3583
      %v3585 = vsel %vm3575, %v3564, %v3584
      %v3586 = vsel %vm3577, %v3565, %v3585
      %v3587 = vsel %vm3579, %v3566, %v3586
      %v3588 = vpack.c.b16 %v3587, %v3580
      %v3606 = vunpack.c.l.b16 %v3512
      %v3607 = vunpack.c.l.b16 %v3513
      %v3608 = vunpack.c.l.b16 %v3514
      %v3609 = vunpack.c.l.b16 %v3515
      %v3610 = vunpack.c.l.b16 %v3516
      %v3611 = vunpack.c.l.b16 %v3517
      %v3612 = vunpack.c.l.b16 %v3518
      %v3613 = vunpack.c.l.b16 %v3519
      %v3614 = vunpack.c.l.b16 %v3520
      %v3615 = vunpack.c.l.b16 %v3521
      %v3616 = vunpack.c.l.b16 %v3522
      %v3617 = vunpack.c.l.b16 %v3523
      %v3618 = vunpack.c.l.b16 %v3524
      %v3619 = vunpack.c.l.b16 %v3525
      %v3620 = vunpack.c.l.b16 %v3526
      %v3621 = vunpack.c.l.b16 %v3527
      %v3622 = vpack.c.b16 %v3607, %v3606
      %v3623 = vpack.c.b16 %v3609, %v3608
      %v3624 = vpack.c.b16 %v3611, %v3610
      %v3625 = vpack.c.b16 %v3613, %v3612
      %v3626 = vpack.c.b16 %v3615, %v3614
      %v3627 = vpack.c.b16 %v3617, %v3616
      %v3628 = vpack.c.b16 %v3619, %v3618
      %v3629 = vpack.c.b16 %v3621, %v3620
      %3638 = vmatprep.subr.bf16.mxu0 0
      %3639 = vmatpush1.bf16.msra.mxu0 %v3622
      %3640 = vmatprep.subr.bf16.mxu0 0
      %3641 = vmatpush1.bf16.msra.mxu0 %v3623
      %3642 = vmatprep.subr.bf16.mxu0 0
      %3643 = vmatpush1.bf16.msra.mxu0 %v3624
      %3644 = vmatprep.subr.bf16.mxu0 0
      %3645 = vmatpush1.bf16.msra.mxu0 %v3625
      %3646 = vmatprep.subr.bf16.mxu0 0
      %3647 = vmatpush1.bf16.msra.mxu0 %v3626
      %3648 = vmatprep.subr.bf16.mxu0 0
      %3649 = vmatpush1.bf16.msra.mxu0 %v3627
      %3650 = vmatprep.subr.bf16.mxu0 0
      %3651 = vmatpush1.bf16.msra.mxu0 %v3628
      %3652 = vmatprep.subr.bf16.mxu0 0
      %3653 = vmatpush1.bf16.msra.mxu0 %v3629
      %3654 = vmatprep.subr.bf16.mxu0 0
      %3655 = vmatpush1.bf16.msra.mxu0 0
      %3656 = vmatprep.subr.bf16.mxu0 0
      %3657 = vmatpush1.bf16.msra.mxu0 0
      %3658 = vmatprep.subr.bf16.mxu0 0
      %3659 = vmatpush1.bf16.msra.mxu0 0
      %3660 = vmatprep.subr.bf16.mxu0 0
      %3661 = vmatpush1.bf16.msra.mxu0 0
      %3662 = vmatprep.subr.bf16.mxu0 0
      %3663 = vmatpush1.bf16.msra.mxu0 0
      %3664 = vmatprep.subr.bf16.mxu0 0
      %3665 = vmatpush1.bf16.msra.mxu0 0
      %3666 = vmatprep.subr.bf16.mxu0 0
      %3667 = vmatpush1.bf16.msra.mxu0 0
      %3668 = vmatprep.subr.bf16.mxu0 0
      %3669 = vmatpush1.bf16.msra.mxu0 0
      %3670 = vmatprep.mubr.bf16.mxu0 0
      %3671 = vmatmul.mubr.bf16.gmra.mrb[0].mxu0 %v3588
      %v3672 = vpop.f32.mrb[0].mxu0
      %v3673 = vadd.f32 %v3533, %v3672
      %v3674 = vpop.f32.mrb[0].mxu0
      %v3675 = vpop.f32.mrb[0].mxu0
      %v3676 = vadd.f32 %v3533, %v3675
      %v3677 = vpop.f32.mrb[0].mxu0
      %3678 = vdwg.mxu0
      %v3679 = vpack.c.bf16 %v3673, %v3673
      %v3680 = vpack.c.bf16 %v3676, %v3676
      %v3681 = vld [vmem:[%s8] sm:$0xf]
      %v3682 = vld [vmem:[%s8 + $0x4] sm:$0xf]
      %v3683 = vld [vmem:[%s8 + $0x8] sm:$0xf]
      %v3684 = vld [vmem:[%s8 + $0xc] sm:$0xf]
      %v3685 = vld [vmem:[%s8 + $0x10] sm:$0xf]
      %v3686 = vld [vmem:[%s8 + $0x14] sm:$0xf]
      %v3687 = vld [vmem:[%s8 + $0x18] sm:$0xf]
      %v3688 = vld [vmem:[%s8 + $0x1c] sm:$0xf]
      %v3689 = vld [vmem:[%s8 + $0x20] sm:$0xf]
      %v3690 = vld [vmem:[%s8 + $0x24] sm:$0xf]
      %v3691 = vld [vmem:[%s8 + $0x28] sm:$0xf]
      %v3692 = vld [vmem:[%s8 + $0x2c] sm:$0xf]
      %v3693 = vld [vmem:[%s8 + $0x30] sm:$0xf]
      %v3694 = vld [vmem:[%s8 + $0x34] sm:$0xf]
      %v3695 = vld [vmem:[%s8 + $0x38] sm:$0xf]
      %v3696 = vld [vmem:[%s8 + $0x3c] sm:$0xf]
      %v3697 = vld [vmem:[%s9] sm:$0xf]
      %v3698 = vld [vmem:[%s9 + $0x4] sm:$0xf]
      %v3699 = vld [vmem:[%s9 + $0x8] sm:$0xf]
      %v3700 = vld [vmem:[%s9 + $0xc] sm:$0xf]
      %v3701 = vld [vmem:[%s9 + $0x10] sm:$0xf]
      %v3702 = vld [vmem:[%s9 + $0x14] sm:$0xf]
      %v3703 = vld [vmem:[%s9 + $0x18] sm:$0xf]
      %v3704 = vld [vmem:[%s9 + $0x1c] sm:$0xf]
      %v3705 = vld [vmem:[%s9 + $0x20] sm:$0xf]
      %v3706 = vld [vmem:[%s9 + $0x24] sm:$0xf]
      %v3707 = vld [vmem:[%s9 + $0x28] sm:$0xf]
      %v3708 = vld [vmem:[%s9 + $0x2c] sm:$0xf]
      %v3709 = vld [vmem:[%s9 + $0x30] sm:$0xf]
      %v3710 = vld [vmem:[%s9 + $0x34] sm:$0xf]
      %v3711 = vld [vmem:[%s9 + $0x38] sm:$0xf]
      %v3712 = vld [vmem:[%s9 + $0x3c] sm:$0xf]
      %v3729 = vunpack.c.l.b16 %v3697
      %v3730 = vunpack.c.l.b16 %v3698
      %v3731 = vunpack.c.l.b16 %v3699
      %v3732 = vunpack.c.l.b16 %v3700
      %v3733 = vunpack.c.l.b16 %v3701
      %v3734 = vunpack.c.l.b16 %v3702
      %v3735 = vunpack.c.l.b16 %v3703
      %v3736 = vunpack.c.l.b16 %v3704
      %v3737 = vunpack.c.l.b16 %v3705
      %v3738 = vunpack.c.l.b16 %v3706
      %v3739 = vunpack.c.l.b16 %v3707
      %v3740 = vunpack.c.l.b16 %v3708
      %v3741 = vunpack.c.l.b16 %v3709
      %v3742 = vunpack.c.l.b16 %v3710
      %v3743 = vunpack.c.l.b16 %v3711
      %v3744 = vunpack.c.l.b16 %v3712
      %v3745 = vpack.c.b16 %v3730, %v3729
      %v3746 = vpack.c.b16 %v3732, %v3731
      %v3747 = vpack.c.b16 %v3734, %v3733
      %v3748 = vpack.c.b16 %v3736, %v3735
      %v3749 = vpack.c.b16 %v3738, %v3737
      %v3750 = vpack.c.b16 %v3740, %v3739
      %v3751 = vpack.c.b16 %v3742, %v3741
      %v3752 = vpack.c.b16 %v3744, %v3743
      %3761 = vmatprep.subr.bf16.mxu0 0
      %3762 = vmatpush1.bf16.msra.mxu0 %v3745
      %3763 = vmatprep.subr.bf16.mxu0 0
      %3764 = vmatpush1.bf16.msra.mxu0 %v3746
      %3765 = vmatprep.subr.bf16.mxu0 0
      %3766 = vmatpush1.bf16.msra.mxu0 %v3747
      %3767 = vmatprep.subr.bf16.mxu0 0
      %3768 = vmatpush1.bf16.msra.mxu0 %v3748
      %3769 = vmatprep.subr.bf16.mxu0 0
      %3770 = vmatpush1.bf16.msra.mxu0 %v3749
      %3771 = vmatprep.subr.bf16.mxu0 0
      %3772 = vmatpush1.bf16.msra.mxu0 %v3750
      %3773 = vmatprep.subr.bf16.mxu0 0
      %3774 = vmatpush1.bf16.msra.mxu0 %v3751
      %3775 = vmatprep.subr.bf16.mxu0 0
      %3776 = vmatpush1.bf16.msra.mxu0 %v3752
      %3777 = vmatprep.subr.bf16.mxu0 0
      %3778 = vmatpush1.bf16.msra.mxu0 0
      %3779 = vmatprep.subr.bf16.mxu0 0
      %3780 = vmatpush1.bf16.msra.mxu0 0
      %3781 = vmatprep.subr.bf16.mxu0 0
      %3782 = vmatpush1.bf16.msra.mxu0 0
      %3783 = vmatprep.subr.bf16.mxu0 0
      %3784 = vmatpush1.bf16.msra.mxu0 0
      %3785 = vmatprep.subr.bf16.mxu0 0
      %3786 = vmatpush1.bf16.msra.mxu0 0
      %3787 = vmatprep.subr.bf16.mxu0 0
      %3788 = vmatpush1.bf16.msra.mxu0 0
      %3789 = vmatprep.subr.bf16.mxu0 0
      %3790 = vmatpush1.bf16.msra.mxu0 0
      %3791 = vmatprep.subr.bf16.mxu0 0
      %3792 = vmatpush1.bf16.msra.mxu0 0
      %3793 = vmatprep.mubr.bf16.mxu0 0
      %3794 = vmatmul.mubr.bf16.gmra.mrb[0].mxu0 %v3680
      %v3795 = vpop.f32.mrb[0].mxu0
      %v3796 = vadd.f32 0.0, %v3795
      %v3797 = vpop.f32.mrb[0].mxu0
      %v3798 = vpop.f32.mrb[0].mxu0
      %v3799 = vpop.f32.mrb[0].mxu0
      %3800 = vdwg.mxu0
      %v3817 = vunpack.c.l.b16 %v3681
      %v3818 = vunpack.c.l.b16 %v3682
      %v3819 = vunpack.c.l.b16 %v3683
      %v3820 = vunpack.c.l.b16 %v3684
      %v3821 = vunpack.c.l.b16 %v3685
      %v3822 = vunpack.c.l.b16 %v3686
      %v3823 = vunpack.c.l.b16 %v3687
      %v3824 = vunpack.c.l.b16 %v3688
      %v3825 = vunpack.c.l.b16 %v3689
      %v3826 = vunpack.c.l.b16 %v3690
      %v3827 = vunpack.c.l.b16 %v3691
      %v3828 = vunpack.c.l.b16 %v3692
      %v3829 = vunpack.c.l.b16 %v3693
      %v3830 = vunpack.c.l.b16 %v3694
      %v3831 = vunpack.c.l.b16 %v3695
      %v3832 = vunpack.c.l.b16 %v3696
      %v3833 = vpack.c.b16 %v3818, %v3817
      %v3834 = vpack.c.b16 %v3820, %v3819
      %v3835 = vpack.c.b16 %v3822, %v3821
      %v3836 = vpack.c.b16 %v3824, %v3823
      %v3837 = vpack.c.b16 %v3826, %v3825
      %v3838 = vpack.c.b16 %v3828, %v3827
      %v3839 = vpack.c.b16 %v3830, %v3829
      %v3840 = vpack.c.b16 %v3832, %v3831
      %3849 = vmatprep.subr.bf16.mxu0 0
      %3850 = vmatpush1.bf16.msra.mxu0 %v3833
      %3851 = vmatprep.subr.bf16.mxu0 0
      %3852 = vmatpush1.bf16.msra.mxu0 %v3834
      %3853 = vmatprep.subr.bf16.mxu0 0
      %3854 = vmatpush1.bf16.msra.mxu0 %v3835
      %3855 = vmatprep.subr.bf16.mxu0 0
      %3856 = vmatpush1.bf16.msra.mxu0 %v3836
      %3857 = vmatprep.subr.bf16.mxu0 0
      %3858 = vmatpush1.bf16.msra.mxu0 %v3837
      %3859 = vmatprep.subr.bf16.mxu0 0
      %3860 = vmatpush1.bf16.msra.mxu0 %v3838
      %3861 = vmatprep.subr.bf16.mxu0 0
      %3862 = vmatpush1.bf16.msra.mxu0 %v3839
      %3863 = vmatprep.subr.bf16.mxu0 0
      %3864 = vmatpush1.bf16.msra.mxu0 %v3840
      %3865 = vmatprep.subr.bf16.mxu0 0
      %3866 = vmatpush1.bf16.msra.mxu0 0
      %3867 = vmatprep.subr.bf16.mxu0 0
      %3868 = vmatpush1.bf16.msra.mxu0 0
      %3869 = vmatprep.subr.bf16.mxu0 0
      %3870 = vmatpush1.bf16.msra.mxu0 0
      %3871 = vmatprep.subr.bf16.mxu0 0
      %3872 = vmatpush1.bf16.msra.mxu0 0
      %3873 = vmatprep.subr.bf16.mxu0 0
      %3874 = vmatpush1.bf16.msra.mxu0 0
      %3875 = vmatprep.subr.bf16.mxu0 0
      %3876 = vmatpush1.bf16.msra.mxu0 0
      %3877 = vmatprep.subr.bf16.mxu0 0
      %3878 = vmatpush1.bf16.msra.mxu0 0
      %3879 = vmatprep.subr.bf16.mxu0 0
      %3880 = vmatpush1.bf16.msra.mxu0 0
      %3881 = vmatprep.mubr.bf16.mxu0 0
      %3882 = vmatmul.mubr.bf16.gmra.mrb[0].mxu0 %v3679
      %v3883 = vpop.f32.mrb[0].mxu0
      %v3884 = vadd.f32 %v3796, %v3883
      %v3885 = vpop.f32.mrb[0].mxu0
      %v3886 = vpop.f32.mrb[0].mxu0
      %v3887 = vpop.f32.mrb[0].mxu0
      %3888 = vdwg.mxu0
      %v3889 = vld [vmem:[%s10] sm:$0x1]
      %v3891 = vlaneseq
      %v3892 = vshrl.u32 %v3891, 7
      %v3893 = vsub.s32 0, %v3892
      %v3894 = vrot.slane %v3889, %v3893
      %v3896 = vadd.f32 %v3884, %v3894
      %v3897 = vmax.f32 %v3896, 0.0
      %v3898 = vpack.c.bf16 %v3897, %v3897
      %v3899 = vld [vmem:[%s11] sm:$0xf]
      %v3900 = vld [vmem:[%s11 + $0x4] sm:$0xf]
      %v3901 = vld [vmem:[%s11 + $0x8] sm:$0xf]
      %v3902 = vld [vmem:[%s11 + $0xc] sm:$0xf]
      %v3903 = vld [vmem:[%s11 + $0x10] sm:$0xf]
      %v3904 = vld [vmem:[%s11 + $0x14] sm:$0xf]
      %v3905 = vld [vmem:[%s11 + $0x18] sm:$0xf]
      %v3906 = vld [vmem:[%s11 + $0x1c] sm:$0xf]
      %v3907 = vld [vmem:[%s11 + $0x20] sm:$0xf]
      %v3908 = vld [vmem:[%s11 + $0x24] sm:$0xf]
      %v3909 = vld [vmem:[%s11 + $0x28] sm:$0xf]
      %v3910 = vld [vmem:[%s11 + $0x2c] sm:$0xf]
      %v3911 = vld [vmem:[%s11 + $0x30] sm:$0xf]
      %v3912 = vld [vmem:[%s11 + $0x34] sm:$0xf]
      %v3913 = vld [vmem:[%s11 + $0x38] sm:$0xf]
      %v3914 = vld [vmem:[%s11 + $0x3c] sm:$0xf]
      %v3915 = vld [vmem:[%s12] sm:$0x1]
      %v3917 = vlaneseq
      %v3918 = vshrl.u32 %v3917, 7
      %v3919 = vsub.s32 0, %v3918
      %v3920 = vrot.slane %v3915, %v3919
      %v3938 = vunpack.c.l.b16 %v3899
      %v3939 = vunpack.c.l.b16 %v3900
      %v3940 = vunpack.c.l.b16 %v3901
      %v3941 = vunpack.c.l.b16 %v3902
      %v3942 = vunpack.c.l.b16 %v3903
      %v3943 = vunpack.c.l.b16 %v3904
      %v3944 = vunpack.c.l.b16 %v3905
      %v3945 = vunpack.c.l.b16 %v3906
      %v3946 = vunpack.c.l.b16 %v3907
      %v3947 = vunpack.c.l.b16 %v3908
      %v3948 = vunpack.c.l.b16 %v3909
      %v3949 = vunpack.c.l.b16 %v3910
      %v3950 = vunpack.c.l.b16 %v3911
      %v3951 = vunpack.c.l.b16 %v3912
      %v3952 = vunpack.c.l.b16 %v3913
      %v3953 = vunpack.c.l.b16 %v3914
      %v3954 = vpack.c.b16 %v3939, %v3938
      %v3955 = vpack.c.b16 %v3941, %v3940
      %v3956 = vpack.c.b16 %v3943, %v3942
      %v3957 = vpack.c.b16 %v3945, %v3944
      %v3958 = vpack.c.b16 %v3947, %v3946
      %v3959 = vpack.c.b16 %v3949, %v3948
      %v3960 = vpack.c.b16 %v3951, %v3950
      %v3961 = vpack.c.b16 %v3953, %v3952
      %3970 = vmatprep.subr.bf16.mxu0 0
      %3971 = vmatpush1.bf16.msra.mxu0 %v3954
      %3972 = vmatprep.subr.bf16.mxu0 0
      %3973 = vmatpush1.bf16.msra.mxu0 %v3955
      %3974 = vmatprep.subr.bf16.mxu0 0
      %3975 = vmatpush1.bf16.msra.mxu0 %v3956
      %3976 = vmatprep.subr.bf16.mxu0 0
      %3977 = vmatpush1.bf16.msra.mxu0 %v3957
      %3978 = vmatprep.subr.bf16.mxu0 0
      %3979 = vmatpush1.bf16.msra.mxu0 %v3958
      %3980 = vmatprep.subr.bf16.mxu0 0
      %3981 = vmatpush1.bf16.msra.mxu0 %v3959
      %3982 = vmatprep.subr.bf16.mxu0 0
      %3983 = vmatpush1.bf16.msra.mxu0 %v3960
      %3984 = vmatprep.subr.bf16.mxu0 0
      %3985 = vmatpush1.bf16.msra.mxu0 %v3961
      %3986 = vmatprep.subr.bf16.mxu0 0
      %3987 = vmatpush1.bf16.msra.mxu0 0
      %3988 = vmatprep.subr.bf16.mxu0 0
      %3989 = vmatpush1.bf16.msra.mxu0 0
      %3990 = vmatprep.subr.bf16.mxu0 0
      %3991 = vmatpush1.bf16.msra.mxu0 0
      %3992 = vmatprep.subr.bf16.mxu0 0
      %3993 = vmatpush1.bf16.msra.mxu0 0
      %3994 = vmatprep.subr.bf16.mxu0 0
      %3995 = vmatpush1.bf16.msra.mxu0 0
      %3996 = vmatprep.subr.bf16.mxu0 0
      %3997 = vmatpush1.bf16.msra.mxu0 0
      %3998 = vmatprep.subr.bf16.mxu0 0
      %3999 = vmatpush1.bf16.msra.mxu0 0
      %4000 = vmatprep.subr.bf16.mxu0 0
      %4001 = vmatpush1.bf16.msra.mxu0 0
      %4002 = vmatprep.mubr.bf16.mxu0 0
      %4003 = vmatmul.mubr.bf16.gmra.mrb[0].mxu0 %v3898
      %v4004 = vpop.f32.mrb[0].mxu0
      %v4005 = vadd.f32 %v3920, %v4004
      %v4006 = vpop.f32.mrb[0].mxu0
      %v4007 = vpop.f32.mrb[0].mxu0
      %v4008 = vpop.f32.mrb[0].mxu0
      %4009 = vdwg.mxu0
      %v4010 = vmax.f32 %v4005, 0.0
      %v4011 = vpack.c.bf16 %v4010, %v4010
      %s4012 = scalar_lea.vmem %s11, 64
      %v4013 = vld [vmem:[%s4012] sm:$0xf]
      %v4014 = vld [vmem:[%s4012 + $0x4] sm:$0xf]
      %v4015 = vld [vmem:[%s4012 + $0x8] sm:$0xf]
      %v4016 = vld [vmem:[%s4012 + $0xc] sm:$0xf]
      %v4017 = vld [vmem:[%s4012 + $0x10] sm:$0xf]
      %v4018 = vld [vmem:[%s4012 + $0x14] sm:$0xf]
      %v4019 = vld [vmem:[%s4012 + $0x18] sm:$0xf]
      %v4020 = vld [vmem:[%s4012 + $0x1c] sm:$0xf]
      %v4021 = vld [vmem:[%s4012 + $0x20] sm:$0xf]
      %v4022 = vld [vmem:[%s4012 + $0x24] sm:$0xf]
      %v4023 = vld [vmem:[%s4012 + $0x28] sm:$0xf]
      %v4024 = vld [vmem:[%s4012 + $0x2c] sm:$0xf]
      %v4025 = vld [vmem:[%s4012 + $0x30] sm:$0xf]
      %v4026 = vld [vmem:[%s4012 + $0x34] sm:$0xf]
      %v4027 = vld [vmem:[%s4012 + $0x38] sm:$0xf]
      %v4028 = vld [vmem:[%s4012 + $0x3c] sm:$0xf]
      %s4029 = scalar_lea.vmem %s12, 1
      %v4030 = vld [vmem:[%s4029] sm:$0x1]
      %v4032 = vlaneseq
      %v4033 = vshrl.u32 %v4032, 7
      %v4034 = vsub.s32 0, %v4033
      %v4035 = vrot.slane %v4030, %v4034
      %v4053 = vunpack.c.l.b16 %v4013
      %v4054 = vunpack.c.l.b16 %v4014
      %v4055 = vunpack.c.l.b16 %v4015
      %v4056 = vunpack.c.l.b16 %v4016
      %v4057 = vunpack.c.l.b16 %v4017
      %v4058 = vunpack.c.l.b16 %v4018
      %v4059 = vunpack.c.l.b16 %v4019
      %v4060 = vunpack.c.l.b16 %v4020
      %v4061 = vunpack.c.l.b16 %v4021
      %v4062 = vunpack.c.l.b16 %v4022
      %v4063 = vunpack.c.l.b16 %v4023
      %v4064 = vunpack.c.l.b16 %v4024
      %v4065 = vunpack.c.l.b16 %v4025
      %v4066 = vunpack.c.l.b16 %v4026
      %v4067 = vunpack.c.l.b16 %v4027
      %v4068 = vunpack.c.l.b16 %v4028
      %v4069 = vpack.c.b16 %v4054, %v4053
      %v4070 = vpack.c.b16 %v4056, %v4055
      %v4071 = vpack.c.b16 %v4058, %v4057
      %v4072 = vpack.c.b16 %v4060, %v4059
      %v4073 = vpack.c.b16 %v4062, %v4061
      %v4074 = vpack.c.b16 %v4064, %v4063
      %v4075 = vpack.c.b16 %v4066, %v4065
      %v4076 = vpack.c.b16 %v4068, %v4067
      %4085 = vmatprep.subr.bf16.mxu0 0
      %4086 = vmatpush1.bf16.msra.mxu0 %v4069
      %4087 = vmatprep.subr.bf16.mxu0 0
      %4088 = vmatpush1.bf16.msra.mxu0 %v4070
      %4089 = vmatprep.subr.bf16.mxu0 0
      %4090 = vmatpush1.bf16.msra.mxu0 %v4071
      %4091 = vmatprep.subr.bf16.mxu0 0
      %4092 = vmatpush1.bf16.msra.mxu0 %v4072
      %4093 = vmatprep.subr.bf16.mxu0 0
      %4094 = vmatpush1.bf16.msra.mxu0 %v4073
      %4095 = vmatprep.subr.bf16.mxu0 0
      %4096 = vmatpush1.bf16.msra.mxu0 %v4074
      %4097 = vmatprep.subr.bf16.mxu0 0
      %4098 = vmatpush1.bf16.msra.mxu0 %v4075
      %4099 = vmatprep.subr.bf16.mxu0 0
      %4100 = vmatpush1.bf16.msra.mxu0 %v4076
      %4101 = vmatprep.subr.bf16.mxu0 0
      %4102 = vmatpush1.bf16.msra.mxu0 0
      %4103 = vmatprep.subr.bf16.mxu0 0
      %4104 = vmatpush1.bf16.msra.mxu0 0
      %4105 = vmatprep.subr.bf16.mxu0 0
      %4106 = vmatpush1.bf16.msra.mxu0 0
      %4107 = vmatprep.subr.bf16.mxu0 0
      %4108 = vmatpush1.bf16.msra.mxu0 0
      %4109 = vmatprep.subr.bf16.mxu0 0
      %4110 = vmatpush1.bf16.msra.mxu0 0
      %4111 = vmatprep.subr.bf16.mxu0 0
      %4112 = vmatpush1.bf16.msra.mxu0 0
      %4113 = vmatprep.subr.bf16.mxu0 0
      %4114 = vmatpush1.bf16.msra.mxu0 0
      %4115 = vmatprep.subr.bf16.mxu0 0
      %4116 = vmatpush1.bf16.msra.mxu0 0
      %4117 = vmatprep.mubr.bf16.mxu0 0
      %4118 = vmatmul.mubr.bf16.gmra.mrb[0].mxu0 %v4011
      %v4119 = vpop.f32.mrb[0].mxu0
      %v4120 = vadd.f32 %v4035, %v4119
      %v4121 = vpop.f32.mrb[0].mxu0
      %v4122 = vpop.f32.mrb[0].mxu0
      %v4123 = vpop.f32.mrb[0].mxu0
      %4124 = vdwg.mxu0
      %4125 = vst [vmem:[%s465] sm:$0xff] %v4120
      %p4126 = scmp.lt.s32.totalorder %s24, 1
      %s4127 = scalar_select %p4126, %s24, 1
      %s4128 = smul.addr %s4127, 8
      %s4129 = scalar_lea.vmem %s13, %s4128
      // Predicated region
      $region73: #{ac_pred_gin_forward.1} parent=71 // pred_check
        %p4130 = pneg %p325
      $region74: #{ac_pred_gin_forward.1} parent=71 // pred_check_branch
        %4132 = sbr.rel (%p4130) target = $region76
      $region75: #{ac_pred_gin_forward.1} parent=71 // pred_region
        _
      $region76: #{ac_pred_gin_forward.1} parent=71 // pred_fallthru
        _
    $region72: #{ac_pred_gin_forward.1} parent=5 // pred_fallthru
      _
    %p4133 = scmp.le.s32.totalorder 2, %s19
    // Predicated region
    $region77: #{ac_pred_gin_forward.1} parent=5 // pred_check
      %p4134 = pneg %p4133
    $region78: #{ac_pred_gin_forward.1} parent=5 // pred_check_branch
      %4136 = sbr.rel (%p4134) target = $region80
    $region79: #{ac_pred_gin_forward.1} parent=5 // pred_region
      %s4137 = ssub.s32 %s19, 2
      // Predicated region
      $region81: #{ac_pred_gin_forward.1} parent=79 // pred_check
        %p4138 = pneg %p331
      $region82: #{ac_pred_gin_forward.1} parent=79 // pred_check_branch
        %4140 = sbr.rel (%p4138) target = $region84
      $region83: #{ac_pred_gin_forward.1} parent=79 // pred_region
        %p4141 = scmp.lt.s32.totalorder %s25, 1
        %s4142 = scalar_select %p4141, %s25, 1
        %s4143 = smul.addr %s4142, 8
        %s4144 = scalar_lea.vmem %s13, %s4143
      $region84: #{ac_pred_gin_forward.1} parent=79 // pred_fallthru
        _
    $region80: #{ac_pred_gin_forward.1} parent=5 // pred_fallthru
      _
  $region6: #{ac_pred_gin_forward.1} parent=0 // loop_footer
    %s23 = sadd.s32 1, %s19
  $region7: #{ac_pred_gin_forward.1} parent=0 // loop_footer_branch
    %18 = sbr.rel target = $region3
  $region8: #{ac_pred_gin_forward.1} parent=0 // loop_exit
    _

</llo_original>
